<compile_context>
chip_gen: v6e
topology: v6e:2x2x1
jax: 0.10.0
libtpu: 0.0.40
codegen_flags: <defaults>
</compile_context>

<pallas_src>
import jax
import jax.numpy as jnp
from jax.experimental import pallas as pl
from jax.experimental.pallas import tpu as pltpu

REPR_DIM = 64 * 4 * 4          # 1024
_IN_FLAT = 6 * 64 * 64


def _encoder_kernel(xf_ref, w1_ref, w2_ref, w3_ref, b1_ref, b2_ref, b3_ref,
                    out_ref, a1_ref, a2_ref):
    """All three conv+ReLU stages for BBLK images, entirely in VMEM.

    xf_ref : (BBLK, 2, 2, 72, 256) packed input.
             xf[b, py, pc, t*8+q, kb*96+(dh*4+dw)*6+c] =
                 x[b, c, 4*(2t+py+kb)+dh, 4*(2q+pc)+dw]   (rest zero padding)
    w1_ref : (2, 256, 32)  conv1 taps, jb = horizontal kernel half (kw=4jb+dw)
    w2_ref : (4, 128, 64)  conv2 taps [kh, kw*32+ci, co]
    w3_ref : (3, 256, 64)  conv3 taps [kh, kw*64+ci, co] (rows 192: zero)
    out_ref: (BBLK, 32, 64) conv3 activations, rows = y3*8 + x3 (x3 < 4 valid)
    a1_ref : (2, 64, 128)  conv1 act; a1[py][t*8+ow2, jw*32+ci]
                                        = act1[2t+py, 2*ow2+jw, ci]
    a2_ref : (48, 256)     conv2 act; a2[oh2*8+x3, jw*64+ci]
                                        = act2[oh2, x3+jw, ci]
    """
    f32 = jnp.float32
    b1 = b1_ref[...]           # (1, 32)
    b2 = b2_ref[...]           # (1, 64)
    b3 = b3_ref[...]           # (1, 64)

    # a2's padded K lanes (192:256) are contracted against zero rows of w3, so
    # they must be finite (0 * stale-NaN = NaN).  Zero once per grid step; the
    # lanes are never written afterwards.  a1 needs no zeroing: every row/lane
    # a valid conv2 dot contracts is rewritten for every image before use.
    a2_ref[...] = jnp.zeros_like(a2_ref)

    nimg = xf_ref.shape[0]
    for i in range(nimg):
        # ---- conv1 (6->32, k=8, s=4): 8 GEMMs of (64,256)x(256,32) --------
        # 4 parity paths (row parity py, col parity px); path (py,px) yields
        # rows m = t*8 + j  <->  output (y1, x1) = (2t+py, 2j+px).
        for py in range(2):
            h1 = []
            for px in range(2):
                if px == 0:
                    acc = jnp.dot(xf_ref[i, py, 0, 0:64, :], w1_ref[0],
                                  preferred_element_type=f32)
                    acc = acc + jnp.dot(xf_ref[i, py, 1, 0:64, :], w1_ref[1],
                                        preferred_element_type=f32)
                else:
                    acc = jnp.dot(xf_ref[i, py, 1, 0:64, :], w1_ref[0],
                                  preferred_element_type=f32)
                    acc = acc + jnp.dot(xf_ref[i, py, 0, 1:65, :], w1_ref[1],
                                        preferred_element_type=f32)
                h1.append(jnp.maximum(acc + b1, 0.0))        # (64, 32)

            # conv2 K-fusion repack:
            #   a1[py][t*8+ow2, jw*32+ci] = h1[jw % 2][t*8 + ow2 + jw//2, ci]
            a1_ref[py, :, 0:32] = h1[0]
            a1_ref[py, :, 32:64] = h1[1]
            a1_ref[py, 0:63, 64:96] = h1[0][1:64, :]
            a1_ref[py, 0:63, 96:128] = h1[1][1:64, :]
            # a1[py] row 63 / lanes 64:128 stays stale; conv2 never reads past
            # row 55, so it cannot reach any output (documented invariant).

        # ---- conv2 (32->64, k=4, s=2): 4 GEMMs of (48,128)x(128,64) --------
        # rows m = oh2*8 + ow2 (ow2 in 0..5 valid).
        acc2 = jnp.dot(a1_ref[0, 0:48, :], w2_ref[0], preferred_element_type=f32)
        acc2 = acc2 + jnp.dot(a1_ref[1, 0:48, :], w2_ref[1], preferred_element_type=f32)
        acc2 = acc2 + jnp.dot(a1_ref[0, 8:56, :], w2_ref[2], preferred_element_type=f32)
        acc2 = acc2 + jnp.dot(a1_ref[1, 8:56, :], w2_ref[3], preferred_element_type=f32)
        h2 = jnp.maximum(acc2 + b2, 0.0)                     # (48, 64)

        # conv3 K-fusion repack:
        #   a2[oh2*8 + x3, jw*64 + ci] = h2[oh2*8 + x3 + jw, ci]
        a2_ref[:, 0:64] = h2
        a2_ref[0:47, 64:128] = h2[1:48, :]
        a2_ref[0:46, 128:192] = h2[2:48, :]
        # lanes 192:256 stay zero (padded K, zero weight rows).

        # ---- conv3 (64->64, k=3, s=1): 3 GEMMs of (32,256)x(256,64) --------
        # rows m = y3*8 + x3 (x3 in 0..3 valid).
        acc3 = jnp.dot(a2_ref[0:32, :], w3_ref[0], preferred_element_type=f32)
        acc3 = acc3 + jnp.dot(a2_ref[8:40, :], w3_ref[1], preferred_element_type=f32)
        acc3 = acc3 + jnp.dot(a2_ref[16:48, :], w3_ref[2], preferred_element_type=f32)
        h3 = jnp.maximum(acc3 + b3, 0.0)                     # (32, 64)

        # One contiguous store per image; wrapper compacts x3<4 and permutes.
        out_ref[i, :, :] = h3


def _pack_input(obs2d):
    """(B, 6*64*64) -> (B, 2, 2, 72, 256): s2d(4) + kb K-fusion + parity split."""
    B = obs2d.shape[0]
    x = obs2d.reshape(B, 6, 64, 64)                   # NCHW (torch .view order)
    x = x.reshape(B, 6, 16, 4, 8, 2, 4)               # b c r dh q pc dw
    x = jnp.transpose(x, (0, 5, 2, 4, 3, 6, 1))       # b pc r q dh dw c
    x = x.reshape(B, 2, 16, 8, 96)                    # b pc r q patch
    x = jnp.pad(x, ((0, 0), (0, 0), (0, 1), (0, 0), (0, 0)))   # r -> 17 (row 16 = 0)
    parts = []
    for py in range(2):
        kb0 = x[:, :, py:py + 16:2]                   # r = 2t + py
        kb1 = x[:, :, py + 1:py + 17:2]               # r = 2t + py + 1
        parts.append(jnp.concatenate([kb0, kb1], axis=-1))     # (B,2,8,8,192)
    xf = jnp.stack(parts, axis=1)                     # (B, py, pc, t, q, 192)
    xf = xf.reshape(B, 2, 2, 64, 192)
    xf = jnp.pad(xf, ((0, 0), (0, 0), (0, 0), (0, 8), (0, 64)))  # (B,2,2,72,256)
    return xf


def pack_params(params):
    """One-time weight repack (hoisted out of the forward path)."""
    (w1, b1), (w2, b2), (w3, b3) = params
    # conv1: fuse the two vertical 4-row halves (kb) along K, keep the two
    # horizontal halves (jb) as separate taps.  lane = kb*96 + (dh*4+dw)*6 + c.
    t = jnp.transpose(w1, (2, 3, 1, 0))               # (kh, kw, c, co) = (8,8,6,32)
    t = t.reshape(2, 4, 2, 4, 6, 32)                  # kb dh jb dw c co
    t = jnp.transpose(t, (2, 0, 1, 3, 4, 5))          # jb kb dh dw c co
    w1p = jnp.pad(t.reshape(2, 192, 32), ((0, 0), (0, 64), (0, 0)))   # (2,256,32)
    # conv2: all 4 kw taps fused along K. lane = kw*32 + ci.
    w2p = jnp.transpose(w2, (2, 3, 1, 0)).reshape(4, 128, 64)
    # conv3: all 3 kw taps fused along K (padded to 256). lane = kw*64 + ci.
    w3p = jnp.transpose(w3, (2, 3, 1, 0)).reshape(3, 192, 64)
    w3p = jnp.pad(w3p, ((0, 0), (0, 64), (0, 0)))     # (3,256,64)
    return (w1p.astype(jnp.float32), w2p.astype(jnp.float32),
            w3p.astype(jnp.float32),
            b1.reshape(1, 32).astype(jnp.float32),
            b2.reshape(1, 64).astype(jnp.float32),
            b3.reshape(1, 64).astype(jnp.float32))


@jax.jit
def atari_encoder(obs, packed_params):
    """Matches AtariEncoder.forward: ndim 1 -> (1024,), ndim 2 -> (B, 1024)."""
    w1p, w2p, w3p, b1r, b2r, b3r = packed_params
    squeeze = obs.ndim == 1
    if squeeze:
        obs = obs[None, :]
    B = obs.shape[0]

    # Batch block: amortize per-grid-step overhead; keep >=2 steps when
    # possible (v7x megacore) and the working set small (<~6 MB at BBLK=8).
    bblk = 8 if B >= 16 else max(1, B // 2)
    grid = -(-B // bblk)
    bpad = grid * bblk

    obs = obs.astype(jnp.float32)
    if bpad != B:
        obs = jnp.pad(obs, ((0, bpad - B), (0, 0)))
    xf = _pack_input(obs)

    out = pl.pallas_call(
        _encoder_kernel,
        out_shape=jax.ShapeDtypeStruct((bpad, 32, 64), jnp.float32),
        grid_spec=pltpu.PrefetchScalarGridSpec(
            num_scalar_prefetch=0,
            grid=(grid,),
            in_specs=[
                pl.BlockSpec((bblk, 2, 2, 72, 256), lambda i: (i, 0, 0, 0, 0)),
                pl.BlockSpec((2, 256, 32), lambda i: (0, 0, 0)),
                pl.BlockSpec((4, 128, 64), lambda i: (0, 0, 0)),
                pl.BlockSpec((3, 256, 64), lambda i: (0, 0, 0)),
                pl.BlockSpec((1, 32), lambda i: (0, 0)),
                pl.BlockSpec((1, 64), lambda i: (0, 0)),
                pl.BlockSpec((1, 64), lambda i: (0, 0)),
            ],
            out_specs=pl.BlockSpec((bblk, 32, 64), lambda i: (i, 0, 0)),
            scratch_shapes=[
                pltpu.VMEM((2, 64, 128), jnp.float32),   # conv1 act (K-fused for conv2)
                pltpu.VMEM((48, 256), jnp.float32),      # conv2 act (K-fused for conv3)
            ],
        ),
        compiler_params=pltpu.CompilerParams(
            dimension_semantics=("parallel",),
            vmem_limit_bytes=32 * 1024 * 1024,
        ),
    )(xf, w1p, w2p, w3p, b1r, b2r, b3r)

    out = out[:B]                                     # (B, 32, 64), rows = y3*8 + x3
    h = out.reshape(B, 4, 8, 64)[:, :, 0:4, :]        # (B, y3, x3, c)
    h = jnp.transpose(h, (0, 3, 1, 2)).reshape(B, REPR_DIM)   # NCHW flatten
    if squeeze:
        h = h[0]
    return h


def init_params(key):
    """Deterministic synthetic conv params (PyTorch-default-style uniform)."""
    ks = jax.random.split(key, 6)

    def conv_init(kw_key, kb_key, cout, cin, k):
        fan_in = cin * k * k
        bound = 1.0 / (fan_in ** 0.5)
        w = jax.random.uniform(kw_key, (cout, cin, k, k), jnp.float32, -bound, bound)
        b = jax.random.uniform(kb_key, (cout,), jnp.float32, -bound, bound)
        return w, b

    w1, b1 = conv_init(ks[0], ks[1], 32, 6, 8)    # Conv2d(6, 32, k=8, s=4)
    w2, b2 = conv_init(ks[2], ks[3], 64, 32, 4)   # Conv2d(32, 64, k=4, s=2)
    w3, b3 = conv_init(ks[4], ks[5], 64, 64, 3)   # Conv2d(64, 64, k=3, s=1)
    return (w1, b1), (w2, b2), (w3, b3)


def _reference(obs, params):
    """Pure-JAX reference (lax conv) for a correctness check."""
    x = obs.reshape(-1, 6, 64, 64)
    for (w, b), s in zip(params, (4, 2, 1)):
        x = jax.lax.conv_general_dilated(
            x, w, window_strides=(s, s), padding="VALID",
            dimension_numbers=("NCHW", "OIHW", "NCHW"))
        x = jax.nn.relu(x + b[None, :, None, None])
    return x.reshape(-1, REPR_DIM)


if __name__ == "__main__":
    key = jax.random.PRNGKey(0)
    pkey, xkey, xkey2 = jax.random.split(key, 3)
    params = init_params(pkey)
    packed = pack_params(params)        # weight repack done once, not per call

    # Module requires prod(obs_shape) == 6*64*64; batch=2 vectorized images.
    obs = jax.random.uniform(xkey, (2, _IN_FLAT), dtype=jnp.float32)
    h = jax.block_until_ready(atari_encoder(obs, packed))
    assert h.shape == (2, REPR_DIM), h.shape
    ref = _reference(obs, params)
    err = float(jnp.max(jnp.abs(h - ref)))
    assert jnp.allclose(h, ref, atol=1e-3, rtol=1e-3), err

    # ndim == 1 path (single vectorized observation).
    h1 = jax.block_until_ready(atari_encoder(obs[0], packed))
    assert h1.shape == (REPR_DIM,), h1.shape
    assert jnp.allclose(h1, ref[0], atol=1e-3, rtol=1e-3)

    # Batch-blocked + batch-padded path (B=13 -> BBLK=6, grid=3, 5 junk imgs).
    obs13 = jax.random.uniform(xkey2, (13, _IN_FLAT), dtype=jnp.float32)
    h13 = jax.block_until_ready(atari_encoder(obs13, packed))
    ref13 = _reference(obs13, params)
    err13 = float(jnp.max(jnp.abs(h13 - ref13)))
    assert h13.shape == (13, REPR_DIM), h13.shape
    assert jnp.allclose(h13, ref13, atol=1e-3, rtol=1e-3), err13

    print("KERNEL_OK")
</pallas_src>

<mosaic_0001>
module attributes {stable_mosaic.version = 11 : i64} {
  func.func @_encoder_kernel(%arg0: i32, %arg1: memref<1x2x2x72x256xf32, #tpu.memory_space<vmem>>, %arg2: memref<2x256x32xf32, #tpu.memory_space<vmem>>, %arg3: memref<4x128x64xf32, #tpu.memory_space<vmem>>, %arg4: memref<3x256x64xf32, #tpu.memory_space<vmem>>, %arg5: memref<1x32xf32, #tpu.memory_space<vmem>>, %arg6: memref<1x64xf32, #tpu.memory_space<vmem>>, %arg7: memref<1x64xf32, #tpu.memory_space<vmem>>, %arg8: memref<1x32x64xf32, #tpu.memory_space<vmem>>, %arg9: memref<2x64x128xf32, #tpu.memory_space<vmem>>, %arg10: memref<48x256xf32, #tpu.memory_space<vmem>>) attributes {dimension_semantics = [#tpu.dimension_semantics<parallel>], iteration_bounds = array<i64: 2>, scalar_prefetch = 0 : i64, scratch_operands = 2 : i64, tpu.core_type = #tpu.core_type<tc>, window_params = [{transform_indices = @transform_0, window_bounds = array<i64: 1, 2, 2, 72, 256>}, {pipeline_mode = #tpu.pipeline_mode<synchronous>, transform_indices = @transform_1, window_bounds = array<i64: 2, 256, 32>}, {pipeline_mode = #tpu.pipeline_mode<synchronous>, transform_indices = @transform_2, window_bounds = array<i64: 4, 128, 64>}, {pipeline_mode = #tpu.pipeline_mode<synchronous>, transform_indices = @transform_3, window_bounds = array<i64: 3, 256, 64>}, {pipeline_mode = #tpu.pipeline_mode<synchronous>, transform_indices = @transform_4, window_bounds = array<i64: 1, 32>}, {pipeline_mode = #tpu.pipeline_mode<synchronous>, transform_indices = @transform_5, window_bounds = array<i64: 1, 64>}, {pipeline_mode = #tpu.pipeline_mode<synchronous>, transform_indices = @transform_6, window_bounds = array<i64: 1, 64>}, {transform_indices = @transform_7, window_bounds = array<i64: 1, 32, 64>}]} {
    %c0 = arith.constant 0 : index
    %c0_0 = arith.constant 0 : index
    %0 = vector.load %arg5[%c0, %c0_0] : memref<1x32xf32, #tpu.memory_space<vmem>>, vector<1x32xf32>
    %c0_1 = arith.constant 0 : index
    %c0_2 = arith.constant 0 : index
    %1 = vector.load %arg6[%c0_1, %c0_2] : memref<1x64xf32, #tpu.memory_space<vmem>>, vector<1x64xf32>
    %c0_3 = arith.constant 0 : index
    %c0_4 = arith.constant 0 : index
    %2 = vector.load %arg7[%c0_3, %c0_4] : memref<1x64xf32, #tpu.memory_space<vmem>>, vector<1x64xf32>
    %cst = arith.constant 0.000000e+00 : f32
    %3 = vector.broadcast %cst : f32 to vector<48x256xf32>
    %c0_5 = arith.constant 0 : index
    %c0_6 = arith.constant 0 : index
    %4 = vector.load %arg10[%c0_5, %c0_6] : memref<48x256xf32, #tpu.memory_space<vmem>>, vector<48x256xf32>
    tpu.vector_store %arg10[%c0_5, %c0_6], %3 {strides = array<i32>} : memref<48x256xf32, #tpu.memory_space<vmem>>, vector<48x256xf32>,
    %c0_7 = arith.constant 0 : index
    %c0_8 = arith.constant 0 : index
    %c0_9 = arith.constant 0 : index
    %c0_10 = arith.constant 0 : index
    %c0_11 = arith.constant 0 : index
    %5 = vector.load %arg1[%c0_7, %c0_8, %c0_9, %c0_10, %c0_11] : memref<1x2x2x72x256xf32, #tpu.memory_space<vmem>>, vector<1x1x1x64x256xf32>
    %6 = vector.shape_cast %5 : vector<1x1x1x64x256xf32> to vector<64x256xf32>
    %c0_12 = arith.constant 0 : index
    %c0_13 = arith.constant 0 : index
    %c0_14 = arith.constant 0 : index
    %7 = vector.load %arg2[%c0_12, %c0_13, %c0_14] : memref<2x256x32xf32, #tpu.memory_space<vmem>>, vector<1x256x32xf32>
    %8 = vector.shape_cast %7 : vector<1x256x32xf32> to vector<256x32xf32>
    %cst_15 = arith.constant dense<0.000000e+00> : vector<64x32xf32>
    %9 = tpu.matmul %6, %8, %cst_15 {dimension_numbers = #tpu.dot_dimension_numbers<[1], [0], [0], [1], [0, 0, 1, 1], [], []>} : vector<64x256xf32>, vector<256x32xf32>, vector<64x32xf32> -> vector<64x32xf32>
    %c0_16 = arith.constant 0 : index
    %c0_17 = arith.constant 0 : index
    %c1 = arith.constant 1 : index
    %c0_18 = arith.constant 0 : index
    %c0_19 = arith.constant 0 : index
    %10 = vector.load %arg1[%c0_16, %c0_17, %c1, %c0_18, %c0_19] : memref<1x2x2x72x256xf32, #tpu.memory_space<vmem>>, vector<1x1x1x64x256xf32>
    %11 = vector.shape_cast %10 : vector<1x1x1x64x256xf32> to vector<64x256xf32>
    %c1_20 = arith.constant 1 : index
    %c0_21 = arith.constant 0 : index
    %c0_22 = arith.constant 0 : index
    %12 = vector.load %arg2[%c1_20, %c0_21, %c0_22] : memref<2x256x32xf32, #tpu.memory_space<vmem>>, vector<1x256x32xf32>
    %13 = vector.shape_cast %12 : vector<1x256x32xf32> to vector<256x32xf32>
    %cst_23 = arith.constant dense<0.000000e+00> : vector<64x32xf32>
    %14 = tpu.matmul %11, %13, %cst_23 {dimension_numbers = #tpu.dot_dimension_numbers<[1], [0], [0], [1], [0, 0, 1, 1], [], []>} : vector<64x256xf32>, vector<256x32xf32>, vector<64x32xf32> -> vector<64x32xf32>
    %15 = arith.addf %9, %14 : vector<64x32xf32>
    %16 = vector.broadcast %0 : vector<1x32xf32> to vector<64x32xf32>
    %17 = arith.addf %15, %16 : vector<64x32xf32>
    %cst_24 = arith.constant 0.000000e+00 : f32
    %18 = vector.broadcast %cst_24 : f32 to vector<64x32xf32>
    %19 = arith.maximumf %17, %18 : vector<64x32xf32>
    %c0_25 = arith.constant 0 : index
    %c0_26 = arith.constant 0 : index
    %c1_27 = arith.constant 1 : index
    %c0_28 = arith.constant 0 : index
    %c0_29 = arith.constant 0 : index
    %20 = vector.load %arg1[%c0_25, %c0_26, %c1_27, %c0_28, %c0_29] : memref<1x2x2x72x256xf32, #tpu.memory_space<vmem>>, vector<1x1x1x64x256xf32>
    %21 = vector.shape_cast %20 : vector<1x1x1x64x256xf32> to vector<64x256xf32>
    %c0_30 = arith.constant 0 : index
    %c0_31 = arith.constant 0 : index
    %c0_32 = arith.constant 0 : index
    %22 = vector.load %arg2[%c0_30, %c0_31, %c0_32] : memref<2x256x32xf32, #tpu.memory_space<vmem>>, vector<1x256x32xf32>
    %23 = vector.shape_cast %22 : vector<1x256x32xf32> to vector<256x32xf32>
    %cst_33 = arith.constant dense<0.000000e+00> : vector<64x32xf32>
    %24 = tpu.matmul %21, %23, %cst_33 {dimension_numbers = #tpu.dot_dimension_numbers<[1], [0], [0], [1], [0, 0, 1, 1], [], []>} : vector<64x256xf32>, vector<256x32xf32>, vector<64x32xf32> -> vector<64x32xf32>
    %c0_34 = arith.constant 0 : index
    %c0_35 = arith.constant 0 : index
    %c0_36 = arith.constant 0 : index
    %c1_37 = arith.constant 1 : index
    %c0_38 = arith.constant 0 : index
    %25 = vector.load %arg1[%c0_34, %c0_35, %c0_36, %c1_37, %c0_38] : memref<1x2x2x72x256xf32, #tpu.memory_space<vmem>>, vector<1x1x1x64x256xf32>
    %26 = vector.shape_cast %25 : vector<1x1x1x64x256xf32> to vector<64x256xf32>
    %c1_39 = arith.constant 1 : index
    %c0_40 = arith.constant 0 : index
    %c0_41 = arith.constant 0 : index
    %27 = vector.load %arg2[%c1_39, %c0_40, %c0_41] : memref<2x256x32xf32, #tpu.memory_space<vmem>>, vector<1x256x32xf32>
    %28 = vector.shape_cast %27 : vector<1x256x32xf32> to vector<256x32xf32>
    %cst_42 = arith.constant dense<0.000000e+00> : vector<64x32xf32>
    %29 = tpu.matmul %26, %28, %cst_42 {dimension_numbers = #tpu.dot_dimension_numbers<[1], [0], [0], [1], [0, 0, 1, 1], [], []>} : vector<64x256xf32>, vector<256x32xf32>, vector<64x32xf32> -> vector<64x32xf32>
    %30 = arith.addf %24, %29 : vector<64x32xf32>
    %31 = vector.broadcast %0 : vector<1x32xf32> to vector<64x32xf32>
    %32 = arith.addf %30, %31 : vector<64x32xf32>
    %cst_43 = arith.constant 0.000000e+00 : f32
    %33 = vector.broadcast %cst_43 : f32 to vector<64x32xf32>
    %34 = arith.maximumf %32, %33 : vector<64x32xf32>
    %c0_44 = arith.constant 0 : index
    %c0_45 = arith.constant 0 : index
    %c0_46 = arith.constant 0 : index
    %35 = vector.load %arg9[%c0_44, %c0_45, %c0_46] : memref<2x64x128xf32, #tpu.memory_space<vmem>>, vector<1x64x32xf32>
    %36 = vector.shape_cast %35 : vector<1x64x32xf32> to vector<64x32xf32>
    %37 = vector.shape_cast %19 : vector<64x32xf32> to vector<1x64x32xf32>
    tpu.vector_store %arg9[%c0_44, %c0_45, %c0_46], %37 {strides = array<i32>} : memref<2x64x128xf32, #tpu.memory_space<vmem>>, vector<1x64x32xf32>,
    %c0_47 = arith.constant 0 : index
    %c0_48 = arith.constant 0 : index
    %c32 = arith.constant 32 : index
    %38 = vector.load %arg9[%c0_47, %c0_48, %c32] : memref<2x64x128xf32, #tpu.memory_space<vmem>>, vector<1x64x32xf32>
    %39 = vector.shape_cast %38 : vector<1x64x32xf32> to vector<64x32xf32>
    %40 = vector.shape_cast %34 : vector<64x32xf32> to vector<1x64x32xf32>
    tpu.vector_store %arg9[%c0_47, %c0_48, %c32], %40 {strides = array<i32>} : memref<2x64x128xf32, #tpu.memory_space<vmem>>, vector<1x64x32xf32>,
    %41 = vector.extract_strided_slice %19 {offsets = [1, 0], sizes = [63, 32], strides = [1, 1]} : vector<64x32xf32> to vector<63x32xf32>
    %c0_49 = arith.constant 0 : index
    %c0_50 = arith.constant 0 : index
    %c64 = arith.constant 64 : index
    %42 = vector.load %arg9[%c0_49, %c0_50, %c64] : memref<2x64x128xf32, #tpu.memory_space<vmem>>, vector<1x63x32xf32>
    %43 = vector.shape_cast %42 : vector<1x63x32xf32> to vector<63x32xf32>
    %44 = vector.shape_cast %41 : vector<63x32xf32> to vector<1x63x32xf32>
    tpu.vector_store %arg9[%c0_49, %c0_50, %c64], %44 {strides = array<i32>} : memref<2x64x128xf32, #tpu.memory_space<vmem>>, vector<1x63x32xf32>,
    %45 = vector.extract_strided_slice %34 {offsets = [1, 0], sizes = [63, 32], strides = [1, 1]} : vector<64x32xf32> to vector<63x32xf32>
    %c0_51 = arith.constant 0 : index
    %c0_52 = arith.constant 0 : index
    %c96 = arith.constant 96 : index
    %46 = vector.load %arg9[%c0_51, %c0_52, %c96] : memref<2x64x128xf32, #tpu.memory_space<vmem>>, vector<1x63x32xf32>
    %47 = vector.shape_cast %46 : vector<1x63x32xf32> to vector<63x32xf32>
    %48 = vector.shape_cast %45 : vector<63x32xf32> to vector<1x63x32xf32>
    tpu.vector_store %arg9[%c0_51, %c0_52, %c96], %48 {strides = array<i32>} : memref<2x64x128xf32, #tpu.memory_space<vmem>>, vector<1x63x32xf32>,
    %c0_53 = arith.constant 0 : index
    %c1_54 = arith.constant 1 : index
    %c0_55 = arith.constant 0 : index
    %c0_56 = arith.constant 0 : index
    %c0_57 = arith.constant 0 : index
    %49 = vector.load %arg1[%c0_53, %c1_54, %c0_55, %c0_56, %c0_57] : memref<1x2x2x72x256xf32, #tpu.memory_space<vmem>>, vector<1x1x1x64x256xf32>
    %50 = vector.shape_cast %49 : vector<1x1x1x64x256xf32> to vector<64x256xf32>
    %c0_58 = arith.constant 0 : index
    %c0_59 = arith.constant 0 : index
    %c0_60 = arith.constant 0 : index
    %51 = vector.load %arg2[%c0_58, %c0_59, %c0_60] : memref<2x256x32xf32, #tpu.memory_space<vmem>>, vector<1x256x32xf32>
    %52 = vector.shape_cast %51 : vector<1x256x32xf32> to vector<256x32xf32>
    %cst_61 = arith.constant dense<0.000000e+00> : vector<64x32xf32>
    %53 = tpu.matmul %50, %52, %cst_61 {dimension_numbers = #tpu.dot_dimension_numbers<[1], [0], [0], [1], [0, 0, 1, 1], [], []>} : vector<64x256xf32>, vector<256x32xf32>, vector<64x32xf32> -> vector<64x32xf32>
    %c0_62 = arith.constant 0 : index
    %c1_63 = arith.constant 1 : index
    %c1_64 = arith.constant 1 : index
    %c0_65 = arith.constant 0 : index
    %c0_66 = arith.constant 0 : index
    %54 = vector.load %arg1[%c0_62, %c1_63, %c1_64, %c0_65, %c0_66] : memref<1x2x2x72x256xf32, #tpu.memory_space<vmem>>, vector<1x1x1x64x256xf32>
    %55 = vector.shape_cast %54 : vector<1x1x1x64x256xf32> to vector<64x256xf32>
    %c1_67 = arith.constant 1 : index
    %c0_68 = arith.constant 0 : index
    %c0_69 = arith.constant 0 : index
    %56 = vector.load %arg2[%c1_67, %c0_68, %c0_69] : memref<2x256x32xf32, #tpu.memory_space<vmem>>, vector<1x256x32xf32>
    %57 = vector.shape_cast %56 : vector<1x256x32xf32> to vector<256x32xf32>
    %cst_70 = arith.constant dense<0.000000e+00> : vector<64x32xf32>
    %58 = tpu.matmul %55, %57, %cst_70 {dimension_numbers = #tpu.dot_dimension_numbers<[1], [0], [0], [1], [0, 0, 1, 1], [], []>} : vector<64x256xf32>, vector<256x32xf32>, vector<64x32xf32> -> vector<64x32xf32>
    %59 = arith.addf %53, %58 : vector<64x32xf32>
    %60 = vector.broadcast %0 : vector<1x32xf32> to vector<64x32xf32>
    %61 = arith.addf %59, %60 : vector<64x32xf32>
    %cst_71 = arith.constant 0.000000e+00 : f32
    %62 = vector.broadcast %cst_71 : f32 to vector<64x32xf32>
    %63 = arith.maximumf %61, %62 : vector<64x32xf32>
    %c0_72 = arith.constant 0 : index
    %c1_73 = arith.constant 1 : index
    %c1_74 = arith.constant 1 : index
    %c0_75 = arith.constant 0 : index
    %c0_76 = arith.constant 0 : index
    %64 = vector.load %arg1[%c0_72, %c1_73, %c1_74, %c0_75, %c0_76] : memref<1x2x2x72x256xf32, #tpu.memory_space<vmem>>, vector<1x1x1x64x256xf32>
    %65 = vector.shape_cast %64 : vector<1x1x1x64x256xf32> to vector<64x256xf32>
    %c0_77 = arith.constant 0 : index
    %c0_78 = arith.constant 0 : index
    %c0_79 = arith.constant 0 : index
    %66 = vector.load %arg2[%c0_77, %c0_78, %c0_79] : memref<2x256x32xf32, #tpu.memory_space<vmem>>, vector<1x256x32xf32>
    %67 = vector.shape_cast %66 : vector<1x256x32xf32> to vector<256x32xf32>
    %cst_80 = arith.constant dense<0.000000e+00> : vector<64x32xf32>
    %68 = tpu.matmul %65, %67, %cst_80 {dimension_numbers = #tpu.dot_dimension_numbers<[1], [0], [0], [1], [0, 0, 1, 1], [], []>} : vector<64x256xf32>, vector<256x32xf32>, vector<64x32xf32> -> vector<64x32xf32>
    %c0_81 = arith.constant 0 : index
    %c1_82 = arith.constant 1 : index
    %c0_83 = arith.constant 0 : index
    %c1_84 = arith.constant 1 : index
    %c0_85 = arith.constant 0 : index
    %69 = vector.load %arg1[%c0_81, %c1_82, %c0_83, %c1_84, %c0_85] : memref<1x2x2x72x256xf32, #tpu.memory_space<vmem>>, vector<1x1x1x64x256xf32>
    %70 = vector.shape_cast %69 : vector<1x1x1x64x256xf32> to vector<64x256xf32>
    %c1_86 = arith.constant 1 : index
    %c0_87 = arith.constant 0 : index
    %c0_88 = arith.constant 0 : index
    %71 = vector.load %arg2[%c1_86, %c0_87, %c0_88] : memref<2x256x32xf32, #tpu.memory_space<vmem>>, vector<1x256x32xf32>
    %72 = vector.shape_cast %71 : vector<1x256x32xf32> to vector<256x32xf32>
    %cst_89 = arith.constant dense<0.000000e+00> : vector<64x32xf32>
    %73 = tpu.matmul %70, %72, %cst_89 {dimension_numbers = #tpu.dot_dimension_numbers<[1], [0], [0], [1], [0, 0, 1, 1], [], []>} : vector<64x256xf32>, vector<256x32xf32>, vector<64x32xf32> -> vector<64x32xf32>
    %74 = arith.addf %68, %73 : vector<64x32xf32>
    %75 = vector.broadcast %0 : vector<1x32xf32> to vector<64x32xf32>
    %76 = arith.addf %74, %75 : vector<64x32xf32>
    %cst_90 = arith.constant 0.000000e+00 : f32
    %77 = vector.broadcast %cst_90 : f32 to vector<64x32xf32>
    %78 = arith.maximumf %76, %77 : vector<64x32xf32>
    %c1_91 = arith.constant 1 : index
    %c0_92 = arith.constant 0 : index
    %c0_93 = arith.constant 0 : index
    %79 = vector.load %arg9[%c1_91, %c0_92, %c0_93] : memref<2x64x128xf32, #tpu.memory_space<vmem>>, vector<1x64x32xf32>
    %80 = vector.shape_cast %79 : vector<1x64x32xf32> to vector<64x32xf32>
    %81 = vector.shape_cast %63 : vector<64x32xf32> to vector<1x64x32xf32>
    tpu.vector_store %arg9[%c1_91, %c0_92, %c0_93], %81 {strides = array<i32>} : memref<2x64x128xf32, #tpu.memory_space<vmem>>, vector<1x64x32xf32>,
    %c1_94 = arith.constant 1 : index
    %c0_95 = arith.constant 0 : index
    %c32_96 = arith.constant 32 : index
    %82 = vector.load %arg9[%c1_94, %c0_95, %c32_96] : memref<2x64x128xf32, #tpu.memory_space<vmem>>, vector<1x64x32xf32>
    %83 = vector.shape_cast %82 : vector<1x64x32xf32> to vector<64x32xf32>
    %84 = vector.shape_cast %78 : vector<64x32xf32> to vector<1x64x32xf32>
    tpu.vector_store %arg9[%c1_94, %c0_95, %c32_96], %84 {strides = array<i32>} : memref<2x64x128xf32, #tpu.memory_space<vmem>>, vector<1x64x32xf32>,
    %85 = vector.extract_strided_slice %63 {offsets = [1, 0], sizes = [63, 32], strides = [1, 1]} : vector<64x32xf32> to vector<63x32xf32>
    %c1_97 = arith.constant 1 : index
    %c0_98 = arith.constant 0 : index
    %c64_99 = arith.constant 64 : index
    %86 = vector.load %arg9[%c1_97, %c0_98, %c64_99] : memref<2x64x128xf32, #tpu.memory_space<vmem>>, vector<1x63x32xf32>
    %87 = vector.shape_cast %86 : vector<1x63x32xf32> to vector<63x32xf32>
    %88 = vector.shape_cast %85 : vector<63x32xf32> to vector<1x63x32xf32>
    tpu.vector_store %arg9[%c1_97, %c0_98, %c64_99], %88 {strides = array<i32>} : memref<2x64x128xf32, #tpu.memory_space<vmem>>, vector<1x63x32xf32>,
    %89 = vector.extract_strided_slice %78 {offsets = [1, 0], sizes = [63, 32], strides = [1, 1]} : vector<64x32xf32> to vector<63x32xf32>
    %c1_100 = arith.constant 1 : index
    %c0_101 = arith.constant 0 : index
    %c96_102 = arith.constant 96 : index
    %90 = vector.load %arg9[%c1_100, %c0_101, %c96_102] : memref<2x64x128xf32, #tpu.memory_space<vmem>>, vector<1x63x32xf32>
    %91 = vector.shape_cast %90 : vector<1x63x32xf32> to vector<63x32xf32>
    %92 = vector.shape_cast %89 : vector<63x32xf32> to vector<1x63x32xf32>
    tpu.vector_store %arg9[%c1_100, %c0_101, %c96_102], %92 {strides = array<i32>} : memref<2x64x128xf32, #tpu.memory_space<vmem>>, vector<1x63x32xf32>,
    %c0_103 = arith.constant 0 : index
    %c0_104 = arith.constant 0 : index
    %c0_105 = arith.constant 0 : index
    %93 = vector.load %arg9[%c0_103, %c0_104, %c0_105] : memref<2x64x128xf32, #tpu.memory_space<vmem>>, vector<1x48x128xf32>
    %94 = vector.shape_cast %93 : vector<1x48x128xf32> to vector<48x128xf32>
    %c0_106 = arith.constant 0 : index
    %c0_107 = arith.constant 0 : index
    %c0_108 = arith.constant 0 : index
    %95 = vector.load %arg3[%c0_106, %c0_107, %c0_108] : memref<4x128x64xf32, #tpu.memory_space<vmem>>, vector<1x128x64xf32>
    %96 = vector.shape_cast %95 : vector<1x128x64xf32> to vector<128x64xf32>
    %cst_109 = arith.constant dense<0.000000e+00> : vector<48x64xf32>
    %97 = tpu.matmul %94, %96, %cst_109 {dimension_numbers = #tpu.dot_dimension_numbers<[1], [0], [0], [1], [0, 0, 1, 1], [], []>} : vector<48x128xf32>, vector<128x64xf32>, vector<48x64xf32> -> vector<48x64xf32>
    %c1_110 = arith.constant 1 : index
    %c0_111 = arith.constant 0 : index
    %c0_112 = arith.constant 0 : index
    %98 = vector.load %arg9[%c1_110, %c0_111, %c0_112] : memref<2x64x128xf32, #tpu.memory_space<vmem>>, vector<1x48x128xf32>
    %99 = vector.shape_cast %98 : vector<1x48x128xf32> to vector<48x128xf32>
    %c1_113 = arith.constant 1 : index
    %c0_114 = arith.constant 0 : index
    %c0_115 = arith.constant 0 : index
    %100 = vector.load %arg3[%c1_113, %c0_114, %c0_115] : memref<4x128x64xf32, #tpu.memory_space<vmem>>, vector<1x128x64xf32>
    %101 = vector.shape_cast %100 : vector<1x128x64xf32> to vector<128x64xf32>
    %cst_116 = arith.constant dense<0.000000e+00> : vector<48x64xf32>
    %102 = tpu.matmul %99, %101, %cst_116 {dimension_numbers = #tpu.dot_dimension_numbers<[1], [0], [0], [1], [0, 0, 1, 1], [], []>} : vector<48x128xf32>, vector<128x64xf32>, vector<48x64xf32> -> vector<48x64xf32>
    %103 = arith.addf %97, %102 : vector<48x64xf32>
    %c0_117 = arith.constant 0 : index
    %c8 = arith.constant 8 : index
    %c0_118 = arith.constant 0 : index
    %104 = vector.load %arg9[%c0_117, %c8, %c0_118] : memref<2x64x128xf32, #tpu.memory_space<vmem>>, vector<1x48x128xf32>
    %105 = vector.shape_cast %104 : vector<1x48x128xf32> to vector<48x128xf32>
    %c2 = arith.constant 2 : index
    %c0_119 = arith.constant 0 : index
    %c0_120 = arith.constant 0 : index
    %106 = vector.load %arg3[%c2, %c0_119, %c0_120] : memref<4x128x64xf32, #tpu.memory_space<vmem>>, vector<1x128x64xf32>
    %107 = vector.shape_cast %106 : vector<1x128x64xf32> to vector<128x64xf32>
    %cst_121 = arith.constant dense<0.000000e+00> : vector<48x64xf32>
    %108 = tpu.matmul %105, %107, %cst_121 {dimension_numbers = #tpu.dot_dimension_numbers<[1], [0], [0], [1], [0, 0, 1, 1], [], []>} : vector<48x128xf32>, vector<128x64xf32>, vector<48x64xf32> -> vector<48x64xf32>
    %109 = arith.addf %103, %108 : vector<48x64xf32>
    %c1_122 = arith.constant 1 : index
    %c8_123 = arith.constant 8 : index
    %c0_124 = arith.constant 0 : index
    %110 = vector.load %arg9[%c1_122, %c8_123, %c0_124] : memref<2x64x128xf32, #tpu.memory_space<vmem>>, vector<1x48x128xf32>
    %111 = vector.shape_cast %110 : vector<1x48x128xf32> to vector<48x128xf32>
    %c3 = arith.constant 3 : index
    %c0_125 = arith.constant 0 : index
    %c0_126 = arith.constant 0 : index
    %112 = vector.load %arg3[%c3, %c0_125, %c0_126] : memref<4x128x64xf32, #tpu.memory_space<vmem>>, vector<1x128x64xf32>
    %113 = vector.shape_cast %112 : vector<1x128x64xf32> to vector<128x64xf32>
    %cst_127 = arith.constant dense<0.000000e+00> : vector<48x64xf32>
    %114 = tpu.matmul %111, %113, %cst_127 {dimension_numbers = #tpu.dot_dimension_numbers<[1], [0], [0], [1], [0, 0, 1, 1], [], []>} : vector<48x128xf32>, vector<128x64xf32>, vector<48x64xf32> -> vector<48x64xf32>
    %115 = arith.addf %109, %114 : vector<48x64xf32>
    %116 = vector.broadcast %1 : vector<1x64xf32> to vector<48x64xf32>
    %117 = arith.addf %115, %116 : vector<48x64xf32>
    %cst_128 = arith.constant 0.000000e+00 : f32
    %118 = vector.broadcast %cst_128 : f32 to vector<48x64xf32>
    %119 = arith.maximumf %117, %118 : vector<48x64xf32>
    %c0_129 = arith.constant 0 : index
    %c0_130 = arith.constant 0 : index
    %120 = vector.load %arg10[%c0_129, %c0_130] : memref<48x256xf32, #tpu.memory_space<vmem>>, vector<48x64xf32>
    tpu.vector_store %arg10[%c0_129, %c0_130], %119 {strides = array<i32>} : memref<48x256xf32, #tpu.memory_space<vmem>>, vector<48x64xf32>,
    %121 = vector.extract_strided_slice %119 {offsets = [1, 0], sizes = [47, 64], strides = [1, 1]} : vector<48x64xf32> to vector<47x64xf32>
    %c0_131 = arith.constant 0 : index
    %c64_132 = arith.constant 64 : index
    %122 = vector.load %arg10[%c0_131, %c64_132] : memref<48x256xf32, #tpu.memory_space<vmem>>, vector<47x64xf32>
    tpu.vector_store %arg10[%c0_131, %c64_132], %121 {strides = array<i32>} : memref<48x256xf32, #tpu.memory_space<vmem>>, vector<47x64xf32>,
    %123 = vector.extract_strided_slice %119 {offsets = [2, 0], sizes = [46, 64], strides = [1, 1]} : vector<48x64xf32> to vector<46x64xf32>
    %c0_133 = arith.constant 0 : index
    %c128 = arith.constant 128 : index
    %124 = vector.load %arg10[%c0_133, %c128] : memref<48x256xf32, #tpu.memory_space<vmem>>, vector<46x64xf32>
    tpu.vector_store %arg10[%c0_133, %c128], %123 {strides = array<i32>} : memref<48x256xf32, #tpu.memory_space<vmem>>, vector<46x64xf32>,
    %c0_134 = arith.constant 0 : index
    %c0_135 = arith.constant 0 : index
    %125 = vector.load %arg10[%c0_134, %c0_135] : memref<48x256xf32, #tpu.memory_space<vmem>>, vector<32x256xf32>
    %c0_136 = arith.constant 0 : index
    %c0_137 = arith.constant 0 : index
    %c0_138 = arith.constant 0 : index
    %126 = vector.load %arg4[%c0_136, %c0_137, %c0_138] : memref<3x256x64xf32, #tpu.memory_space<vmem>>, vector<1x256x64xf32>
    %127 = vector.shape_cast %126 : vector<1x256x64xf32> to vector<256x64xf32>
    %cst_139 = arith.constant dense<0.000000e+00> : vector<32x64xf32>
    %128 = tpu.matmul %125, %127, %cst_139 {dimension_numbers = #tpu.dot_dimension_numbers<[1], [0], [0], [1], [0, 0, 1, 1], [], []>} : vector<32x256xf32>, vector<256x64xf32>, vector<32x64xf32> -> vector<32x64xf32>
    %c8_140 = arith.constant 8 : index
    %c0_141 = arith.constant 0 : index
    %129 = vector.load %arg10[%c8_140, %c0_141] : memref<48x256xf32, #tpu.memory_space<vmem>>, vector<32x256xf32>
    %c1_142 = arith.constant 1 : index
    %c0_143 = arith.constant 0 : index
    %c0_144 = arith.constant 0 : index
    %130 = vector.load %arg4[%c1_142, %c0_143, %c0_144] : memref<3x256x64xf32, #tpu.memory_space<vmem>>, vector<1x256x64xf32>
    %131 = vector.shape_cast %130 : vector<1x256x64xf32> to vector<256x64xf32>
    %cst_145 = arith.constant dense<0.000000e+00> : vector<32x64xf32>
    %132 = tpu.matmul %129, %131, %cst_145 {dimension_numbers = #tpu.dot_dimension_numbers<[1], [0], [0], [1], [0, 0, 1, 1], [], []>} : vector<32x256xf32>, vector<256x64xf32>, vector<32x64xf32> -> vector<32x64xf32>
    %133 = arith.addf %128, %132 : vector<32x64xf32>
    %c16 = arith.constant 16 : index
    %c0_146 = arith.constant 0 : index
    %134 = vector.load %arg10[%c16, %c0_146] : memref<48x256xf32, #tpu.memory_space<vmem>>, vector<32x256xf32>
    %c2_147 = arith.constant 2 : index
    %c0_148 = arith.constant 0 : index
    %c0_149 = arith.constant 0 : index
    %135 = vector.load %arg4[%c2_147, %c0_148, %c0_149] : memref<3x256x64xf32, #tpu.memory_space<vmem>>, vector<1x256x64xf32>
    %136 = vector.shape_cast %135 : vector<1x256x64xf32> to vector<256x64xf32>
    %cst_150 = arith.constant dense<0.000000e+00> : vector<32x64xf32>
    %137 = tpu.matmul %134, %136, %cst_150 {dimension_numbers = #tpu.dot_dimension_numbers<[1], [0], [0], [1], [0, 0, 1, 1], [], []>} : vector<32x256xf32>, vector<256x64xf32>, vector<32x64xf32> -> vector<32x64xf32>
    %138 = arith.addf %133, %137 : vector<32x64xf32>
    %139 = vector.broadcast %2 : vector<1x64xf32> to vector<32x64xf32>
    %140 = arith.addf %138, %139 : vector<32x64xf32>
    %cst_151 = arith.constant 0.000000e+00 : f32
    %141 = vector.broadcast %cst_151 : f32 to vector<32x64xf32>
    %142 = arith.maximumf %140, %141 : vector<32x64xf32>
    %c0_152 = arith.constant 0 : index
    %c0_153 = arith.constant 0 : index
    %c0_154 = arith.constant 0 : index
    %143 = vector.load %arg8[%c0_152, %c0_153, %c0_154] : memref<1x32x64xf32, #tpu.memory_space<vmem>>, vector<1x32x64xf32>
    %144 = vector.shape_cast %143 : vector<1x32x64xf32> to vector<32x64xf32>
    %145 = vector.shape_cast %142 : vector<32x64xf32> to vector<1x32x64xf32>
    tpu.vector_store %arg8[%c0_152, %c0_153, %c0_154], %145 {strides = array<i32>} : memref<1x32x64xf32, #tpu.memory_space<vmem>>, vector<1x32x64xf32>,
    return
  }
  func.func @transform_0(%arg0: i32) -> (i32, i32, i32, i32, i32) {
    %c0_i32 = arith.constant 0 : i32
    %c0_i32_0 = arith.constant 0 : i32
    %c0_i32_1 = arith.constant 0 : i32
    %c0_i32_2 = arith.constant 0 : i32
    %c0_i32_3 = arith.constant 0 : i32
    return %arg0, %c0_i32, %c0_i32_0, %c0_i32_1, %c0_i32_2 : i32, i32, i32, i32, i32
  }
  func.func @transform_1(%arg0: i32) -> (i32, i32, i32) {
    %c0_i32 = arith.constant 0 : i32
    %c0_i32_0 = arith.constant 0 : i32
    %c0_i32_1 = arith.constant 0 : i32
    %c0_i32_2 = arith.constant 0 : i32
    return %c0_i32, %c0_i32_0, %c0_i32_1 : i32, i32, i32
  }
  func.func @transform_2(%arg0: i32) -> (i32, i32, i32) {
    %c0_i32 = arith.constant 0 : i32
    %c0_i32_0 = arith.constant 0 : i32
    %c0_i32_1 = arith.constant 0 : i32
    %c0_i32_2 = arith.constant 0 : i32
    return %c0_i32, %c0_i32_0, %c0_i32_1 : i32, i32, i32
  }
  func.func @transform_3(%arg0: i32) -> (i32, i32, i32) {
    %c0_i32 = arith.constant 0 : i32
    %c0_i32_0 = arith.constant 0 : i32
    %c0_i32_1 = arith.constant 0 : i32
    %c0_i32_2 = arith.constant 0 : i32
    return %c0_i32, %c0_i32_0, %c0_i32_1 : i32, i32, i32
  }
  func.func @transform_4(%arg0: i32) -> (i32, i32) {
    %c0_i32 = arith.constant 0 : i32
    %c0_i32_0 = arith.constant 0 : i32
    %c0_i32_1 = arith.constant 0 : i32
    return %c0_i32, %c0_i32_0 : i32, i32
  }
  func.func @transform_5(%arg0: i32) -> (i32, i32) {
    %c0_i32 = arith.constant 0 : i32
    %c0_i32_0 = arith.constant 0 : i32
    %c0_i32_1 = arith.constant 0 : i32
    return %c0_i32, %c0_i32_0 : i32, i32
  }
  func.func @transform_6(%arg0: i32) -> (i32, i32) {
    %c0_i32 = arith.constant 0 : i32
    %c0_i32_0 = arith.constant 0 : i32
    %c0_i32_1 = arith.constant 0 : i32
    return %c0_i32, %c0_i32_0 : i32, i32
  }
  func.func @transform_7(%arg0: i32) -> (i32, i32, i32) {
    %c0_i32 = arith.constant 0 : i32
    %c0_i32_0 = arith.constant 0 : i32
    %c0_i32_1 = arith.constant 0 : i32
    return %arg0, %c0_i32, %c0_i32_0 : i32, i32, i32
  }
}

</mosaic_0001>

<llo_original>
// kernel: atari_encoder.1
$region0: #{atari_encoder.1}
  #allocation0 [shape = 'u32[]', space=smem, size = 0x4, offset = 0x4, fixed_abs, tag = 'smem constant byte address 0x4 - core index']
  #allocation1 [shape = 'u32[144,128]{1,0:T(1,128)}', space=vmem, size = 0x12000, scoped, tag = 'internal scratch']
  #allocation2 [shape = 'f32[2,64,128]{2,1,0:T(8,128)}', space=vmem, size = 0x10000, scoped, tag = 'scratch operand']
  #allocation3 [shape = 'f32[48,256]{1,0:T(8,128)}', space=vmem, size = 0xc000, scoped, tag = 'scratch operand']
  %s0 = inlined_call_operand.vmem [shape: f32[2,2,2,72,256], index: 0, kind: input, shape index: {}]
  %s1 = inlined_call_operand.vmem [shape: f32[2,256,32], index: 1, kind: input, shape index: {}]
  %s2 = inlined_call_operand.vmem [shape: f32[4,128,64], index: 2, kind: input, shape index: {}]
  %s3 = inlined_call_operand.vmem [shape: f32[3,256,64], index: 3, kind: input, shape index: {}]
  %s4 = inlined_call_operand.vmem [shape: f32[1,32], index: 4, kind: input, shape index: {}]
  %s5 = inlined_call_operand.vmem [shape: f32[1,64], index: 5, kind: input, shape index: {}]
  %s6 = inlined_call_operand.vmem [shape: f32[1,64], index: 6, kind: input, shape index: {}]
  %s7 = inlined_call_operand.vmem [shape: f32[2,32,64], index: 7, kind: output, shape index: {}]
  %s8 = sld [smem:[#allocation0]]
  $region61: #{atari_encoder.1} parent=0
    _
  %s10 = ssub.s32 1, %s8
  %s11 = scalar_select 0, %s10, %s8
  loop: start=0, step=1, limit=4
  $region2: #{atari_encoder.1} parent=0 // loop_pre_header
    _
  $region3: #{atari_encoder.1} parent=0 // loop_header
    %s13 = sphi 0, %s17
    %p14 = scmp.ge.s32.totalorder %s13, 4
    %s23 = sphi 0, %s25
    %s26 = sphi 0, %s23
    %s27 = sphi 0, %s26
    %s43 = sphi 0, %s27
    %s47 = sphi 0, %s47
    %s49 = sphi 0, %s47
    %s50 = sphi 0, %s49
    %s64 = sphi 0, %s50
    %s68 = sphi 0, %s68
    %s70 = sphi 0, %s68
    %s71 = sphi 0, %s70
    %s85 = sphi 0, %s71
    %s89 = sphi 0, %s89
    %s91 = sphi 0, %s89
    %s92 = sphi 0, %s91
    %s106 = sphi 0, %s92
    %s110 = sphi 0, %s110
    %s112 = sphi 0, %s110
    %s113 = sphi 0, %s112
    %s127 = sphi 0, %s113
    %s131 = sphi 0, %s131
    %s133 = sphi 0, %s131
    %s134 = sphi 0, %s133
    %s148 = sphi 0, %s134
    %s152 = sphi 0, %s152
    %s154 = sphi 0, %s152
    %s155 = sphi 0, %s154
    %s169 = sphi 0, %s155
    %s175 = sphi 0, %s177
    %s178 = sphi 0, %s175
    %s179 = sphi 0, %s178
    %s195 = sphi 0, %s179
  $region4: #{atari_encoder.1} parent=0 // loop_header_branch
    %16 = sbr.rel (%p14) target = $region8
  $region5: #{atari_encoder.1} parent=0 // loop_body
    %s18 = ssub.s32 %s13, 1
    %s19 = ssub.s32 %s13, 2
    %s20 = sadd.s32 %s13, 1
    %s21 = ssub.s32 %s13, %s20
    %p22 = scmp.eq.s32.totalorder %s21, 0
    %s24 = sadd.s32 %s23, 1
    %s25 = scalar_select %p22, %s23, %s24
    %p28 = pneg %p22
    %p29 = scmp.eq.s32.totalorder %s13, 1
    %p30 = por %p28, %p29
    %p31 = scmp.ne.s32.totalorder %s23, %s26
    %p32 = scmp.eq.s32.totalorder %s13, 0
    %p33 = por %p31, %p32
    %p34 = scmp.ne.s32.totalorder %s23, %s26
    %p35 = scmp.eq.s32.totalorder %s18, 1
    %p36 = por %p34, %p35
    %p37 = scmp.ne.s32.totalorder %s26, %s27
    %p38 = scmp.eq.s32.totalorder %s18, 0
    %p39 = por %p37, %p38
    %p40 = scmp.ne.s32.totalorder %s26, %s27
    %p41 = scmp.eq.s32.totalorder %s19, 1
    %p42 = por %p40, %p41
    %p44 = scmp.ne.s32.totalorder %s27, %s43
    %p45 = scmp.eq.s32.totalorder %s19, 0
    %p46 = por %p44, %p45
    %s48 = sadd.s32 %s47, 1
    %p51 = scmp.eq.s32.totalorder %s13, 1
    %p52 = scmp.ne.s32.totalorder %s47, %s49
    %p53 = scmp.eq.s32.totalorder %s13, 0
    %p54 = por %p52, %p53
    %p55 = scmp.ne.s32.totalorder %s47, %s49
    %p56 = scmp.eq.s32.totalorder %s18, 1
    %p57 = por %p55, %p56
    %p58 = scmp.ne.s32.totalorder %s49, %s50
    %p59 = scmp.eq.s32.totalorder %s18, 0
    %p60 = por %p58, %p59
    %p61 = scmp.ne.s32.totalorder %s49, %s50
    %p62 = scmp.eq.s32.totalorder %s19, 1
    %p63 = por %p61, %p62
    %p65 = scmp.ne.s32.totalorder %s50, %s64
    %p66 = scmp.eq.s32.totalorder %s19, 0
    %p67 = por %p65, %p66
    %s69 = sadd.s32 %s68, 1
    %p72 = scmp.eq.s32.totalorder %s13, 1
    %p73 = scmp.ne.s32.totalorder %s68, %s70
    %p74 = scmp.eq.s32.totalorder %s13, 0
    %p75 = por %p73, %p74
    %p76 = scmp.ne.s32.totalorder %s68, %s70
    %p77 = scmp.eq.s32.totalorder %s18, 1
    %p78 = por %p76, %p77
    %p79 = scmp.ne.s32.totalorder %s70, %s71
    %p80 = scmp.eq.s32.totalorder %s18, 0
    %p81 = por %p79, %p80
    %p82 = scmp.ne.s32.totalorder %s70, %s71
    %p83 = scmp.eq.s32.totalorder %s19, 1
    %p84 = por %p82, %p83
    %p86 = scmp.ne.s32.totalorder %s71, %s85
    %p87 = scmp.eq.s32.totalorder %s19, 0
    %p88 = por %p86, %p87
    %s90 = sadd.s32 %s89, 1
    %p93 = scmp.eq.s32.totalorder %s13, 1
    %p94 = scmp.ne.s32.totalorder %s89, %s91
    %p95 = scmp.eq.s32.totalorder %s13, 0
    %p96 = por %p94, %p95
    %p97 = scmp.ne.s32.totalorder %s89, %s91
    %p98 = scmp.eq.s32.totalorder %s18, 1
    %p99 = por %p97, %p98
    %p100 = scmp.ne.s32.totalorder %s91, %s92
    %p101 = scmp.eq.s32.totalorder %s18, 0
    %p102 = por %p100, %p101
    %p103 = scmp.ne.s32.totalorder %s91, %s92
    %p104 = scmp.eq.s32.totalorder %s19, 1
    %p105 = por %p103, %p104
    %p107 = scmp.ne.s32.totalorder %s92, %s106
    %p108 = scmp.eq.s32.totalorder %s19, 0
    %p109 = por %p107, %p108
    %s111 = sadd.s32 %s110, 1
    %p114 = scmp.eq.s32.totalorder %s13, 1
    %p115 = scmp.ne.s32.totalorder %s110, %s112
    %p116 = scmp.eq.s32.totalorder %s13, 0
    %p117 = por %p115, %p116
    %p118 = scmp.ne.s32.totalorder %s110, %s112
    %p119 = scmp.eq.s32.totalorder %s18, 1
    %p120 = por %p118, %p119
    %p121 = scmp.ne.s32.totalorder %s112, %s113
    %p122 = scmp.eq.s32.totalorder %s18, 0
    %p123 = por %p121, %p122
    %p124 = scmp.ne.s32.totalorder %s112, %s113
    %p125 = scmp.eq.s32.totalorder %s19, 1
    %p126 = por %p124, %p125
    %p128 = scmp.ne.s32.totalorder %s113, %s127
    %p129 = scmp.eq.s32.totalorder %s19, 0
    %p130 = por %p128, %p129
    %s132 = sadd.s32 %s131, 1
    %p135 = scmp.eq.s32.totalorder %s13, 1
    %p136 = scmp.ne.s32.totalorder %s131, %s133
    %p137 = scmp.eq.s32.totalorder %s13, 0
    %p138 = por %p136, %p137
    %p139 = scmp.ne.s32.totalorder %s131, %s133
    %p140 = scmp.eq.s32.totalorder %s18, 1
    %p141 = por %p139, %p140
    %p142 = scmp.ne.s32.totalorder %s133, %s134
    %p143 = scmp.eq.s32.totalorder %s18, 0
    %p144 = por %p142, %p143
    %p145 = scmp.ne.s32.totalorder %s133, %s134
    %p146 = scmp.eq.s32.totalorder %s19, 1
    %p147 = por %p145, %p146
    %p149 = scmp.ne.s32.totalorder %s134, %s148
    %p150 = scmp.eq.s32.totalorder %s19, 0
    %p151 = por %p149, %p150
    %s153 = sadd.s32 %s152, 1
    %p156 = scmp.eq.s32.totalorder %s13, 1
    %p157 = scmp.ne.s32.totalorder %s152, %s154
    %p158 = scmp.eq.s32.totalorder %s13, 0
    %p159 = por %p157, %p158
    %p160 = scmp.ne.s32.totalorder %s152, %s154
    %p161 = scmp.eq.s32.totalorder %s18, 1
    %p162 = por %p160, %p161
    %p163 = scmp.ne.s32.totalorder %s154, %s155
    %p164 = scmp.eq.s32.totalorder %s18, 0
    %p165 = por %p163, %p164
    %p166 = scmp.ne.s32.totalorder %s154, %s155
    %p167 = scmp.eq.s32.totalorder %s19, 1
    %p168 = por %p166, %p167
    %p170 = scmp.ne.s32.totalorder %s155, %s169
    %p171 = scmp.eq.s32.totalorder %s19, 0
    %p172 = por %p170, %p171
    %s173 = ssub.s32 %s13, %s20
    %p174 = scmp.eq.s32.totalorder %s173, 0
    %s176 = sadd.s32 %s175, 1
    %s177 = scalar_select %p174, %s175, %s176
    %p180 = pneg %p174
    %p181 = scmp.eq.s32.totalorder %s13, 1
    %p182 = por %p180, %p181
    %p183 = scmp.ne.s32.totalorder %s175, %s178
    %p184 = scmp.eq.s32.totalorder %s13, 0
    %p185 = por %p183, %p184
    %p186 = scmp.ne.s32.totalorder %s175, %s178
    %p187 = scmp.eq.s32.totalorder %s18, 1
    %p188 = por %p186, %p187
    %p189 = scmp.ne.s32.totalorder %s178, %s179
    %p190 = scmp.eq.s32.totalorder %s18, 0
    %p191 = por %p189, %p190
    %p192 = scmp.ne.s32.totalorder %s178, %s179
    %p193 = scmp.eq.s32.totalorder %s19, 1
    %p194 = por %p192, %p193
    %p196 = scmp.ne.s32.totalorder %s179, %s195
    %p197 = scmp.eq.s32.totalorder %s19, 0
    %p198 = por %p196, %p197
    %p199 = scmp.le.s32.totalorder 1, %s13
    %p200 = scmp.lt.s32.totalorder %s13, 3
    %p201 = pnand %p199, %p200
    %p202 = pneg %p201
    // Predicated region
    $region9: #{atari_encoder.1} parent=5 // pred_check
      _
    $region10: #{atari_encoder.1} parent=5 // pred_check_branch
      %204 = sbr.rel (%p201) target = $region12
    $region11: #{atari_encoder.1} parent=5 // pred_region
      %s205 = ssub.s32 %s13, 1
      // Predicated region
      $region13: #{atari_encoder.1} parent=11 // pred_check
        %p206 = pneg %p60
      $region14: #{atari_encoder.1} parent=11 // pred_check_branch
        %208 = sbr.rel (%p206) target = $region16
      $region15: #{atari_encoder.1} parent=11 // pred_region
        _
      $region16: #{atari_encoder.1} parent=11 // pred_fallthru
        _
      // Predicated region
      $region17: #{atari_encoder.1} parent=11 // pred_check
        %p209 = pneg %p81
      $region18: #{atari_encoder.1} parent=11 // pred_check_branch
        %211 = sbr.rel (%p209) target = $region20
      $region19: #{atari_encoder.1} parent=11 // pred_region
        _
      $region20: #{atari_encoder.1} parent=11 // pred_fallthru
        _
      // Predicated region
      $region21: #{atari_encoder.1} parent=11 // pred_check
        %p212 = pneg %p102
      $region22: #{atari_encoder.1} parent=11 // pred_check_branch
        %214 = sbr.rel (%p212) target = $region24
      $region23: #{atari_encoder.1} parent=11 // pred_region
        _
      $region24: #{atari_encoder.1} parent=11 // pred_fallthru
        _
      // Predicated region
      $region25: #{atari_encoder.1} parent=11 // pred_check
        %p215 = pneg %p123
      $region26: #{atari_encoder.1} parent=11 // pred_check_branch
        %217 = sbr.rel (%p215) target = $region28
      $region27: #{atari_encoder.1} parent=11 // pred_region
        _
      $region28: #{atari_encoder.1} parent=11 // pred_fallthru
        _
      // Predicated region
      $region29: #{atari_encoder.1} parent=11 // pred_check
        %p218 = pneg %p144
      $region30: #{atari_encoder.1} parent=11 // pred_check_branch
        %220 = sbr.rel (%p218) target = $region32
      $region31: #{atari_encoder.1} parent=11 // pred_region
        _
      $region32: #{atari_encoder.1} parent=11 // pred_fallthru
        _
      // Predicated region
      $region33: #{atari_encoder.1} parent=11 // pred_check
        %p221 = pneg %p165
      $region34: #{atari_encoder.1} parent=11 // pred_check_branch
        %223 = sbr.rel (%p221) target = $region36
      $region35: #{atari_encoder.1} parent=11 // pred_region
        _
      $region36: #{atari_encoder.1} parent=11 // pred_fallthru
        _
    $region12: #{atari_encoder.1} parent=5 // pred_fallthru
      _
    %p224 = scmp.lt.s32.totalorder %s13, 2
    // Predicated region
    $region37: #{atari_encoder.1} parent=5 // pred_check
      %p225 = pneg %p224
    $region38: #{atari_encoder.1} parent=5 // pred_check_branch
      %227 = sbr.rel (%p225) target = $region40
    $region39: #{atari_encoder.1} parent=5 // pred_region
      // Predicated region
      $region41: #{atari_encoder.1} parent=39 // pred_check
        %p228 = pneg %p33
      $region42: #{atari_encoder.1} parent=39 // pred_check_branch
        %230 = sbr.rel (%p228) target = $region44
      $region43: #{atari_encoder.1} parent=39 // pred_region
        %p231 = scmp.lt.s32.totalorder %s13, 1
        %s232 = scalar_select %p231, %s13, 1
        %s233 = smul.addr %s232, 72
        %s234 = smul.addr %s233, 8
        %s235 = scalar_lea.vmem %s0, %s234
      $region44: #{atari_encoder.1} parent=39 // pred_fallthru
        _
    $region40: #{atari_encoder.1} parent=5 // pred_fallthru
      _
    %p236 = scmp.le.s32.totalorder 1, %s13
    %p237 = scmp.lt.s32.totalorder %s13, 3
    %p238 = pnand %p236, %p237
    %p239 = pneg %p238
    // Predicated region
    $region45: #{atari_encoder.1} parent=5 // pred_check
      _
    $region46: #{atari_encoder.1} parent=5 // pred_check_branch
      %241 = sbr.rel (%p238) target = $region48
    $region47: #{atari_encoder.1} parent=5 // pred_region
      %s242 = ssub.s32 %s13, 1
      %p243 = scmp.lt.s32.totalorder %s18, 1
      %s244 = scalar_select %p243, %s18, 1
      %s245 = smul.addr %s244, 72
      %s246 = smul.addr %s245, 8
      %s247 = scalar_lea.vmem %s0, %s246
      %p248 = pneg %p39
      %p249 = pneg %p36
      %p250 = pneg %p60
      %p251 = pneg %p57
      %p252 = pneg %p81
      %p253 = pneg %p78
      %p254 = pneg %p102
      %p255 = pneg %p99
      %p256 = pneg %p123
      %p257 = pneg %p120
      %p258 = pneg %p144
      %p259 = pneg %p141
      %p260 = pneg %p165
      %p261 = pneg %p162
      %p262 = pneg %p191
      %p263 = pneg %p188
      %p264 = scmp.lt.s32.totalorder %s18, 1
      %s265 = scalar_select %p264, %s18, 1
      %s266 = smul.addr %s265, 4
      %s267 = smul.addr %s266, 8
      %s268 = scalar_lea.vmem %s7, %s267
      %p269 = scmp.lt.s32.totalorder %s18, 1
      %s270 = scalar_select %p269, %s18, 1
      %s271 = smul.addr %s270, 72
      %s272 = smul.addr %s271, 8
      %s273 = scalar_lea.vmem %s0, %s272
      %p274 = scmp.lt.s32.totalorder %s18, 1
      %s275 = scalar_select %p274, %s18, 1
      %s276 = smul.addr %s275, 4
      %s277 = smul.addr %s276, 8
      %s278 = scalar_lea.vmem %s7, %s277
      %v279 = vld [vmem:[%s4] sm:$0x1]
      %v280 = vld [vmem:[%s5] sm:$0x1]
      %v281 = vld [vmem:[%s6] sm:$0x1]
      %282 = vst [vmem:[#allocation3] sm:$0xff] 0.0
      %283 = vst [vmem:[#allocation3 + $0x8] sm:$0xff] 0.0
      %284 = vst [vmem:[#allocation3 + $0x10] sm:$0xff] 0.0
      %285 = vst [vmem:[#allocation3 + $0x18] sm:$0xff] 0.0
      %286 = vst [vmem:[#allocation3 + $0x20] sm:$0xff] 0.0
      %287 = vst [vmem:[#allocation3 + $0x28] sm:$0xff] 0.0
      %288 = vst [vmem:[#allocation3 + $0x30] sm:$0xff] 0.0
      %289 = vst [vmem:[#allocation3 + $0x38] sm:$0xff] 0.0
      %290 = vst [vmem:[#allocation3 + $0x40] sm:$0xff] 0.0
      %291 = vst [vmem:[#allocation3 + $0x48] sm:$0xff] 0.0
      %292 = vst [vmem:[#allocation3 + $0x50] sm:$0xff] 0.0
      %293 = vst [vmem:[#allocation3 + $0x58] sm:$0xff] 0.0
      %v294 = vld [vmem:[%s273] sm:$0xff]
      %v295 = vld [vmem:[%s273 + $0x8] sm:$0xff]
      %v296 = vld [vmem:[%s273 + $0x10] sm:$0xff]
      %v297 = vld [vmem:[%s273 + $0x18] sm:$0xff]
      %v298 = vld [vmem:[%s273 + $0x20] sm:$0xff]
      %v299 = vld [vmem:[%s273 + $0x28] sm:$0xff]
      %v300 = vld [vmem:[%s273 + $0x30] sm:$0xff]
      %v301 = vld [vmem:[%s273 + $0x38] sm:$0xff]
      %v302 = vld [vmem:[%s273 + $0x40] sm:$0xff]
      %v303 = vld [vmem:[%s273 + $0x48] sm:$0xff]
      %v304 = vld [vmem:[%s273 + $0x50] sm:$0xff]
      %v305 = vld [vmem:[%s273 + $0x58] sm:$0xff]
      %v306 = vld [vmem:[%s273 + $0x60] sm:$0xff]
      %v307 = vld [vmem:[%s273 + $0x68] sm:$0xff]
      %v308 = vld [vmem:[%s273 + $0x70] sm:$0xff]
      %v309 = vld [vmem:[%s273 + $0x78] sm:$0xff]
      %v310 = vld [vmem:[%s1] sm:$0xff]
      %v311 = vld [vmem:[%s1 + $0x8] sm:$0xff]
      %v312 = vld [vmem:[%s1 + $0x10] sm:$0xff]
      %v313 = vld [vmem:[%s1 + $0x18] sm:$0xff]
      %v314 = vld [vmem:[%s1 + $0x20] sm:$0xff]
      %v315 = vld [vmem:[%s1 + $0x28] sm:$0xff]
      %v316 = vld [vmem:[%s1 + $0x30] sm:$0xff]
      %v317 = vld [vmem:[%s1 + $0x38] sm:$0xff]
      %v318 = vld [vmem:[%s1 + $0x40] sm:$0xff]
      %v319 = vld [vmem:[%s1 + $0x48] sm:$0xff]
      %v320 = vld [vmem:[%s1 + $0x50] sm:$0xff]
      %v321 = vld [vmem:[%s1 + $0x58] sm:$0xff]
      %v322 = vld [vmem:[%s1 + $0x60] sm:$0xff]
      %v323 = vld [vmem:[%s1 + $0x68] sm:$0xff]
      %v324 = vld [vmem:[%s1 + $0x70] sm:$0xff]
      %v325 = vld [vmem:[%s1 + $0x78] sm:$0xff]
      %v326 = vld [vmem:[%s1 + $0x80] sm:$0xff]
      %v327 = vld [vmem:[%s1 + $0x88] sm:$0xff]
      %v328 = vld [vmem:[%s1 + $0x90] sm:$0xff]
      %v329 = vld [vmem:[%s1 + $0x98] sm:$0xff]
      %v330 = vld [vmem:[%s1 + $0xa0] sm:$0xff]
      %v331 = vld [vmem:[%s1 + $0xa8] sm:$0xff]
      %v332 = vld [vmem:[%s1 + $0xb0] sm:$0xff]
      %v333 = vld [vmem:[%s1 + $0xb8] sm:$0xff]
      %v334 = vld [vmem:[%s1 + $0xc0] sm:$0xff]
      %v335 = vld [vmem:[%s1 + $0xc8] sm:$0xff]
      %v336 = vld [vmem:[%s1 + $0xd0] sm:$0xff]
      %v337 = vld [vmem:[%s1 + $0xd8] sm:$0xff]
      %v338 = vld [vmem:[%s1 + $0xe0] sm:$0xff]
      %v339 = vld [vmem:[%s1 + $0xe8] sm:$0xff]
      %v340 = vld [vmem:[%s1 + $0xf0] sm:$0xff]
      %v341 = vld [vmem:[%s1 + $0xf8] sm:$0xff]
      %s342 = scalar_lea.vmem %s273, 144
      %v343 = vld [vmem:[%s342] sm:$0xff]
      %v344 = vld [vmem:[%s342 + $0x8] sm:$0xff]
      %v345 = vld [vmem:[%s342 + $0x10] sm:$0xff]
      %v346 = vld [vmem:[%s342 + $0x18] sm:$0xff]
      %v347 = vld [vmem:[%s342 + $0x20] sm:$0xff]
      %v348 = vld [vmem:[%s342 + $0x28] sm:$0xff]
      %v349 = vld [vmem:[%s342 + $0x30] sm:$0xff]
      %v350 = vld [vmem:[%s342 + $0x38] sm:$0xff]
      %v351 = vld [vmem:[%s342 + $0x40] sm:$0xff]
      %v352 = vld [vmem:[%s342 + $0x48] sm:$0xff]
      %v353 = vld [vmem:[%s342 + $0x50] sm:$0xff]
      %v354 = vld [vmem:[%s342 + $0x58] sm:$0xff]
      %v355 = vld [vmem:[%s342 + $0x60] sm:$0xff]
      %v356 = vld [vmem:[%s342 + $0x68] sm:$0xff]
      %v357 = vld [vmem:[%s342 + $0x70] sm:$0xff]
      %v358 = vld [vmem:[%s342 + $0x78] sm:$0xff]
      %s359 = scalar_lea.vmem %s1, 256
      %v360 = vld [vmem:[%s359] sm:$0xff]
      %v361 = vld [vmem:[%s359 + $0x8] sm:$0xff]
      %v362 = vld [vmem:[%s359 + $0x10] sm:$0xff]
      %v363 = vld [vmem:[%s359 + $0x18] sm:$0xff]
      %v364 = vld [vmem:[%s359 + $0x20] sm:$0xff]
      %v365 = vld [vmem:[%s359 + $0x28] sm:$0xff]
      %v366 = vld [vmem:[%s359 + $0x30] sm:$0xff]
      %v367 = vld [vmem:[%s359 + $0x38] sm:$0xff]
      %v368 = vld [vmem:[%s359 + $0x40] sm:$0xff]
      %v369 = vld [vmem:[%s359 + $0x48] sm:$0xff]
      %v370 = vld [vmem:[%s359 + $0x50] sm:$0xff]
      %v371 = vld [vmem:[%s359 + $0x58] sm:$0xff]
      %v372 = vld [vmem:[%s359 + $0x60] sm:$0xff]
      %v373 = vld [vmem:[%s359 + $0x68] sm:$0xff]
      %v374 = vld [vmem:[%s359 + $0x70] sm:$0xff]
      %v375 = vld [vmem:[%s359 + $0x78] sm:$0xff]
      %v376 = vld [vmem:[%s359 + $0x80] sm:$0xff]
      %v377 = vld [vmem:[%s359 + $0x88] sm:$0xff]
      %v378 = vld [vmem:[%s359 + $0x90] sm:$0xff]
      %v379 = vld [vmem:[%s359 + $0x98] sm:$0xff]
      %v380 = vld [vmem:[%s359 + $0xa0] sm:$0xff]
      %v381 = vld [vmem:[%s359 + $0xa8] sm:$0xff]
      %v382 = vld [vmem:[%s359 + $0xb0] sm:$0xff]
      %v383 = vld [vmem:[%s359 + $0xb8] sm:$0xff]
      %v384 = vld [vmem:[%s359 + $0xc0] sm:$0xff]
      %v385 = vld [vmem:[%s359 + $0xc8] sm:$0xff]
      %v386 = vld [vmem:[%s359 + $0xd0] sm:$0xff]
      %v387 = vld [vmem:[%s359 + $0xd8] sm:$0xff]
      %v388 = vld [vmem:[%s359 + $0xe0] sm:$0xff]
      %v389 = vld [vmem:[%s359 + $0xe8] sm:$0xff]
      %v390 = vld [vmem:[%s359 + $0xf0] sm:$0xff]
      %v391 = vld [vmem:[%s359 + $0xf8] sm:$0xff]
      %392 = vmatprep.subr.mxu0 0.0
      %393 = vmatpush1.msra.mxu0 %v375
      %394 = vmatprep.subr.mxu0 0.0
      %395 = vmatpush1.msra.mxu0 %v374
      %396 = vmatprep.subr.mxu0 0.0
      %397 = vmatpush1.msra.mxu0 %v373
      %398 = vmatprep.subr.mxu0 0.0
      %399 = vmatpush1.msra.mxu0 %v372
      %400 = vmatprep.subr.mxu0 0.0
      %401 = vmatpush1.msra.mxu0 %v371
      %402 = vmatprep.subr.mxu0 0.0
      %403 = vmatpush1.msra.mxu0 %v370
      %404 = vmatprep.subr.mxu0 0.0
      %405 = vmatpush1.msra.mxu0 %v369
      %406 = vmatprep.subr.mxu0 0.0
      %407 = vmatpush1.msra.mxu0 %v368
      %408 = vmatprep.subr.mxu0 0.0
      %409 = vmatpush1.msra.mxu0 %v367
      %410 = vmatprep.subr.mxu0 0.0
      %411 = vmatpush1.msra.mxu0 %v366
      %412 = vmatprep.subr.mxu0 0.0
      %413 = vmatpush1.msra.mxu0 %v365
      %414 = vmatprep.subr.mxu0 0.0
      %415 = vmatpush1.msra.mxu0 %v364
      %416 = vmatprep.subr.mxu0 0.0
      %417 = vmatpush1.msra.mxu0 %v363
      %418 = vmatprep.subr.mxu0 0.0
      %419 = vmatpush1.msra.mxu0 %v362
      %420 = vmatprep.subr.mxu0 0.0
      %421 = vmatpush1.msra.mxu0 %v361
      %422 = vmatprep.subr.mxu0 0.0
      %423 = vmatpush1.msra.mxu0 %v360
      %424 = vmatprep.subr.mxu0 0.0
      %425 = vmatpush2.msra.mxu0 %v391
      %426 = vmatprep.subr.mxu0 0.0
      %427 = vmatpush2.msra.mxu0 %v390
      %428 = vmatprep.subr.mxu0 0.0
      %429 = vmatpush2.msra.mxu0 %v389
      %430 = vmatprep.subr.mxu0 0.0
      %431 = vmatpush2.msra.mxu0 %v388
      %432 = vmatprep.subr.mxu0 0.0
      %433 = vmatpush2.msra.mxu0 %v387
      %434 = vmatprep.subr.mxu0 0.0
      %435 = vmatpush2.msra.mxu0 %v386
      %436 = vmatprep.subr.mxu0 0.0
      %437 = vmatpush2.msra.mxu0 %v385
      %438 = vmatprep.subr.mxu0 0.0
      %439 = vmatpush2.msra.mxu0 %v384
      %440 = vmatprep.subr.mxu0 0.0
      %441 = vmatpush2.msra.mxu0 %v383
      %442 = vmatprep.subr.mxu0 0.0
      %443 = vmatpush2.msra.mxu0 %v382
      %444 = vmatprep.subr.mxu0 0.0
      %445 = vmatpush2.msra.mxu0 %v381
      %446 = vmatprep.subr.mxu0 0.0
      %447 = vmatpush2.msra.mxu0 %v380
      %448 = vmatprep.subr.mxu0 0.0
      %449 = vmatpush2.msra.mxu0 %v379
      %450 = vmatprep.subr.mxu0 0.0
      %451 = vmatpush2.msra.mxu0 %v378
      %452 = vmatprep.subr.mxu0 0.0
      %453 = vmatpush2.msra.mxu0 %v377
      %454 = vmatprep.subr.mxu0 0.0
      %455 = vmatpush2.msra.mxu0 %v376
      %456 = vmatprep.mubr.f32.mxu0 %v344
      %457 = vmatmul.mubr.f32.gmra.mxu0 %v343
      %v458 = vpop.f32.mrf.mxu0
      %v459 = vadd.f32 0.0, %v458
      %v460 = vpop.f32.mrf.mxu0
      %461 = vmatprep.mubr.f32.mxu0 %v346
      %462 = vmatmul.mubr.f32.gmra.mxu0 %v345
      %v463 = vpop.f32.mrf.mxu0
      %v464 = vadd.f32 0.0, %v463
      %v465 = vpop.f32.mrf.mxu0
      %466 = vmatprep.mubr.f32.mxu0 %v348
      %467 = vmatmul.mubr.f32.gmra.mxu0 %v347
      %v468 = vpop.f32.mrf.mxu0
      %v469 = vadd.f32 0.0, %v468
      %v470 = vpop.f32.mrf.mxu0
      %471 = vmatprep.mubr.f32.mxu0 %v350
      %472 = vmatmul.mubr.f32.gmra.mxu0 %v349
      %v473 = vpop.f32.mrf.mxu0
      %v474 = vadd.f32 0.0, %v473
      %v475 = vpop.f32.mrf.mxu0
      %476 = vmatprep.mubr.f32.mxu0 %v352
      %477 = vmatmul.mubr.f32.gmra.mxu0 %v351
      %v478 = vpop.f32.mrf.mxu0
      %v479 = vadd.f32 0.0, %v478
      %v480 = vpop.f32.mrf.mxu0
      %481 = vmatprep.mubr.f32.mxu0 %v354
      %482 = vmatmul.mubr.f32.gmra.mxu0 %v353
      %v483 = vpop.f32.mrf.mxu0
      %v484 = vadd.f32 0.0, %v483
      %v485 = vpop.f32.mrf.mxu0
      %486 = vmatprep.mubr.f32.mxu0 %v356
      %487 = vmatmul.mubr.f32.gmra.mxu0 %v355
      %v488 = vpop.f32.mrf.mxu0
      %v489 = vadd.f32 0.0, %v488
      %v490 = vpop.f32.mrf.mxu0
      %491 = vmatprep.mubr.f32.mxu0 %v358
      %492 = vmatmul.mubr.f32.gmra.mxu0 %v357
      %v493 = vpop.f32.mrf.mxu0
      %v494 = vadd.f32 0.0, %v493
      %v495 = vpop.f32.mrf.mxu0
      %496 = vdwg.mxu0
      %497 = vmatprep.subr.mxu0 0.0
      %498 = vmatpush1.msra.mxu0 %v325
      %499 = vmatprep.subr.mxu0 0.0
      %500 = vmatpush1.msra.mxu0 %v324
      %501 = vmatprep.subr.mxu0 0.0
      %502 = vmatpush1.msra.mxu0 %v323
      %503 = vmatprep.subr.mxu0 0.0
      %504 = vmatpush1.msra.mxu0 %v322
      %505 = vmatprep.subr.mxu0 0.0
      %506 = vmatpush1.msra.mxu0 %v321
      %507 = vmatprep.subr.mxu0 0.0
      %508 = vmatpush1.msra.mxu0 %v320
      %509 = vmatprep.subr.mxu0 0.0
      %510 = vmatpush1.msra.mxu0 %v319
      %511 = vmatprep.subr.mxu0 0.0
      %512 = vmatpush1.msra.mxu0 %v318
      %513 = vmatprep.subr.mxu0 0.0
      %514 = vmatpush1.msra.mxu0 %v317
      %515 = vmatprep.subr.mxu0 0.0
      %516 = vmatpush1.msra.mxu0 %v316
      %517 = vmatprep.subr.mxu0 0.0
      %518 = vmatpush1.msra.mxu0 %v315
      %519 = vmatprep.subr.mxu0 0.0
      %520 = vmatpush1.msra.mxu0 %v314
      %521 = vmatprep.subr.mxu0 0.0
      %522 = vmatpush1.msra.mxu0 %v313
      %523 = vmatprep.subr.mxu0 0.0
      %524 = vmatpush1.msra.mxu0 %v312
      %525 = vmatprep.subr.mxu0 0.0
      %526 = vmatpush1.msra.mxu0 %v311
      %527 = vmatprep.subr.mxu0 0.0
      %528 = vmatpush1.msra.mxu0 %v310
      %529 = vmatprep.subr.mxu0 0.0
      %530 = vmatpush2.msra.mxu0 %v341
      %531 = vmatprep.subr.mxu0 0.0
      %532 = vmatpush2.msra.mxu0 %v340
      %533 = vmatprep.subr.mxu0 0.0
      %534 = vmatpush2.msra.mxu0 %v339
      %535 = vmatprep.subr.mxu0 0.0
      %536 = vmatpush2.msra.mxu0 %v338
      %537 = vmatprep.subr.mxu0 0.0
      %538 = vmatpush2.msra.mxu0 %v337
      %539 = vmatprep.subr.mxu0 0.0
      %540 = vmatpush2.msra.mxu0 %v336
      %541 = vmatprep.subr.mxu0 0.0
      %542 = vmatpush2.msra.mxu0 %v335
      %543 = vmatprep.subr.mxu0 0.0
      %544 = vmatpush2.msra.mxu0 %v334
      %545 = vmatprep.subr.mxu0 0.0
      %546 = vmatpush2.msra.mxu0 %v333
      %547 = vmatprep.subr.mxu0 0.0
      %548 = vmatpush2.msra.mxu0 %v332
      %549 = vmatprep.subr.mxu0 0.0
      %550 = vmatpush2.msra.mxu0 %v331
      %551 = vmatprep.subr.mxu0 0.0
      %552 = vmatpush2.msra.mxu0 %v330
      %553 = vmatprep.subr.mxu0 0.0
      %554 = vmatpush2.msra.mxu0 %v329
      %555 = vmatprep.subr.mxu0 0.0
      %556 = vmatpush2.msra.mxu0 %v328
      %557 = vmatprep.subr.mxu0 0.0
      %558 = vmatpush2.msra.mxu0 %v327
      %559 = vmatprep.subr.mxu0 0.0
      %560 = vmatpush2.msra.mxu0 %v326
      %561 = vmatprep.mubr.f32.mxu0 %v295
      %562 = vmatmul.mubr.f32.gmra.mxu0 %v294
      %v563 = vpop.f32.mrf.mxu0
      %v564 = vadd.f32 %v459, %v563
      %v565 = vpop.f32.mrf.mxu0
      %566 = vmatprep.mubr.f32.mxu0 %v297
      %567 = vmatmul.mubr.f32.gmra.mxu0 %v296
      %v568 = vpop.f32.mrf.mxu0
      %v569 = vadd.f32 %v464, %v568
      %v570 = vpop.f32.mrf.mxu0
      %571 = vmatprep.mubr.f32.mxu0 %v299
      %572 = vmatmul.mubr.f32.gmra.mxu0 %v298
      %v573 = vpop.f32.mrf.mxu0
      %v574 = vadd.f32 %v469, %v573
      %v575 = vpop.f32.mrf.mxu0
      %576 = vmatprep.mubr.f32.mxu0 %v301
      %577 = vmatmul.mubr.f32.gmra.mxu0 %v300
      %v578 = vpop.f32.mrf.mxu0
      %v579 = vadd.f32 %v474, %v578
      %v580 = vpop.f32.mrf.mxu0
      %581 = vmatprep.mubr.f32.mxu0 %v303
      %582 = vmatmul.mubr.f32.gmra.mxu0 %v302
      %v583 = vpop.f32.mrf.mxu0
      %v584 = vadd.f32 %v479, %v583
      %v585 = vpop.f32.mrf.mxu0
      %586 = vmatprep.mubr.f32.mxu0 %v305
      %587 = vmatmul.mubr.f32.gmra.mxu0 %v304
      %v588 = vpop.f32.mrf.mxu0
      %v589 = vadd.f32 %v484, %v588
      %v590 = vpop.f32.mrf.mxu0
      %591 = vmatprep.mubr.f32.mxu0 %v307
      %592 = vmatmul.mubr.f32.gmra.mxu0 %v306
      %v593 = vpop.f32.mrf.mxu0
      %v594 = vadd.f32 %v489, %v593
      %v595 = vpop.f32.mrf.mxu0
      %596 = vmatprep.mubr.f32.mxu0 %v309
      %597 = vmatmul.mubr.f32.gmra.mxu0 %v308
      %v598 = vpop.f32.mrf.mxu0
      %v599 = vadd.f32 %v494, %v598
      %v600 = vpop.f32.mrf.mxu0
      %601 = vdwg.mxu0
      %v603 = vlaneseq
      %v604 = vshrl.u32 %v603, 7
      %v605 = vsub.s32 0, %v604
      %v606 = vrot.slane %v279, %v605
      %v608 = vadd.f32 %v564, %v606
      %v609 = vadd.f32 %v569, %v606
      %v610 = vadd.f32 %v574, %v606
      %v611 = vadd.f32 %v579, %v606
      %v612 = vadd.f32 %v584, %v606
      %v613 = vadd.f32 %v589, %v606
      %v614 = vadd.f32 %v594, %v606
      %v615 = vadd.f32 %v599, %v606
      %v616 = vmax.f32 %v608, 0.0
      %v617 = vmax.f32 %v609, 0.0
      %v618 = vmax.f32 %v610, 0.0
      %v619 = vmax.f32 %v611, 0.0
      %v620 = vmax.f32 %v612, 0.0
      %v621 = vmax.f32 %v613, 0.0
      %v622 = vmax.f32 %v614, 0.0
      %v623 = vmax.f32 %v615, 0.0
      %v624 = vld [vmem:[%s273] sm:$0xfe]
      %v625 = vld [vmem:[%s273 + $0x8] sm:$0xfe]
      %v626 = vld [vmem:[%s273 + $0x10] sm:$0xff]
      %v627 = vld [vmem:[%s273 + $0x18] sm:$0xff]
      %v628 = vld [vmem:[%s273 + $0x20] sm:$0xff]
      %v629 = vld [vmem:[%s273 + $0x28] sm:$0xff]
      %v630 = vld [vmem:[%s273 + $0x30] sm:$0xff]
      %v631 = vld [vmem:[%s273 + $0x38] sm:$0xff]
      %v632 = vld [vmem:[%s273 + $0x40] sm:$0xff]
      %v633 = vld [vmem:[%s273 + $0x48] sm:$0xff]
      %v634 = vld [vmem:[%s273 + $0x50] sm:$0xff]
      %v635 = vld [vmem:[%s273 + $0x58] sm:$0xff]
      %v636 = vld [vmem:[%s273 + $0x60] sm:$0xff]
      %v637 = vld [vmem:[%s273 + $0x68] sm:$0xff]
      %v638 = vld [vmem:[%s273 + $0x70] sm:$0xff]
      %v639 = vld [vmem:[%s273 + $0x78] sm:$0xff]
      %v640 = vld [vmem:[%s273 + $0x80] sm:$0x1]
      %v641 = vld [vmem:[%s273 + $0x88] sm:$0x1]
      %vm660 = vcmask 1046528
      %v661 = vrot.slane %v624, 1
      %v662 = vrot.slane %v626, 1
      %v663 = vsel %vm660, %v661, %v662
      %v664 = vrot.slane %v625, 1
      %v665 = vrot.slane %v627, 1
      %v666 = vsel %vm660, %v664, %v665
      %v667 = vrot.slane %v628, 1
      %v668 = vsel %vm660, %v662, %v667
      %v669 = vrot.slane %v629, 1
      %v670 = vsel %vm660, %v665, %v669
      %v671 = vrot.slane %v630, 1
      %v672 = vsel %vm660, %v667, %v671
      %v673 = vrot.slane %v631, 1
      %v674 = vsel %vm660, %v669, %v673
      %v675 = vrot.slane %v632, 1
      %v676 = vsel %vm660, %v671, %v675
      %v677 = vrot.slane %v633, 1
      %v678 = vsel %vm660, %v673, %v677
      %v679 = vrot.slane %v634, 1
      %v680 = vsel %vm660, %v675, %v679
      %v681 = vrot.slane %v635, 1
      %v682 = vsel %vm660, %v677, %v681
      %v683 = vrot.slane %v636, 1
      %v684 = vsel %vm660, %v679, %v683
      %v685 = vrot.slane %v637, 1
      %v686 = vsel %vm660, %v681, %v685
      %v687 = vrot.slane %v638, 1
      %v688 = vsel %vm660, %v683, %v687
      %v689 = vrot.slane %v639, 1
      %v690 = vsel %vm660, %v685, %v689
      %v691 = vrot.slane %v640, 1
      %v692 = vsel %vm660, %v687, %v691
      %v693 = vrot.slane %v641, 1
      %v694 = vsel %vm660, %v689, %v693
      %711 = vmatprep.subr.mxu0 0.0
      %712 = vmatpush1.msra.mxu0 %v375
      %713 = vmatprep.subr.mxu0 0.0
      %714 = vmatpush1.msra.mxu0 %v374
      %715 = vmatprep.subr.mxu0 0.0
      %716 = vmatpush1.msra.mxu0 %v373
      %717 = vmatprep.subr.mxu0 0.0
      %718 = vmatpush1.msra.mxu0 %v372
      %719 = vmatprep.subr.mxu0 0.0
      %720 = vmatpush1.msra.mxu0 %v371
      %721 = vmatprep.subr.mxu0 0.0
      %722 = vmatpush1.msra.mxu0 %v370
      %723 = vmatprep.subr.mxu0 0.0
      %724 = vmatpush1.msra.mxu0 %v369
      %725 = vmatprep.subr.mxu0 0.0
      %726 = vmatpush1.msra.mxu0 %v368
      %727 = vmatprep.subr.mxu0 0.0
      %728 = vmatpush1.msra.mxu0 %v367
      %729 = vmatprep.subr.mxu0 0.0
      %730 = vmatpush1.msra.mxu0 %v366
      %731 = vmatprep.subr.mxu0 0.0
      %732 = vmatpush1.msra.mxu0 %v365
      %733 = vmatprep.subr.mxu0 0.0
      %734 = vmatpush1.msra.mxu0 %v364
      %735 = vmatprep.subr.mxu0 0.0
      %736 = vmatpush1.msra.mxu0 %v363
      %737 = vmatprep.subr.mxu0 0.0
      %738 = vmatpush1.msra.mxu0 %v362
      %739 = vmatprep.subr.mxu0 0.0
      %740 = vmatpush1.msra.mxu0 %v361
      %741 = vmatprep.subr.mxu0 0.0
      %742 = vmatpush1.msra.mxu0 %v360
      %743 = vmatprep.subr.mxu0 0.0
      %744 = vmatpush2.msra.mxu0 %v391
      %745 = vmatprep.subr.mxu0 0.0
      %746 = vmatpush2.msra.mxu0 %v390
      %747 = vmatprep.subr.mxu0 0.0
      %748 = vmatpush2.msra.mxu0 %v389
      %749 = vmatprep.subr.mxu0 0.0
      %750 = vmatpush2.msra.mxu0 %v388
      %751 = vmatprep.subr.mxu0 0.0
      %752 = vmatpush2.msra.mxu0 %v387
      %753 = vmatprep.subr.mxu0 0.0
      %754 = vmatpush2.msra.mxu0 %v386
      %755 = vmatprep.subr.mxu0 0.0
      %756 = vmatpush2.msra.mxu0 %v385
      %757 = vmatprep.subr.mxu0 0.0
      %758 = vmatpush2.msra.mxu0 %v384
      %759 = vmatprep.subr.mxu0 0.0
      %760 = vmatpush2.msra.mxu0 %v383
      %761 = vmatprep.subr.mxu0 0.0
      %762 = vmatpush2.msra.mxu0 %v382
      %763 = vmatprep.subr.mxu0 0.0
      %764 = vmatpush2.msra.mxu0 %v381
      %765 = vmatprep.subr.mxu0 0.0
      %766 = vmatpush2.msra.mxu0 %v380
      %767 = vmatprep.subr.mxu0 0.0
      %768 = vmatpush2.msra.mxu0 %v379
      %769 = vmatprep.subr.mxu0 0.0
      %770 = vmatpush2.msra.mxu0 %v378
      %771 = vmatprep.subr.mxu0 0.0
      %772 = vmatpush2.msra.mxu0 %v377
      %773 = vmatprep.subr.mxu0 0.0
      %774 = vmatpush2.msra.mxu0 %v376
      %775 = vmatprep.mubr.f32.mxu0 %v666
      %776 = vmatmul.mubr.f32.gmra.mxu0 %v663
      %v777 = vpop.f32.mrf.mxu0
      %v778 = vadd.f32 0.0, %v777
      %v779 = vpop.f32.mrf.mxu0
      %780 = vmatprep.mubr.f32.mxu0 %v670
      %781 = vmatmul.mubr.f32.gmra.mxu0 %v668
      %v782 = vpop.f32.mrf.mxu0
      %v783 = vadd.f32 0.0, %v782
      %v784 = vpop.f32.mrf.mxu0
      %785 = vmatprep.mubr.f32.mxu0 %v674
      %786 = vmatmul.mubr.f32.gmra.mxu0 %v672
      %v787 = vpop.f32.mrf.mxu0
      %v788 = vadd.f32 0.0, %v787
      %v789 = vpop.f32.mrf.mxu0
      %790 = vmatprep.mubr.f32.mxu0 %v678
      %791 = vmatmul.mubr.f32.gmra.mxu0 %v676
      %v792 = vpop.f32.mrf.mxu0
      %v793 = vadd.f32 0.0, %v792
      %v794 = vpop.f32.mrf.mxu0
      %795 = vmatprep.mubr.f32.mxu0 %v682
      %796 = vmatmul.mubr.f32.gmra.mxu0 %v680
      %v797 = vpop.f32.mrf.mxu0
      %v798 = vadd.f32 0.0, %v797
      %v799 = vpop.f32.mrf.mxu0
      %800 = vmatprep.mubr.f32.mxu0 %v686
      %801 = vmatmul.mubr.f32.gmra.mxu0 %v684
      %v802 = vpop.f32.mrf.mxu0
      %v803 = vadd.f32 0.0, %v802
      %v804 = vpop.f32.mrf.mxu0
      %805 = vmatprep.mubr.f32.mxu0 %v690
      %806 = vmatmul.mubr.f32.gmra.mxu0 %v688
      %v807 = vpop.f32.mrf.mxu0
      %v808 = vadd.f32 0.0, %v807
      %v809 = vpop.f32.mrf.mxu0
      %810 = vmatprep.mubr.f32.mxu0 %v694
      %811 = vmatmul.mubr.f32.gmra.mxu0 %v692
      %v812 = vpop.f32.mrf.mxu0
      %v813 = vadd.f32 0.0, %v812
      %v814 = vpop.f32.mrf.mxu0
      %815 = vdwg.mxu0
      %816 = vmatprep.subr.mxu0 0.0
      %817 = vmatpush1.msra.mxu0 %v325
      %818 = vmatprep.subr.mxu0 0.0
      %819 = vmatpush1.msra.mxu0 %v324
      %820 = vmatprep.subr.mxu0 0.0
      %821 = vmatpush1.msra.mxu0 %v323
      %822 = vmatprep.subr.mxu0 0.0
      %823 = vmatpush1.msra.mxu0 %v322
      %824 = vmatprep.subr.mxu0 0.0
      %825 = vmatpush1.msra.mxu0 %v321
      %826 = vmatprep.subr.mxu0 0.0
      %827 = vmatpush1.msra.mxu0 %v320
      %828 = vmatprep.subr.mxu0 0.0
      %829 = vmatpush1.msra.mxu0 %v319
      %830 = vmatprep.subr.mxu0 0.0
      %831 = vmatpush1.msra.mxu0 %v318
      %832 = vmatprep.subr.mxu0 0.0
      %833 = vmatpush1.msra.mxu0 %v317
      %834 = vmatprep.subr.mxu0 0.0
      %835 = vmatpush1.msra.mxu0 %v316
      %836 = vmatprep.subr.mxu0 0.0
      %837 = vmatpush1.msra.mxu0 %v315
      %838 = vmatprep.subr.mxu0 0.0
      %839 = vmatpush1.msra.mxu0 %v314
      %840 = vmatprep.subr.mxu0 0.0
      %841 = vmatpush1.msra.mxu0 %v313
      %842 = vmatprep.subr.mxu0 0.0
      %843 = vmatpush1.msra.mxu0 %v312
      %844 = vmatprep.subr.mxu0 0.0
      %845 = vmatpush1.msra.mxu0 %v311
      %846 = vmatprep.subr.mxu0 0.0
      %847 = vmatpush1.msra.mxu0 %v310
      %848 = vmatprep.subr.mxu0 0.0
      %849 = vmatpush2.msra.mxu0 %v341
      %850 = vmatprep.subr.mxu0 0.0
      %851 = vmatpush2.msra.mxu0 %v340
      %852 = vmatprep.subr.mxu0 0.0
      %853 = vmatpush2.msra.mxu0 %v339
      %854 = vmatprep.subr.mxu0 0.0
      %855 = vmatpush2.msra.mxu0 %v338
      %856 = vmatprep.subr.mxu0 0.0
      %857 = vmatpush2.msra.mxu0 %v337
      %858 = vmatprep.subr.mxu0 0.0
      %859 = vmatpush2.msra.mxu0 %v336
      %860 = vmatprep.subr.mxu0 0.0
      %861 = vmatpush2.msra.mxu0 %v335
      %862 = vmatprep.subr.mxu0 0.0
      %863 = vmatpush2.msra.mxu0 %v334
      %864 = vmatprep.subr.mxu0 0.0
      %865 = vmatpush2.msra.mxu0 %v333
      %866 = vmatprep.subr.mxu0 0.0
      %867 = vmatpush2.msra.mxu0 %v332
      %868 = vmatprep.subr.mxu0 0.0
      %869 = vmatpush2.msra.mxu0 %v331
      %870 = vmatprep.subr.mxu0 0.0
      %871 = vmatpush2.msra.mxu0 %v330
      %872 = vmatprep.subr.mxu0 0.0
      %873 = vmatpush2.msra.mxu0 %v329
      %874 = vmatprep.subr.mxu0 0.0
      %875 = vmatpush2.msra.mxu0 %v328
      %876 = vmatprep.subr.mxu0 0.0
      %877 = vmatpush2.msra.mxu0 %v327
      %878 = vmatprep.subr.mxu0 0.0
      %879 = vmatpush2.msra.mxu0 %v326
      %880 = vmatprep.mubr.f32.mxu0 %v344
      %881 = vmatmul.mubr.f32.gmra.mxu0 %v343
      %v882 = vpop.f32.mrf.mxu0
      %v883 = vadd.f32 %v778, %v882
      %v884 = vpop.f32.mrf.mxu0
      %885 = vmatprep.mubr.f32.mxu0 %v346
      %886 = vmatmul.mubr.f32.gmra.mxu0 %v345
      %v887 = vpop.f32.mrf.mxu0
      %v888 = vadd.f32 %v783, %v887
      %v889 = vpop.f32.mrf.mxu0
      %890 = vmatprep.mubr.f32.mxu0 %v348
      %891 = vmatmul.mubr.f32.gmra.mxu0 %v347
      %v892 = vpop.f32.mrf.mxu0
      %v893 = vadd.f32 %v788, %v892
      %v894 = vpop.f32.mrf.mxu0
      %895 = vmatprep.mubr.f32.mxu0 %v350
      %896 = vmatmul.mubr.f32.gmra.mxu0 %v349
      %v897 = vpop.f32.mrf.mxu0
      %v898 = vadd.f32 %v793, %v897
      %v899 = vpop.f32.mrf.mxu0
      %900 = vmatprep.mubr.f32.mxu0 %v352
      %901 = vmatmul.mubr.f32.gmra.mxu0 %v351
      %v902 = vpop.f32.mrf.mxu0
      %v903 = vadd.f32 %v798, %v902
      %v904 = vpop.f32.mrf.mxu0
      %905 = vmatprep.mubr.f32.mxu0 %v354
      %906 = vmatmul.mubr.f32.gmra.mxu0 %v353
      %v907 = vpop.f32.mrf.mxu0
      %v908 = vadd.f32 %v803, %v907
      %v909 = vpop.f32.mrf.mxu0
      %910 = vmatprep.mubr.f32.mxu0 %v356
      %911 = vmatmul.mubr.f32.gmra.mxu0 %v355
      %v912 = vpop.f32.mrf.mxu0
      %v913 = vadd.f32 %v808, %v912
      %v914 = vpop.f32.mrf.mxu0
      %915 = vmatprep.mubr.f32.mxu0 %v358
      %916 = vmatmul.mubr.f32.gmra.mxu0 %v357
      %v917 = vpop.f32.mrf.mxu0
      %v918 = vadd.f32 %v813, %v917
      %v919 = vpop.f32.mrf.mxu0
      %920 = vdwg.mxu0
      %v921 = vadd.f32 %v883, %v606
      %v922 = vadd.f32 %v888, %v606
      %v923 = vadd.f32 %v893, %v606
      %v924 = vadd.f32 %v898, %v606
      %v925 = vadd.f32 %v903, %v606
      %v926 = vadd.f32 %v908, %v606
      %v927 = vadd.f32 %v913, %v606
      %v928 = vadd.f32 %v918, %v606
      %v929 = vmax.f32 %v921, 0.0
      %v930 = vmax.f32 %v922, 0.0
      %v931 = vmax.f32 %v923, 0.0
      %v932 = vmax.f32 %v924, 0.0
      %v933 = vmax.f32 %v925, 0.0
      %v934 = vmax.f32 %v926, 0.0
      %v935 = vmax.f32 %v927, 0.0
      %v936 = vmax.f32 %v928, 0.0
      %vm937 = vcmask 261120
      %938 = vst.msk [vmem:[#allocation2] sm:$0xff] %vm937, %v616
      %939 = vst.msk [vmem:[#allocation2 + $0x8] sm:$0xff] %vm937, %v617
      %940 = vst.msk [vmem:[#allocation2 + $0x10] sm:$0xff] %vm937, %v618
      %941 = vst.msk [vmem:[#allocation2 + $0x18] sm:$0xff] %vm937, %v619
      %942 = vst.msk [vmem:[#allocation2 + $0x20] sm:$0xff] %vm937, %v620
      %943 = vst.msk [vmem:[#allocation2 + $0x28] sm:$0xff] %vm937, %v621
      %944 = vst.msk [vmem:[#allocation2 + $0x30] sm:$0xff] %vm937, %v622
      %945 = vst.msk [vmem:[#allocation2 + $0x38] sm:$0xff] %vm937, %v623
      %954 = vrot.lane.b32.xlu0 %v929, 32
      %v955 = vpop.permute.xlu0 %954
      %956 = vrot.lane.b32.xlu0 %v930, 32
      %v957 = vpop.permute.xlu0 %956
      %958 = vrot.lane.b32.xlu0 %v931, 32
      %v959 = vpop.permute.xlu0 %958
      %960 = vrot.lane.b32.xlu0 %v932, 32
      %v961 = vpop.permute.xlu0 %960
      %962 = vrot.lane.b32.xlu0 %v933, 32
      %v963 = vpop.permute.xlu0 %962
      %964 = vrot.lane.b32.xlu0 %v934, 32
      %v965 = vpop.permute.xlu0 %964
      %966 = vrot.lane.b32.xlu0 %v935, 32
      %v967 = vpop.permute.xlu0 %966
      %968 = vrot.lane.b32.xlu0 %v936, 32
      %v969 = vpop.permute.xlu0 %968
      %vm978 = vcmask 523520
      %979 = vst.msk [vmem:[#allocation2] sm:$0xff] %vm978, %v955
      %980 = vst.msk [vmem:[#allocation2 + $0x8] sm:$0xff] %vm978, %v957
      %981 = vst.msk [vmem:[#allocation2 + $0x10] sm:$0xff] %vm978, %v959
      %982 = vst.msk [vmem:[#allocation2 + $0x18] sm:$0xff] %vm978, %v961
      %983 = vst.msk [vmem:[#allocation2 + $0x20] sm:$0xff] %vm978, %v963
      %984 = vst.msk [vmem:[#allocation2 + $0x28] sm:$0xff] %vm978, %v965
      %985 = vst.msk [vmem:[#allocation2 + $0x30] sm:$0xff] %vm978, %v967
      %986 = vst.msk [vmem:[#allocation2 + $0x38] sm:$0xff] %vm978, %v969
      %995 = vrot.lane.b32.xlu0 %v616, 64
      %v996 = vpop.permute.xlu0 %995
      %997 = vrot.lane.b32.xlu0 %v617, 64
      %v998 = vpop.permute.xlu0 %997
      %999 = vrot.lane.b32.xlu0 %v618, 64
      %v1000 = vpop.permute.xlu0 %999
      %1001 = vrot.lane.b32.xlu0 %v619, 64
      %v1002 = vpop.permute.xlu0 %1001
      %1003 = vrot.lane.b32.xlu0 %v620, 64
      %v1004 = vpop.permute.xlu0 %1003
      %1005 = vrot.lane.b32.xlu0 %v621, 64
      %v1006 = vpop.permute.xlu0 %1005
      %1007 = vrot.lane.b32.xlu0 %v622, 64
      %v1008 = vpop.permute.xlu0 %1007
      %1009 = vrot.lane.b32.xlu0 %v623, 64
      %v1010 = vpop.permute.xlu0 %1009
      %vm1019 = vcmask 785921
      %1020 = vst.msk [vmem:[#allocation2 - $0x1] sm:$0xfe] %vm1019, %v996
      %vm1021 = vcmask 785920
      %1022 = vst.msk [vmem:[#allocation2 + $0x7] sm:$0xff] %vm1021, %v998
      %1023 = vst.msk [vmem:[#allocation2 + $0xf] sm:$0xff] %vm1021, %v1000
      %1024 = vst.msk [vmem:[#allocation2 + $0x17] sm:$0xff] %vm1021, %v1002
      %1025 = vst.msk [vmem:[#allocation2 + $0x1f] sm:$0xff] %vm1021, %v1004
      %1026 = vst.msk [vmem:[#allocation2 + $0x27] sm:$0xff] %vm1021, %v1006
      %1027 = vst.msk [vmem:[#allocation2 + $0x2f] sm:$0xff] %vm1021, %v1008
      %1028 = vst.msk [vmem:[#allocation2 + $0x37] sm:$0xff] %vm1021, %v1010
      %1029 = vrot.lane.b32.xlu0 %v929, 96
      %v1030 = vpop.permute.xlu0 %1029
      %1031 = vrot.lane.b32.xlu0 %v930, 96
      %v1032 = vpop.permute.xlu0 %1031
      %1033 = vrot.lane.b32.xlu0 %v931, 96
      %v1034 = vpop.permute.xlu0 %1033
      %1035 = vrot.lane.b32.xlu0 %v932, 96
      %v1036 = vpop.permute.xlu0 %1035
      %1037 = vrot.lane.b32.xlu0 %v933, 96
      %v1038 = vpop.permute.xlu0 %1037
      %1039 = vrot.lane.b32.xlu0 %v934, 96
      %v1040 = vpop.permute.xlu0 %1039
      %1041 = vrot.lane.b32.xlu0 %v935, 96
      %v1042 = vpop.permute.xlu0 %1041
      %1043 = vrot.lane.b32.xlu0 %v936, 96
      %v1044 = vpop.permute.xlu0 %1043
      %vm1053 = vcmask 1048321
      %1054 = vst.msk [vmem:[#allocation2 - $0x1] sm:$0xfe] %vm1053, %v1030
      %vm1055 = vcmask 1048320
      %1056 = vst.msk [vmem:[#allocation2 + $0x7] sm:$0xff] %vm1055, %v1032
      %1057 = vst.msk [vmem:[#allocation2 + $0xf] sm:$0xff] %vm1055, %v1034
      %1058 = vst.msk [vmem:[#allocation2 + $0x17] sm:$0xff] %vm1055, %v1036
      %1059 = vst.msk [vmem:[#allocation2 + $0x1f] sm:$0xff] %vm1055, %v1038
      %1060 = vst.msk [vmem:[#allocation2 + $0x27] sm:$0xff] %vm1055, %v1040
      %1061 = vst.msk [vmem:[#allocation2 + $0x2f] sm:$0xff] %vm1055, %v1042
      %1062 = vst.msk [vmem:[#allocation2 + $0x37] sm:$0xff] %vm1055, %v1044
      %s1063 = scalar_lea.vmem %s273, 288
      %v1064 = vld [vmem:[%s1063] sm:$0xff]
      %v1065 = vld [vmem:[%s1063 + $0x8] sm:$0xff]
      %v1066 = vld [vmem:[%s1063 + $0x10] sm:$0xff]
      %v1067 = vld [vmem:[%s1063 + $0x18] sm:$0xff]
      %v1068 = vld [vmem:[%s1063 + $0x20] sm:$0xff]
      %v1069 = vld [vmem:[%s1063 + $0x28] sm:$0xff]
      %v1070 = vld [vmem:[%s1063 + $0x30] sm:$0xff]
      %v1071 = vld [vmem:[%s1063 + $0x38] sm:$0xff]
      %v1072 = vld [vmem:[%s1063 + $0x40] sm:$0xff]
      %v1073 = vld [vmem:[%s1063 + $0x48] sm:$0xff]
      %v1074 = vld [vmem:[%s1063 + $0x50] sm:$0xff]
      %v1075 = vld [vmem:[%s1063 + $0x58] sm:$0xff]
      %v1076 = vld [vmem:[%s1063 + $0x60] sm:$0xff]
      %v1077 = vld [vmem:[%s1063 + $0x68] sm:$0xff]
      %v1078 = vld [vmem:[%s1063 + $0x70] sm:$0xff]
      %v1079 = vld [vmem:[%s1063 + $0x78] sm:$0xff]
      %v1080 = vld [vmem:[%s1] sm:$0xff]
      %v1081 = vld [vmem:[%s1 + $0x8] sm:$0xff]
      %v1082 = vld [vmem:[%s1 + $0x10] sm:$0xff]
      %v1083 = vld [vmem:[%s1 + $0x18] sm:$0xff]
      %v1084 = vld [vmem:[%s1 + $0x20] sm:$0xff]
      %v1085 = vld [vmem:[%s1 + $0x28] sm:$0xff]
      %v1086 = vld [vmem:[%s1 + $0x30] sm:$0xff]
      %v1087 = vld [vmem:[%s1 + $0x38] sm:$0xff]
      %v1088 = vld [vmem:[%s1 + $0x40] sm:$0xff]
      %v1089 = vld [vmem:[%s1 + $0x48] sm:$0xff]
      %v1090 = vld [vmem:[%s1 + $0x50] sm:$0xff]
      %v1091 = vld [vmem:[%s1 + $0x58] sm:$0xff]
      %v1092 = vld [vmem:[%s1 + $0x60] sm:$0xff]
      %v1093 = vld [vmem:[%s1 + $0x68] sm:$0xff]
      %v1094 = vld [vmem:[%s1 + $0x70] sm:$0xff]
      %v1095 = vld [vmem:[%s1 + $0x78] sm:$0xff]
      %v1096 = vld [vmem:[%s1 + $0x80] sm:$0xff]
      %v1097 = vld [vmem:[%s1 + $0x88] sm:$0xff]
      %v1098 = vld [vmem:[%s1 + $0x90] sm:$0xff]
      %v1099 = vld [vmem:[%s1 + $0x98] sm:$0xff]
      %v1100 = vld [vmem:[%s1 + $0xa0] sm:$0xff]
      %v1101 = vld [vmem:[%s1 + $0xa8] sm:$0xff]
      %v1102 = vld [vmem:[%s1 + $0xb0] sm:$0xff]
      %v1103 = vld [vmem:[%s1 + $0xb8] sm:$0xff]
      %v1104 = vld [vmem:[%s1 + $0xc0] sm:$0xff]
      %v1105 = vld [vmem:[%s1 + $0xc8] sm:$0xff]
      %v1106 = vld [vmem:[%s1 + $0xd0] sm:$0xff]
      %v1107 = vld [vmem:[%s1 + $0xd8] sm:$0xff]
      %v1108 = vld [vmem:[%s1 + $0xe0] sm:$0xff]
      %v1109 = vld [vmem:[%s1 + $0xe8] sm:$0xff]
      %v1110 = vld [vmem:[%s1 + $0xf0] sm:$0xff]
      %v1111 = vld [vmem:[%s1 + $0xf8] sm:$0xff]
      %s1112 = scalar_lea.vmem %s273, 432
      %v1113 = vld [vmem:[%s1112] sm:$0xff]
      %v1114 = vld [vmem:[%s1112 + $0x8] sm:$0xff]
      %v1115 = vld [vmem:[%s1112 + $0x10] sm:$0xff]
      %v1116 = vld [vmem:[%s1112 + $0x18] sm:$0xff]
      %v1117 = vld [vmem:[%s1112 + $0x20] sm:$0xff]
      %v1118 = vld [vmem:[%s1112 + $0x28] sm:$0xff]
      %v1119 = vld [vmem:[%s1112 + $0x30] sm:$0xff]
      %v1120 = vld [vmem:[%s1112 + $0x38] sm:$0xff]
      %v1121 = vld [vmem:[%s1112 + $0x40] sm:$0xff]
      %v1122 = vld [vmem:[%s1112 + $0x48] sm:$0xff]
      %v1123 = vld [vmem:[%s1112 + $0x50] sm:$0xff]
      %v1124 = vld [vmem:[%s1112 + $0x58] sm:$0xff]
      %v1125 = vld [vmem:[%s1112 + $0x60] sm:$0xff]
      %v1126 = vld [vmem:[%s1112 + $0x68] sm:$0xff]
      %v1127 = vld [vmem:[%s1112 + $0x70] sm:$0xff]
      %v1128 = vld [vmem:[%s1112 + $0x78] sm:$0xff]
      %v1129 = vld [vmem:[%s359] sm:$0xff]
      %v1130 = vld [vmem:[%s359 + $0x8] sm:$0xff]
      %v1131 = vld [vmem:[%s359 + $0x10] sm:$0xff]
      %v1132 = vld [vmem:[%s359 + $0x18] sm:$0xff]
      %v1133 = vld [vmem:[%s359 + $0x20] sm:$0xff]
      %v1134 = vld [vmem:[%s359 + $0x28] sm:$0xff]
      %v1135 = vld [vmem:[%s359 + $0x30] sm:$0xff]
      %v1136 = vld [vmem:[%s359 + $0x38] sm:$0xff]
      %v1137 = vld [vmem:[%s359 + $0x40] sm:$0xff]
      %v1138 = vld [vmem:[%s359 + $0x48] sm:$0xff]
      %v1139 = vld [vmem:[%s359 + $0x50] sm:$0xff]
      %v1140 = vld [vmem:[%s359 + $0x58] sm:$0xff]
      %v1141 = vld [vmem:[%s359 + $0x60] sm:$0xff]
      %v1142 = vld [vmem:[%s359 + $0x68] sm:$0xff]
      %v1143 = vld [vmem:[%s359 + $0x70] sm:$0xff]
      %v1144 = vld [vmem:[%s359 + $0x78] sm:$0xff]
      %v1145 = vld [vmem:[%s359 + $0x80] sm:$0xff]
      %v1146 = vld [vmem:[%s359 + $0x88] sm:$0xff]
      %v1147 = vld [vmem:[%s359 + $0x90] sm:$0xff]
      %v1148 = vld [vmem:[%s359 + $0x98] sm:$0xff]
      %v1149 = vld [vmem:[%s359 + $0xa0] sm:$0xff]
      %v1150 = vld [vmem:[%s359 + $0xa8] sm:$0xff]
      %v1151 = vld [vmem:[%s359 + $0xb0] sm:$0xff]
      %v1152 = vld [vmem:[%s359 + $0xb8] sm:$0xff]
      %v1153 = vld [vmem:[%s359 + $0xc0] sm:$0xff]
      %v1154 = vld [vmem:[%s359 + $0xc8] sm:$0xff]
      %v1155 = vld [vmem:[%s359 + $0xd0] sm:$0xff]
      %v1156 = vld [vmem:[%s359 + $0xd8] sm:$0xff]
      %v1157 = vld [vmem:[%s359 + $0xe0] sm:$0xff]
      %v1158 = vld [vmem:[%s359 + $0xe8] sm:$0xff]
      %v1159 = vld [vmem:[%s359 + $0xf0] sm:$0xff]
      %v1160 = vld [vmem:[%s359 + $0xf8] sm:$0xff]
      %1161 = vmatprep.subr.mxu0 0.0
      %1162 = vmatpush1.msra.mxu0 %v1144
      %1163 = vmatprep.subr.mxu0 0.0
      %1164 = vmatpush1.msra.mxu0 %v1143
      %1165 = vmatprep.subr.mxu0 0.0
      %1166 = vmatpush1.msra.mxu0 %v1142
      %1167 = vmatprep.subr.mxu0 0.0
      %1168 = vmatpush1.msra.mxu0 %v1141
      %1169 = vmatprep.subr.mxu0 0.0
      %1170 = vmatpush1.msra.mxu0 %v1140
      %1171 = vmatprep.subr.mxu0 0.0
      %1172 = vmatpush1.msra.mxu0 %v1139
      %1173 = vmatprep.subr.mxu0 0.0
      %1174 = vmatpush1.msra.mxu0 %v1138
      %1175 = vmatprep.subr.mxu0 0.0
      %1176 = vmatpush1.msra.mxu0 %v1137
      %1177 = vmatprep.subr.mxu0 0.0
      %1178 = vmatpush1.msra.mxu0 %v1136
      %1179 = vmatprep.subr.mxu0 0.0
      %1180 = vmatpush1.msra.mxu0 %v1135
      %1181 = vmatprep.subr.mxu0 0.0
      %1182 = vmatpush1.msra.mxu0 %v1134
      %1183 = vmatprep.subr.mxu0 0.0
      %1184 = vmatpush1.msra.mxu0 %v1133
      %1185 = vmatprep.subr.mxu0 0.0
      %1186 = vmatpush1.msra.mxu0 %v1132
      %1187 = vmatprep.subr.mxu0 0.0
      %1188 = vmatpush1.msra.mxu0 %v1131
      %1189 = vmatprep.subr.mxu0 0.0
      %1190 = vmatpush1.msra.mxu0 %v1130
      %1191 = vmatprep.subr.mxu0 0.0
      %1192 = vmatpush1.msra.mxu0 %v1129
      %1193 = vmatprep.subr.mxu0 0.0
      %1194 = vmatpush2.msra.mxu0 %v1160
      %1195 = vmatprep.subr.mxu0 0.0
      %1196 = vmatpush2.msra.mxu0 %v1159
      %1197 = vmatprep.subr.mxu0 0.0
      %1198 = vmatpush2.msra.mxu0 %v1158
      %1199 = vmatprep.subr.mxu0 0.0
      %1200 = vmatpush2.msra.mxu0 %v1157
      %1201 = vmatprep.subr.mxu0 0.0
      %1202 = vmatpush2.msra.mxu0 %v1156
      %1203 = vmatprep.subr.mxu0 0.0
      %1204 = vmatpush2.msra.mxu0 %v1155
      %1205 = vmatprep.subr.mxu0 0.0
      %1206 = vmatpush2.msra.mxu0 %v1154
      %1207 = vmatprep.subr.mxu0 0.0
      %1208 = vmatpush2.msra.mxu0 %v1153
      %1209 = vmatprep.subr.mxu0 0.0
      %1210 = vmatpush2.msra.mxu0 %v1152
      %1211 = vmatprep.subr.mxu0 0.0
      %1212 = vmatpush2.msra.mxu0 %v1151
      %1213 = vmatprep.subr.mxu0 0.0
      %1214 = vmatpush2.msra.mxu0 %v1150
      %1215 = vmatprep.subr.mxu0 0.0
      %1216 = vmatpush2.msra.mxu0 %v1149
      %1217 = vmatprep.subr.mxu0 0.0
      %1218 = vmatpush2.msra.mxu0 %v1148
      %1219 = vmatprep.subr.mxu0 0.0
      %1220 = vmatpush2.msra.mxu0 %v1147
      %1221 = vmatprep.subr.mxu0 0.0
      %1222 = vmatpush2.msra.mxu0 %v1146
      %1223 = vmatprep.subr.mxu0 0.0
      %1224 = vmatpush2.msra.mxu0 %v1145
      %1225 = vmatprep.mubr.f32.mxu0 %v1114
      %1226 = vmatmul.mubr.f32.gmra.mxu0 %v1113
      %v1227 = vpop.f32.mrf.mxu0
      %v1228 = vadd.f32 0.0, %v1227
      %v1229 = vpop.f32.mrf.mxu0
      %1230 = vmatprep.mubr.f32.mxu0 %v1116
      %1231 = vmatmul.mubr.f32.gmra.mxu0 %v1115
      %v1232 = vpop.f32.mrf.mxu0
      %v1233 = vadd.f32 0.0, %v1232
      %v1234 = vpop.f32.mrf.mxu0
      %1235 = vmatprep.mubr.f32.mxu0 %v1118
      %1236 = vmatmul.mubr.f32.gmra.mxu0 %v1117
      %v1237 = vpop.f32.mrf.mxu0
      %v1238 = vadd.f32 0.0, %v1237
      %v1239 = vpop.f32.mrf.mxu0
      %1240 = vmatprep.mubr.f32.mxu0 %v1120
      %1241 = vmatmul.mubr.f32.gmra.mxu0 %v1119
      %v1242 = vpop.f32.mrf.mxu0
      %v1243 = vadd.f32 0.0, %v1242
      %v1244 = vpop.f32.mrf.mxu0
      %1245 = vmatprep.mubr.f32.mxu0 %v1122
      %1246 = vmatmul.mubr.f32.gmra.mxu0 %v1121
      %v1247 = vpop.f32.mrf.mxu0
      %v1248 = vadd.f32 0.0, %v1247
      %v1249 = vpop.f32.mrf.mxu0
      %1250 = vmatprep.mubr.f32.mxu0 %v1124
      %1251 = vmatmul.mubr.f32.gmra.mxu0 %v1123
      %v1252 = vpop.f32.mrf.mxu0
      %v1253 = vadd.f32 0.0, %v1252
      %v1254 = vpop.f32.mrf.mxu0
      %1255 = vmatprep.mubr.f32.mxu0 %v1126
      %1256 = vmatmul.mubr.f32.gmra.mxu0 %v1125
      %v1257 = vpop.f32.mrf.mxu0
      %v1258 = vadd.f32 0.0, %v1257
      %v1259 = vpop.f32.mrf.mxu0
      %1260 = vmatprep.mubr.f32.mxu0 %v1128
      %1261 = vmatmul.mubr.f32.gmra.mxu0 %v1127
      %v1262 = vpop.f32.mrf.mxu0
      %v1263 = vadd.f32 0.0, %v1262
      %v1264 = vpop.f32.mrf.mxu0
      %1265 = vdwg.mxu0
      %1266 = vmatprep.subr.mxu0 0.0
      %1267 = vmatpush1.msra.mxu0 %v1095
      %1268 = vmatprep.subr.mxu0 0.0
      %1269 = vmatpush1.msra.mxu0 %v1094
      %1270 = vmatprep.subr.mxu0 0.0
      %1271 = vmatpush1.msra.mxu0 %v1093
      %1272 = vmatprep.subr.mxu0 0.0
      %1273 = vmatpush1.msra.mxu0 %v1092
      %1274 = vmatprep.subr.mxu0 0.0
      %1275 = vmatpush1.msra.mxu0 %v1091
      %1276 = vmatprep.subr.mxu0 0.0
      %1277 = vmatpush1.msra.mxu0 %v1090
      %1278 = vmatprep.subr.mxu0 0.0
      %1279 = vmatpush1.msra.mxu0 %v1089
      %1280 = vmatprep.subr.mxu0 0.0
      %1281 = vmatpush1.msra.mxu0 %v1088
      %1282 = vmatprep.subr.mxu0 0.0
      %1283 = vmatpush1.msra.mxu0 %v1087
      %1284 = vmatprep.subr.mxu0 0.0
      %1285 = vmatpush1.msra.mxu0 %v1086
      %1286 = vmatprep.subr.mxu0 0.0
      %1287 = vmatpush1.msra.mxu0 %v1085
      %1288 = vmatprep.subr.mxu0 0.0
      %1289 = vmatpush1.msra.mxu0 %v1084
      %1290 = vmatprep.subr.mxu0 0.0
      %1291 = vmatpush1.msra.mxu0 %v1083
      %1292 = vmatprep.subr.mxu0 0.0
      %1293 = vmatpush1.msra.mxu0 %v1082
      %1294 = vmatprep.subr.mxu0 0.0
      %1295 = vmatpush1.msra.mxu0 %v1081
      %1296 = vmatprep.subr.mxu0 0.0
      %1297 = vmatpush1.msra.mxu0 %v1080
      %1298 = vmatprep.subr.mxu0 0.0
      %1299 = vmatpush2.msra.mxu0 %v1111
      %1300 = vmatprep.subr.mxu0 0.0
      %1301 = vmatpush2.msra.mxu0 %v1110
      %1302 = vmatprep.subr.mxu0 0.0
      %1303 = vmatpush2.msra.mxu0 %v1109
      %1304 = vmatprep.subr.mxu0 0.0
      %1305 = vmatpush2.msra.mxu0 %v1108
      %1306 = vmatprep.subr.mxu0 0.0
      %1307 = vmatpush2.msra.mxu0 %v1107
      %1308 = vmatprep.subr.mxu0 0.0
      %1309 = vmatpush2.msra.mxu0 %v1106
      %1310 = vmatprep.subr.mxu0 0.0
      %1311 = vmatpush2.msra.mxu0 %v1105
      %1312 = vmatprep.subr.mxu0 0.0
      %1313 = vmatpush2.msra.mxu0 %v1104
      %1314 = vmatprep.subr.mxu0 0.0
      %1315 = vmatpush2.msra.mxu0 %v1103
      %1316 = vmatprep.subr.mxu0 0.0
      %1317 = vmatpush2.msra.mxu0 %v1102
      %1318 = vmatprep.subr.mxu0 0.0
      %1319 = vmatpush2.msra.mxu0 %v1101
      %1320 = vmatprep.subr.mxu0 0.0
      %1321 = vmatpush2.msra.mxu0 %v1100
      %1322 = vmatprep.subr.mxu0 0.0
      %1323 = vmatpush2.msra.mxu0 %v1099
      %1324 = vmatprep.subr.mxu0 0.0
      %1325 = vmatpush2.msra.mxu0 %v1098
      %1326 = vmatprep.subr.mxu0 0.0
      %1327 = vmatpush2.msra.mxu0 %v1097
      %1328 = vmatprep.subr.mxu0 0.0
      %1329 = vmatpush2.msra.mxu0 %v1096
      %1330 = vmatprep.mubr.f32.mxu0 %v1065
      %1331 = vmatmul.mubr.f32.gmra.mxu0 %v1064
      %v1332 = vpop.f32.mrf.mxu0
      %v1333 = vadd.f32 %v1228, %v1332
      %v1334 = vpop.f32.mrf.mxu0
      %1335 = vmatprep.mubr.f32.mxu0 %v1067
      %1336 = vmatmul.mubr.f32.gmra.mxu0 %v1066
      %v1337 = vpop.f32.mrf.mxu0
      %v1338 = vadd.f32 %v1233, %v1337
      %v1339 = vpop.f32.mrf.mxu0
      %1340 = vmatprep.mubr.f32.mxu0 %v1069
      %1341 = vmatmul.mubr.f32.gmra.mxu0 %v1068
      %v1342 = vpop.f32.mrf.mxu0
      %v1343 = vadd.f32 %v1238, %v1342
      %v1344 = vpop.f32.mrf.mxu0
      %1345 = vmatprep.mubr.f32.mxu0 %v1071
      %1346 = vmatmul.mubr.f32.gmra.mxu0 %v1070
      %v1347 = vpop.f32.mrf.mxu0
      %v1348 = vadd.f32 %v1243, %v1347
      %v1349 = vpop.f32.mrf.mxu0
      %1350 = vmatprep.mubr.f32.mxu0 %v1073
      %1351 = vmatmul.mubr.f32.gmra.mxu0 %v1072
      %v1352 = vpop.f32.mrf.mxu0
      %v1353 = vadd.f32 %v1248, %v1352
      %v1354 = vpop.f32.mrf.mxu0
      %1355 = vmatprep.mubr.f32.mxu0 %v1075
      %1356 = vmatmul.mubr.f32.gmra.mxu0 %v1074
      %v1357 = vpop.f32.mrf.mxu0
      %v1358 = vadd.f32 %v1253, %v1357
      %v1359 = vpop.f32.mrf.mxu0
      %1360 = vmatprep.mubr.f32.mxu0 %v1077
      %1361 = vmatmul.mubr.f32.gmra.mxu0 %v1076
      %v1362 = vpop.f32.mrf.mxu0
      %v1363 = vadd.f32 %v1258, %v1362
      %v1364 = vpop.f32.mrf.mxu0
      %1365 = vmatprep.mubr.f32.mxu0 %v1079
      %1366 = vmatmul.mubr.f32.gmra.mxu0 %v1078
      %v1367 = vpop.f32.mrf.mxu0
      %v1368 = vadd.f32 %v1263, %v1367
      %v1369 = vpop.f32.mrf.mxu0
      %1370 = vdwg.mxu0
      %v1371 = vadd.f32 %v1333, %v606
      %v1372 = vadd.f32 %v1338, %v606
      %v1373 = vadd.f32 %v1343, %v606
      %v1374 = vadd.f32 %v1348, %v606
      %v1375 = vadd.f32 %v1353, %v606
      %v1376 = vadd.f32 %v1358, %v606
      %v1377 = vadd.f32 %v1363, %v606
      %v1378 = vadd.f32 %v1368, %v606
      %v1379 = vmax.f32 %v1371, 0.0
      %v1380 = vmax.f32 %v1372, 0.0
      %v1381 = vmax.f32 %v1373, 0.0
      %v1382 = vmax.f32 %v1374, 0.0
      %v1383 = vmax.f32 %v1375, 0.0
      %v1384 = vmax.f32 %v1376, 0.0
      %v1385 = vmax.f32 %v1377, 0.0
      %v1386 = vmax.f32 %v1378, 0.0
      %v1387 = vld [vmem:[%s1063] sm:$0xfe]
      %v1388 = vld [vmem:[%s1063 + $0x8] sm:$0xfe]
      %v1389 = vld [vmem:[%s1063 + $0x10] sm:$0xff]
      %v1390 = vld [vmem:[%s1063 + $0x18] sm:$0xff]
      %v1391 = vld [vmem:[%s1063 + $0x20] sm:$0xff]
      %v1392 = vld [vmem:[%s1063 + $0x28] sm:$0xff]
      %v1393 = vld [vmem:[%s1063 + $0x30] sm:$0xff]
      %v1394 = vld [vmem:[%s1063 + $0x38] sm:$0xff]
      %v1395 = vld [vmem:[%s1063 + $0x40] sm:$0xff]
      %v1396 = vld [vmem:[%s1063 + $0x48] sm:$0xff]
      %v1397 = vld [vmem:[%s1063 + $0x50] sm:$0xff]
      %v1398 = vld [vmem:[%s1063 + $0x58] sm:$0xff]
      %v1399 = vld [vmem:[%s1063 + $0x60] sm:$0xff]
      %v1400 = vld [vmem:[%s1063 + $0x68] sm:$0xff]
      %v1401 = vld [vmem:[%s1063 + $0x70] sm:$0xff]
      %v1402 = vld [vmem:[%s1063 + $0x78] sm:$0xff]
      %v1403 = vld [vmem:[%s1063 + $0x80] sm:$0x1]
      %v1404 = vld [vmem:[%s1063 + $0x88] sm:$0x1]
      %v1423 = vrot.slane %v1387, 1
      %v1424 = vrot.slane %v1389, 1
      %v1425 = vsel %vm660, %v1423, %v1424
      %v1426 = vrot.slane %v1388, 1
      %v1427 = vrot.slane %v1390, 1
      %v1428 = vsel %vm660, %v1426, %v1427
      %v1429 = vrot.slane %v1391, 1
      %v1430 = vsel %vm660, %v1424, %v1429
      %v1431 = vrot.slane %v1392, 1
      %v1432 = vsel %vm660, %v1427, %v1431
      %v1433 = vrot.slane %v1393, 1
      %v1434 = vsel %vm660, %v1429, %v1433
      %v1435 = vrot.slane %v1394, 1
      %v1436 = vsel %vm660, %v1431, %v1435
      %v1437 = vrot.slane %v1395, 1
      %v1438 = vsel %vm660, %v1433, %v1437
      %v1439 = vrot.slane %v1396, 1
      %v1440 = vsel %vm660, %v1435, %v1439
      %v1441 = vrot.slane %v1397, 1
      %v1442 = vsel %vm660, %v1437, %v1441
      %v1443 = vrot.slane %v1398, 1
      %v1444 = vsel %vm660, %v1439, %v1443
      %v1445 = vrot.slane %v1399, 1
      %v1446 = vsel %vm660, %v1441, %v1445
      %v1447 = vrot.slane %v1400, 1
      %v1448 = vsel %vm660, %v1443, %v1447
      %v1449 = vrot.slane %v1401, 1
      %v1450 = vsel %vm660, %v1445, %v1449
      %v1451 = vrot.slane %v1402, 1
      %v1452 = vsel %vm660, %v1447, %v1451
      %v1453 = vrot.slane %v1403, 1
      %v1454 = vsel %vm660, %v1449, %v1453
      %v1455 = vrot.slane %v1404, 1
      %v1456 = vsel %vm660, %v1451, %v1455
      %1473 = vmatprep.subr.mxu0 0.0
      %1474 = vmatpush1.msra.mxu0 %v1144
      %1475 = vmatprep.subr.mxu0 0.0
      %1476 = vmatpush1.msra.mxu0 %v1143
      %1477 = vmatprep.subr.mxu0 0.0
      %1478 = vmatpush1.msra.mxu0 %v1142
      %1479 = vmatprep.subr.mxu0 0.0
      %1480 = vmatpush1.msra.mxu0 %v1141
      %1481 = vmatprep.subr.mxu0 0.0
      %1482 = vmatpush1.msra.mxu0 %v1140
      %1483 = vmatprep.subr.mxu0 0.0
      %1484 = vmatpush1.msra.mxu0 %v1139
      %1485 = vmatprep.subr.mxu0 0.0
      %1486 = vmatpush1.msra.mxu0 %v1138
      %1487 = vmatprep.subr.mxu0 0.0
      %1488 = vmatpush1.msra.mxu0 %v1137
      %1489 = vmatprep.subr.mxu0 0.0
      %1490 = vmatpush1.msra.mxu0 %v1136
      %1491 = vmatprep.subr.mxu0 0.0
      %1492 = vmatpush1.msra.mxu0 %v1135
      %1493 = vmatprep.subr.mxu0 0.0
      %1494 = vmatpush1.msra.mxu0 %v1134
      %1495 = vmatprep.subr.mxu0 0.0
      %1496 = vmatpush1.msra.mxu0 %v1133
      %1497 = vmatprep.subr.mxu0 0.0
      %1498 = vmatpush1.msra.mxu0 %v1132
      %1499 = vmatprep.subr.mxu0 0.0
      %1500 = vmatpush1.msra.mxu0 %v1131
      %1501 = vmatprep.subr.mxu0 0.0
      %1502 = vmatpush1.msra.mxu0 %v1130
      %1503 = vmatprep.subr.mxu0 0.0
      %1504 = vmatpush1.msra.mxu0 %v1129
      %1505 = vmatprep.subr.mxu0 0.0
      %1506 = vmatpush2.msra.mxu0 %v1160
      %1507 = vmatprep.subr.mxu0 0.0
      %1508 = vmatpush2.msra.mxu0 %v1159
      %1509 = vmatprep.subr.mxu0 0.0
      %1510 = vmatpush2.msra.mxu0 %v1158
      %1511 = vmatprep.subr.mxu0 0.0
      %1512 = vmatpush2.msra.mxu0 %v1157
      %1513 = vmatprep.subr.mxu0 0.0
      %1514 = vmatpush2.msra.mxu0 %v1156
      %1515 = vmatprep.subr.mxu0 0.0
      %1516 = vmatpush2.msra.mxu0 %v1155
      %1517 = vmatprep.subr.mxu0 0.0
      %1518 = vmatpush2.msra.mxu0 %v1154
      %1519 = vmatprep.subr.mxu0 0.0
      %1520 = vmatpush2.msra.mxu0 %v1153
      %1521 = vmatprep.subr.mxu0 0.0
      %1522 = vmatpush2.msra.mxu0 %v1152
      %1523 = vmatprep.subr.mxu0 0.0
      %1524 = vmatpush2.msra.mxu0 %v1151
      %1525 = vmatprep.subr.mxu0 0.0
      %1526 = vmatpush2.msra.mxu0 %v1150
      %1527 = vmatprep.subr.mxu0 0.0
      %1528 = vmatpush2.msra.mxu0 %v1149
      %1529 = vmatprep.subr.mxu0 0.0
      %1530 = vmatpush2.msra.mxu0 %v1148
      %1531 = vmatprep.subr.mxu0 0.0
      %1532 = vmatpush2.msra.mxu0 %v1147
      %1533 = vmatprep.subr.mxu0 0.0
      %1534 = vmatpush2.msra.mxu0 %v1146
      %1535 = vmatprep.subr.mxu0 0.0
      %1536 = vmatpush2.msra.mxu0 %v1145
      %1537 = vmatprep.mubr.f32.mxu0 %v1428
      %1538 = vmatmul.mubr.f32.gmra.mxu0 %v1425
      %v1539 = vpop.f32.mrf.mxu0
      %v1540 = vadd.f32 0.0, %v1539
      %v1541 = vpop.f32.mrf.mxu0
      %1542 = vmatprep.mubr.f32.mxu0 %v1432
      %1543 = vmatmul.mubr.f32.gmra.mxu0 %v1430
      %v1544 = vpop.f32.mrf.mxu0
      %v1545 = vadd.f32 0.0, %v1544
      %v1546 = vpop.f32.mrf.mxu0
      %1547 = vmatprep.mubr.f32.mxu0 %v1436
      %1548 = vmatmul.mubr.f32.gmra.mxu0 %v1434
      %v1549 = vpop.f32.mrf.mxu0
      %v1550 = vadd.f32 0.0, %v1549
      %v1551 = vpop.f32.mrf.mxu0
      %1552 = vmatprep.mubr.f32.mxu0 %v1440
      %1553 = vmatmul.mubr.f32.gmra.mxu0 %v1438
      %v1554 = vpop.f32.mrf.mxu0
      %v1555 = vadd.f32 0.0, %v1554
      %v1556 = vpop.f32.mrf.mxu0
      %1557 = vmatprep.mubr.f32.mxu0 %v1444
      %1558 = vmatmul.mubr.f32.gmra.mxu0 %v1442
      %v1559 = vpop.f32.mrf.mxu0
      %v1560 = vadd.f32 0.0, %v1559
      %v1561 = vpop.f32.mrf.mxu0
      %1562 = vmatprep.mubr.f32.mxu0 %v1448
      %1563 = vmatmul.mubr.f32.gmra.mxu0 %v1446
      %v1564 = vpop.f32.mrf.mxu0
      %v1565 = vadd.f32 0.0, %v1564
      %v1566 = vpop.f32.mrf.mxu0
      %1567 = vmatprep.mubr.f32.mxu0 %v1452
      %1568 = vmatmul.mubr.f32.gmra.mxu0 %v1450
      %v1569 = vpop.f32.mrf.mxu0
      %v1570 = vadd.f32 0.0, %v1569
      %v1571 = vpop.f32.mrf.mxu0
      %1572 = vmatprep.mubr.f32.mxu0 %v1456
      %1573 = vmatmul.mubr.f32.gmra.mxu0 %v1454
      %v1574 = vpop.f32.mrf.mxu0
      %v1575 = vadd.f32 0.0, %v1574
      %v1576 = vpop.f32.mrf.mxu0
      %1577 = vdwg.mxu0
      %1578 = vmatprep.subr.mxu0 0.0
      %1579 = vmatpush1.msra.mxu0 %v1095
      %1580 = vmatprep.subr.mxu0 0.0
      %1581 = vmatpush1.msra.mxu0 %v1094
      %1582 = vmatprep.subr.mxu0 0.0
      %1583 = vmatpush1.msra.mxu0 %v1093
      %1584 = vmatprep.subr.mxu0 0.0
      %1585 = vmatpush1.msra.mxu0 %v1092
      %1586 = vmatprep.subr.mxu0 0.0
      %1587 = vmatpush1.msra.mxu0 %v1091
      %1588 = vmatprep.subr.mxu0 0.0
      %1589 = vmatpush1.msra.mxu0 %v1090
      %1590 = vmatprep.subr.mxu0 0.0
      %1591 = vmatpush1.msra.mxu0 %v1089
      %1592 = vmatprep.subr.mxu0 0.0
      %1593 = vmatpush1.msra.mxu0 %v1088
      %1594 = vmatprep.subr.mxu0 0.0
      %1595 = vmatpush1.msra.mxu0 %v1087
      %1596 = vmatprep.subr.mxu0 0.0
      %1597 = vmatpush1.msra.mxu0 %v1086
      %1598 = vmatprep.subr.mxu0 0.0
      %1599 = vmatpush1.msra.mxu0 %v1085
      %1600 = vmatprep.subr.mxu0 0.0
      %1601 = vmatpush1.msra.mxu0 %v1084
      %1602 = vmatprep.subr.mxu0 0.0
      %1603 = vmatpush1.msra.mxu0 %v1083
      %1604 = vmatprep.subr.mxu0 0.0
      %1605 = vmatpush1.msra.mxu0 %v1082
      %1606 = vmatprep.subr.mxu0 0.0
      %1607 = vmatpush1.msra.mxu0 %v1081
      %1608 = vmatprep.subr.mxu0 0.0
      %1609 = vmatpush1.msra.mxu0 %v1080
      %1610 = vmatprep.subr.mxu0 0.0
      %1611 = vmatpush2.msra.mxu0 %v1111
      %1612 = vmatprep.subr.mxu0 0.0
      %1613 = vmatpush2.msra.mxu0 %v1110
      %1614 = vmatprep.subr.mxu0 0.0
      %1615 = vmatpush2.msra.mxu0 %v1109
      %1616 = vmatprep.subr.mxu0 0.0
      %1617 = vmatpush2.msra.mxu0 %v1108
      %1618 = vmatprep.subr.mxu0 0.0
      %1619 = vmatpush2.msra.mxu0 %v1107
      %1620 = vmatprep.subr.mxu0 0.0
      %1621 = vmatpush2.msra.mxu0 %v1106
      %1622 = vmatprep.subr.mxu0 0.0
      %1623 = vmatpush2.msra.mxu0 %v1105
      %1624 = vmatprep.subr.mxu0 0.0
      %1625 = vmatpush2.msra.mxu0 %v1104
      %1626 = vmatprep.subr.mxu0 0.0
      %1627 = vmatpush2.msra.mxu0 %v1103
      %1628 = vmatprep.subr.mxu0 0.0
      %1629 = vmatpush2.msra.mxu0 %v1102
      %1630 = vmatprep.subr.mxu0 0.0
      %1631 = vmatpush2.msra.mxu0 %v1101
      %1632 = vmatprep.subr.mxu0 0.0
      %1633 = vmatpush2.msra.mxu0 %v1100
      %1634 = vmatprep.subr.mxu0 0.0
      %1635 = vmatpush2.msra.mxu0 %v1099
      %1636 = vmatprep.subr.mxu0 0.0
      %1637 = vmatpush2.msra.mxu0 %v1098
      %1638 = vmatprep.subr.mxu0 0.0
      %1639 = vmatpush2.msra.mxu0 %v1097
      %1640 = vmatprep.subr.mxu0 0.0
      %1641 = vmatpush2.msra.mxu0 %v1096
      %1642 = vmatprep.mubr.f32.mxu0 %v1114
      %1643 = vmatmul.mubr.f32.gmra.mxu0 %v1113
      %v1644 = vpop.f32.mrf.mxu0
      %v1645 = vadd.f32 %v1540, %v1644
      %v1646 = vpop.f32.mrf.mxu0
      %1647 = vmatprep.mubr.f32.mxu0 %v1116
      %1648 = vmatmul.mubr.f32.gmra.mxu0 %v1115
      %v1649 = vpop.f32.mrf.mxu0
      %v1650 = vadd.f32 %v1545, %v1649
      %v1651 = vpop.f32.mrf.mxu0
      %1652 = vmatprep.mubr.f32.mxu0 %v1118
      %1653 = vmatmul.mubr.f32.gmra.mxu0 %v1117
      %v1654 = vpop.f32.mrf.mxu0
      %v1655 = vadd.f32 %v1550, %v1654
      %v1656 = vpop.f32.mrf.mxu0
      %1657 = vmatprep.mubr.f32.mxu0 %v1120
      %1658 = vmatmul.mubr.f32.gmra.mxu0 %v1119
      %v1659 = vpop.f32.mrf.mxu0
      %v1660 = vadd.f32 %v1555, %v1659
      %v1661 = vpop.f32.mrf.mxu0
      %1662 = vmatprep.mubr.f32.mxu0 %v1122
      %1663 = vmatmul.mubr.f32.gmra.mxu0 %v1121
      %v1664 = vpop.f32.mrf.mxu0
      %v1665 = vadd.f32 %v1560, %v1664
      %v1666 = vpop.f32.mrf.mxu0
      %1667 = vmatprep.mubr.f32.mxu0 %v1124
      %1668 = vmatmul.mubr.f32.gmra.mxu0 %v1123
      %v1669 = vpop.f32.mrf.mxu0
      %v1670 = vadd.f32 %v1565, %v1669
      %v1671 = vpop.f32.mrf.mxu0
      %1672 = vmatprep.mubr.f32.mxu0 %v1126
      %1673 = vmatmul.mubr.f32.gmra.mxu0 %v1125
      %v1674 = vpop.f32.mrf.mxu0
      %v1675 = vadd.f32 %v1570, %v1674
      %v1676 = vpop.f32.mrf.mxu0
      %1677 = vmatprep.mubr.f32.mxu0 %v1128
      %1678 = vmatmul.mubr.f32.gmra.mxu0 %v1127
      %v1679 = vpop.f32.mrf.mxu0
      %v1680 = vadd.f32 %v1575, %v1679
      %v1681 = vpop.f32.mrf.mxu0
      %1682 = vdwg.mxu0
      %v1683 = vadd.f32 %v1645, %v606
      %v1684 = vadd.f32 %v1650, %v606
      %v1685 = vadd.f32 %v1655, %v606
      %v1686 = vadd.f32 %v1660, %v606
      %v1687 = vadd.f32 %v1665, %v606
      %v1688 = vadd.f32 %v1670, %v606
      %v1689 = vadd.f32 %v1675, %v606
      %v1690 = vadd.f32 %v1680, %v606
      %v1691 = vmax.f32 %v1683, 0.0
      %v1692 = vmax.f32 %v1684, 0.0
      %v1693 = vmax.f32 %v1685, 0.0
      %v1694 = vmax.f32 %v1686, 0.0
      %v1695 = vmax.f32 %v1687, 0.0
      %v1696 = vmax.f32 %v1688, 0.0
      %v1697 = vmax.f32 %v1689, 0.0
      %v1698 = vmax.f32 %v1690, 0.0
      %s1699 = scalar_lea.vmem [#allocation2], 64
      %1700 = vst.msk [vmem:[%s1699] sm:$0xff] %vm937, %v1379
      %1701 = vst.msk [vmem:[%s1699 + $0x8] sm:$0xff] %vm937, %v1380
      %1702 = vst.msk [vmem:[%s1699 + $0x10] sm:$0xff] %vm937, %v1381
      %1703 = vst.msk [vmem:[%s1699 + $0x18] sm:$0xff] %vm937, %v1382
      %1704 = vst.msk [vmem:[%s1699 + $0x20] sm:$0xff] %vm937, %v1383
      %1705 = vst.msk [vmem:[%s1699 + $0x28] sm:$0xff] %vm937, %v1384
      %1706 = vst.msk [vmem:[%s1699 + $0x30] sm:$0xff] %vm937, %v1385
      %1707 = vst.msk [vmem:[%s1699 + $0x38] sm:$0xff] %vm937, %v1386
      %1716 = vrot.lane.b32.xlu0 %v1691, 32
      %v1717 = vpop.permute.xlu0 %1716
      %1718 = vrot.lane.b32.xlu0 %v1692, 32
      %v1719 = vpop.permute.xlu0 %1718
      %1720 = vrot.lane.b32.xlu0 %v1693, 32
      %v1721 = vpop.permute.xlu0 %1720
      %1722 = vrot.lane.b32.xlu0 %v1694, 32
      %v1723 = vpop.permute.xlu0 %1722
      %1724 = vrot.lane.b32.xlu0 %v1695, 32
      %v1725 = vpop.permute.xlu0 %1724
      %1726 = vrot.lane.b32.xlu0 %v1696, 32
      %v1727 = vpop.permute.xlu0 %1726
      %1728 = vrot.lane.b32.xlu0 %v1697, 32
      %v1729 = vpop.permute.xlu0 %1728
      %1730 = vrot.lane.b32.xlu0 %v1698, 32
      %v1731 = vpop.permute.xlu0 %1730
      %1740 = vst.msk [vmem:[%s1699] sm:$0xff] %vm978, %v1717
      %1741 = vst.msk [vmem:[%s1699 + $0x8] sm:$0xff] %vm978, %v1719
      %1742 = vst.msk [vmem:[%s1699 + $0x10] sm:$0xff] %vm978, %v1721
      %1743 = vst.msk [vmem:[%s1699 + $0x18] sm:$0xff] %vm978, %v1723
      %1744 = vst.msk [vmem:[%s1699 + $0x20] sm:$0xff] %vm978, %v1725
      %1745 = vst.msk [vmem:[%s1699 + $0x28] sm:$0xff] %vm978, %v1727
      %1746 = vst.msk [vmem:[%s1699 + $0x30] sm:$0xff] %vm978, %v1729
      %1747 = vst.msk [vmem:[%s1699 + $0x38] sm:$0xff] %vm978, %v1731
      %1756 = vrot.lane.b32.xlu0 %v1379, 64
      %v1757 = vpop.permute.xlu0 %1756
      %1758 = vrot.lane.b32.xlu0 %v1380, 64
      %v1759 = vpop.permute.xlu0 %1758
      %1760 = vrot.lane.b32.xlu0 %v1381, 64
      %v1761 = vpop.permute.xlu0 %1760
      %1762 = vrot.lane.b32.xlu0 %v1382, 64
      %v1763 = vpop.permute.xlu0 %1762
      %1764 = vrot.lane.b32.xlu0 %v1383, 64
      %v1765 = vpop.permute.xlu0 %1764
      %1766 = vrot.lane.b32.xlu0 %v1384, 64
      %v1767 = vpop.permute.xlu0 %1766
      %1768 = vrot.lane.b32.xlu0 %v1385, 64
      %v1769 = vpop.permute.xlu0 %1768
      %1770 = vrot.lane.b32.xlu0 %v1386, 64
      %v1771 = vpop.permute.xlu0 %1770
      %1780 = vst.msk [vmem:[%s1699 - $0x1] sm:$0xfe] %vm1019, %v1757
      %1781 = vst.msk [vmem:[%s1699 + $0x7] sm:$0xff] %vm1021, %v1759
      %1782 = vst.msk [vmem:[%s1699 + $0xf] sm:$0xff] %vm1021, %v1761
      %1783 = vst.msk [vmem:[%s1699 + $0x17] sm:$0xff] %vm1021, %v1763
      %1784 = vst.msk [vmem:[%s1699 + $0x1f] sm:$0xff] %vm1021, %v1765
      %1785 = vst.msk [vmem:[%s1699 + $0x27] sm:$0xff] %vm1021, %v1767
      %1786 = vst.msk [vmem:[%s1699 + $0x2f] sm:$0xff] %vm1021, %v1769
      %1787 = vst.msk [vmem:[%s1699 + $0x37] sm:$0xff] %vm1021, %v1771
      %1788 = vrot.lane.b32.xlu0 %v1691, 96
      %v1789 = vpop.permute.xlu0 %1788
      %1790 = vrot.lane.b32.xlu0 %v1692, 96
      %v1791 = vpop.permute.xlu0 %1790
      %1792 = vrot.lane.b32.xlu0 %v1693, 96
      %v1793 = vpop.permute.xlu0 %1792
      %1794 = vrot.lane.b32.xlu0 %v1694, 96
      %v1795 = vpop.permute.xlu0 %1794
      %1796 = vrot.lane.b32.xlu0 %v1695, 96
      %v1797 = vpop.permute.xlu0 %1796
      %1798 = vrot.lane.b32.xlu0 %v1696, 96
      %v1799 = vpop.permute.xlu0 %1798
      %1800 = vrot.lane.b32.xlu0 %v1697, 96
      %v1801 = vpop.permute.xlu0 %1800
      %1802 = vrot.lane.b32.xlu0 %v1698, 96
      %v1803 = vpop.permute.xlu0 %1802
      %1812 = vst.msk [vmem:[%s1699 - $0x1] sm:$0xfe] %vm1053, %v1789
      %1813 = vst.msk [vmem:[%s1699 + $0x7] sm:$0xff] %vm1055, %v1791
      %1814 = vst.msk [vmem:[%s1699 + $0xf] sm:$0xff] %vm1055, %v1793
      %1815 = vst.msk [vmem:[%s1699 + $0x17] sm:$0xff] %vm1055, %v1795
      %1816 = vst.msk [vmem:[%s1699 + $0x1f] sm:$0xff] %vm1055, %v1797
      %1817 = vst.msk [vmem:[%s1699 + $0x27] sm:$0xff] %vm1055, %v1799
      %1818 = vst.msk [vmem:[%s1699 + $0x2f] sm:$0xff] %vm1055, %v1801
      %1819 = vst.msk [vmem:[%s1699 + $0x37] sm:$0xff] %vm1055, %v1803
      %v1820 = vld [vmem:[#allocation2] sm:$0xff]
      %v1821 = vld [vmem:[#allocation2 + $0x8] sm:$0xff]
      %v1822 = vld [vmem:[#allocation2 + $0x10] sm:$0xff]
      %v1823 = vld [vmem:[#allocation2 + $0x18] sm:$0xff]
      %v1824 = vld [vmem:[#allocation2 + $0x20] sm:$0xff]
      %v1825 = vld [vmem:[#allocation2 + $0x28] sm:$0xff]
      %v1826 = vld [vmem:[%s2] sm:$0xff]
      %v1827 = vld [vmem:[%s2 + $0x8] sm:$0xff]
      %v1828 = vld [vmem:[%s2 + $0x10] sm:$0xff]
      %v1829 = vld [vmem:[%s2 + $0x18] sm:$0xff]
      %v1830 = vld [vmem:[%s2 + $0x20] sm:$0xff]
      %v1831 = vld [vmem:[%s2 + $0x28] sm:$0xff]
      %v1832 = vld [vmem:[%s2 + $0x30] sm:$0xff]
      %v1833 = vld [vmem:[%s2 + $0x38] sm:$0xff]
      %v1834 = vld [vmem:[%s2 + $0x40] sm:$0xff]
      %v1835 = vld [vmem:[%s2 + $0x48] sm:$0xff]
      %v1836 = vld [vmem:[%s2 + $0x50] sm:$0xff]
      %v1837 = vld [vmem:[%s2 + $0x58] sm:$0xff]
      %v1838 = vld [vmem:[%s2 + $0x60] sm:$0xff]
      %v1839 = vld [vmem:[%s2 + $0x68] sm:$0xff]
      %v1840 = vld [vmem:[%s2 + $0x70] sm:$0xff]
      %v1841 = vld [vmem:[%s2 + $0x78] sm:$0xff]
      %v1842 = vld [vmem:[%s1699] sm:$0xff]
      %v1843 = vld [vmem:[%s1699 + $0x8] sm:$0xff]
      %v1844 = vld [vmem:[%s1699 + $0x10] sm:$0xff]
      %v1845 = vld [vmem:[%s1699 + $0x18] sm:$0xff]
      %v1846 = vld [vmem:[%s1699 + $0x20] sm:$0xff]
      %v1847 = vld [vmem:[%s1699 + $0x28] sm:$0xff]
      %s1848 = scalar_lea.vmem %s2, 128
      %v1849 = vld [vmem:[%s1848] sm:$0xff]
      %v1850 = vld [vmem:[%s1848 + $0x8] sm:$0xff]
      %v1851 = vld [vmem:[%s1848 + $0x10] sm:$0xff]
      %v1852 = vld [vmem:[%s1848 + $0x18] sm:$0xff]
      %v1853 = vld [vmem:[%s1848 + $0x20] sm:$0xff]
      %v1854 = vld [vmem:[%s1848 + $0x28] sm:$0xff]
      %v1855 = vld [vmem:[%s1848 + $0x30] sm:$0xff]
      %v1856 = vld [vmem:[%s1848 + $0x38] sm:$0xff]
      %v1857 = vld [vmem:[%s1848 + $0x40] sm:$0xff]
      %v1858 = vld [vmem:[%s1848 + $0x48] sm:$0xff]
      %v1859 = vld [vmem:[%s1848 + $0x50] sm:$0xff]
      %v1860 = vld [vmem:[%s1848 + $0x58] sm:$0xff]
      %v1861 = vld [vmem:[%s1848 + $0x60] sm:$0xff]
      %v1862 = vld [vmem:[%s1848 + $0x68] sm:$0xff]
      %v1863 = vld [vmem:[%s1848 + $0x70] sm:$0xff]
      %v1864 = vld [vmem:[%s1848 + $0x78] sm:$0xff]
      %1865 = vmatprep.subr.mxu0 0.0
      %1866 = vmatpush1.msra.mxu0 %v1864
      %1867 = vmatprep.subr.mxu0 0.0
      %1868 = vmatpush1.msra.mxu0 %v1863
      %1869 = vmatprep.subr.mxu0 0.0
      %1870 = vmatpush1.msra.mxu0 %v1862
      %1871 = vmatprep.subr.mxu0 0.0
      %1872 = vmatpush1.msra.mxu0 %v1861
      %1873 = vmatprep.subr.mxu0 0.0
      %1874 = vmatpush1.msra.mxu0 %v1860
      %1875 = vmatprep.subr.mxu0 0.0
      %1876 = vmatpush1.msra.mxu0 %v1859
      %1877 = vmatprep.subr.mxu0 0.0
      %1878 = vmatpush1.msra.mxu0 %v1858
      %1879 = vmatprep.subr.mxu0 0.0
      %1880 = vmatpush1.msra.mxu0 %v1857
      %1881 = vmatprep.subr.mxu0 0.0
      %1882 = vmatpush1.msra.mxu0 %v1856
      %1883 = vmatprep.subr.mxu0 0.0
      %1884 = vmatpush1.msra.mxu0 %v1855
      %1885 = vmatprep.subr.mxu0 0.0
      %1886 = vmatpush1.msra.mxu0 %v1854
      %1887 = vmatprep.subr.mxu0 0.0
      %1888 = vmatpush1.msra.mxu0 %v1853
      %1889 = vmatprep.subr.mxu0 0.0
      %1890 = vmatpush1.msra.mxu0 %v1852
      %1891 = vmatprep.subr.mxu0 0.0
      %1892 = vmatpush1.msra.mxu0 %v1851
      %1893 = vmatprep.subr.mxu0 0.0
      %1894 = vmatpush1.msra.mxu0 %v1850
      %1895 = vmatprep.subr.mxu0 0.0
      %1896 = vmatpush1.msra.mxu0 %v1849
      %1897 = vmatprep.subr.mxu0 0.0
      %1898 = vmatpush2.msra.mxu0 0.0
      %1899 = vmatprep.subr.mxu0 0.0
      %1900 = vmatpush2.msra.mxu0 0.0
      %1901 = vmatprep.subr.mxu0 0.0
      %1902 = vmatpush2.msra.mxu0 0.0
      %1903 = vmatprep.subr.mxu0 0.0
      %1904 = vmatpush2.msra.mxu0 0.0
      %1905 = vmatprep.subr.mxu0 0.0
      %1906 = vmatpush2.msra.mxu0 0.0
      %1907 = vmatprep.subr.mxu0 0.0
      %1908 = vmatpush2.msra.mxu0 0.0
      %1909 = vmatprep.subr.mxu0 0.0
      %1910 = vmatpush2.msra.mxu0 0.0
      %1911 = vmatprep.subr.mxu0 0.0
      %1912 = vmatpush2.msra.mxu0 0.0
      %1913 = vmatprep.subr.mxu0 0.0
      %1914 = vmatpush2.msra.mxu0 0.0
      %1915 = vmatprep.subr.mxu0 0.0
      %1916 = vmatpush2.msra.mxu0 0.0
      %1917 = vmatprep.subr.mxu0 0.0
      %1918 = vmatpush2.msra.mxu0 0.0
      %1919 = vmatprep.subr.mxu0 0.0
      %1920 = vmatpush2.msra.mxu0 0.0
      %1921 = vmatprep.subr.mxu0 0.0
      %1922 = vmatpush2.msra.mxu0 0.0
      %1923 = vmatprep.subr.mxu0 0.0
      %1924 = vmatpush2.msra.mxu0 0.0
      %1925 = vmatprep.subr.mxu0 0.0
      %1926 = vmatpush2.msra.mxu0 0.0
      %1927 = vmatprep.subr.mxu0 0.0
      %1928 = vmatpush2.msra.mxu0 0.0
      %1929 = vmatprep.mubr.f32.mxu0 0.0
      %1930 = vmatmul.mubr.f32.gmra.mxu0 %v1842
      %v1931 = vpop.f32.mrf.mxu0
      %v1932 = vadd.f32 0.0, %v1931
      %v1933 = vpop.f32.mrf.mxu0
      %1934 = vmatprep.mubr.f32.mxu0 0.0
      %1935 = vmatmul.mubr.f32.gmra.mxu0 %v1843
      %v1936 = vpop.f32.mrf.mxu0
      %v1937 = vadd.f32 0.0, %v1936
      %v1938 = vpop.f32.mrf.mxu0
      %1939 = vmatprep.mubr.f32.mxu0 0.0
      %1940 = vmatmul.mubr.f32.gmra.mxu0 %v1844
      %v1941 = vpop.f32.mrf.mxu0
      %v1942 = vadd.f32 0.0, %v1941
      %v1943 = vpop.f32.mrf.mxu0
      %1944 = vmatprep.mubr.f32.mxu0 0.0
      %1945 = vmatmul.mubr.f32.gmra.mxu0 %v1845
      %v1946 = vpop.f32.mrf.mxu0
      %v1947 = vadd.f32 0.0, %v1946
      %v1948 = vpop.f32.mrf.mxu0
      %1949 = vmatprep.mubr.f32.mxu0 0.0
      %1950 = vmatmul.mubr.f32.gmra.mxu0 %v1846
      %v1951 = vpop.f32.mrf.mxu0
      %v1952 = vadd.f32 0.0, %v1951
      %v1953 = vpop.f32.mrf.mxu0
      %1954 = vmatprep.mubr.f32.mxu0 0.0
      %1955 = vmatmul.mubr.f32.gmra.mxu0 %v1847
      %v1956 = vpop.f32.mrf.mxu0
      %v1957 = vadd.f32 0.0, %v1956
      %v1958 = vpop.f32.mrf.mxu0
      %1959 = vdwg.mxu0
      %1960 = vmatprep.subr.mxu0 0.0
      %1961 = vmatpush1.msra.mxu0 %v1841
      %1962 = vmatprep.subr.mxu0 0.0
      %1963 = vmatpush1.msra.mxu0 %v1840
      %1964 = vmatprep.subr.mxu0 0.0
      %1965 = vmatpush1.msra.mxu0 %v1839
      %1966 = vmatprep.subr.mxu0 0.0
      %1967 = vmatpush1.msra.mxu0 %v1838
      %1968 = vmatprep.subr.mxu0 0.0
      %1969 = vmatpush1.msra.mxu0 %v1837
      %1970 = vmatprep.subr.mxu0 0.0
      %1971 = vmatpush1.msra.mxu0 %v1836
      %1972 = vmatprep.subr.mxu0 0.0
      %1973 = vmatpush1.msra.mxu0 %v1835
      %1974 = vmatprep.subr.mxu0 0.0
      %1975 = vmatpush1.msra.mxu0 %v1834
      %1976 = vmatprep.subr.mxu0 0.0
      %1977 = vmatpush1.msra.mxu0 %v1833
      %1978 = vmatprep.subr.mxu0 0.0
      %1979 = vmatpush1.msra.mxu0 %v1832
      %1980 = vmatprep.subr.mxu0 0.0
      %1981 = vmatpush1.msra.mxu0 %v1831
      %1982 = vmatprep.subr.mxu0 0.0
      %1983 = vmatpush1.msra.mxu0 %v1830
      %1984 = vmatprep.subr.mxu0 0.0
      %1985 = vmatpush1.msra.mxu0 %v1829
      %1986 = vmatprep.subr.mxu0 0.0
      %1987 = vmatpush1.msra.mxu0 %v1828
      %1988 = vmatprep.subr.mxu0 0.0
      %1989 = vmatpush1.msra.mxu0 %v1827
      %1990 = vmatprep.subr.mxu0 0.0
      %1991 = vmatpush1.msra.mxu0 %v1826
      %1992 = vmatprep.subr.mxu0 0.0
      %1993 = vmatpush2.msra.mxu0 0.0
      %1994 = vmatprep.subr.mxu0 0.0
      %1995 = vmatpush2.msra.mxu0 0.0
      %1996 = vmatprep.subr.mxu0 0.0
      %1997 = vmatpush2.msra.mxu0 0.0
      %1998 = vmatprep.subr.mxu0 0.0
      %1999 = vmatpush2.msra.mxu0 0.0
      %2000 = vmatprep.subr.mxu0 0.0
      %2001 = vmatpush2.msra.mxu0 0.0
      %2002 = vmatprep.subr.mxu0 0.0
      %2003 = vmatpush2.msra.mxu0 0.0
      %2004 = vmatprep.subr.mxu0 0.0
      %2005 = vmatpush2.msra.mxu0 0.0
      %2006 = vmatprep.subr.mxu0 0.0
      %2007 = vmatpush2.msra.mxu0 0.0
      %2008 = vmatprep.subr.mxu0 0.0
      %2009 = vmatpush2.msra.mxu0 0.0
      %2010 = vmatprep.subr.mxu0 0.0
      %2011 = vmatpush2.msra.mxu0 0.0
      %2012 = vmatprep.subr.mxu0 0.0
      %2013 = vmatpush2.msra.mxu0 0.0
      %2014 = vmatprep.subr.mxu0 0.0
      %2015 = vmatpush2.msra.mxu0 0.0
      %2016 = vmatprep.subr.mxu0 0.0
      %2017 = vmatpush2.msra.mxu0 0.0
      %2018 = vmatprep.subr.mxu0 0.0
      %2019 = vmatpush2.msra.mxu0 0.0
      %2020 = vmatprep.subr.mxu0 0.0
      %2021 = vmatpush2.msra.mxu0 0.0
      %2022 = vmatprep.subr.mxu0 0.0
      %2023 = vmatpush2.msra.mxu0 0.0
      %2024 = vmatprep.mubr.f32.mxu0 0.0
      %2025 = vmatmul.mubr.f32.gmra.mxu0 %v1820
      %v2026 = vpop.f32.mrf.mxu0
      %v2027 = vadd.f32 %v1932, %v2026
      %v2028 = vpop.f32.mrf.mxu0
      %2029 = vmatprep.mubr.f32.mxu0 0.0
      %2030 = vmatmul.mubr.f32.gmra.mxu0 %v1821
      %v2031 = vpop.f32.mrf.mxu0
      %v2032 = vadd.f32 %v1937, %v2031
      %v2033 = vpop.f32.mrf.mxu0
      %2034 = vmatprep.mubr.f32.mxu0 0.0
      %2035 = vmatmul.mubr.f32.gmra.mxu0 %v1822
      %v2036 = vpop.f32.mrf.mxu0
      %v2037 = vadd.f32 %v1942, %v2036
      %v2038 = vpop.f32.mrf.mxu0
      %2039 = vmatprep.mubr.f32.mxu0 0.0
      %2040 = vmatmul.mubr.f32.gmra.mxu0 %v1823
      %v2041 = vpop.f32.mrf.mxu0
      %v2042 = vadd.f32 %v1947, %v2041
      %v2043 = vpop.f32.mrf.mxu0
      %2044 = vmatprep.mubr.f32.mxu0 0.0
      %2045 = vmatmul.mubr.f32.gmra.mxu0 %v1824
      %v2046 = vpop.f32.mrf.mxu0
      %v2047 = vadd.f32 %v1952, %v2046
      %v2048 = vpop.f32.mrf.mxu0
      %2049 = vmatprep.mubr.f32.mxu0 0.0
      %2050 = vmatmul.mubr.f32.gmra.mxu0 %v1825
      %v2051 = vpop.f32.mrf.mxu0
      %v2052 = vadd.f32 %v1957, %v2051
      %v2053 = vpop.f32.mrf.mxu0
      %2054 = vdwg.mxu0
      %v2055 = vld [vmem:[#allocation2 + $0x8] sm:$0xff]
      %v2056 = vld [vmem:[#allocation2 + $0x10] sm:$0xff]
      %v2057 = vld [vmem:[#allocation2 + $0x18] sm:$0xff]
      %v2058 = vld [vmem:[#allocation2 + $0x20] sm:$0xff]
      %v2059 = vld [vmem:[#allocation2 + $0x28] sm:$0xff]
      %v2060 = vld [vmem:[#allocation2 + $0x30] sm:$0xff]
      %s2061 = scalar_lea.vmem %s2, 256
      %v2062 = vld [vmem:[%s2061] sm:$0xff]
      %v2063 = vld [vmem:[%s2061 + $0x8] sm:$0xff]
      %v2064 = vld [vmem:[%s2061 + $0x10] sm:$0xff]
      %v2065 = vld [vmem:[%s2061 + $0x18] sm:$0xff]
      %v2066 = vld [vmem:[%s2061 + $0x20] sm:$0xff]
      %v2067 = vld [vmem:[%s2061 + $0x28] sm:$0xff]
      %v2068 = vld [vmem:[%s2061 + $0x30] sm:$0xff]
      %v2069 = vld [vmem:[%s2061 + $0x38] sm:$0xff]
      %v2070 = vld [vmem:[%s2061 + $0x40] sm:$0xff]
      %v2071 = vld [vmem:[%s2061 + $0x48] sm:$0xff]
      %v2072 = vld [vmem:[%s2061 + $0x50] sm:$0xff]
      %v2073 = vld [vmem:[%s2061 + $0x58] sm:$0xff]
      %v2074 = vld [vmem:[%s2061 + $0x60] sm:$0xff]
      %v2075 = vld [vmem:[%s2061 + $0x68] sm:$0xff]
      %v2076 = vld [vmem:[%s2061 + $0x70] sm:$0xff]
      %v2077 = vld [vmem:[%s2061 + $0x78] sm:$0xff]
      %2078 = vmatprep.subr.mxu0 0.0
      %2079 = vmatpush1.msra.mxu0 %v2077
      %2080 = vmatprep.subr.mxu0 0.0
      %2081 = vmatpush1.msra.mxu0 %v2076
      %2082 = vmatprep.subr.mxu0 0.0
      %2083 = vmatpush1.msra.mxu0 %v2075
      %2084 = vmatprep.subr.mxu0 0.0
      %2085 = vmatpush1.msra.mxu0 %v2074
      %2086 = vmatprep.subr.mxu0 0.0
      %2087 = vmatpush1.msra.mxu0 %v2073
      %2088 = vmatprep.subr.mxu0 0.0
      %2089 = vmatpush1.msra.mxu0 %v2072
      %2090 = vmatprep.subr.mxu0 0.0
      %2091 = vmatpush1.msra.mxu0 %v2071
      %2092 = vmatprep.subr.mxu0 0.0
      %2093 = vmatpush1.msra.mxu0 %v2070
      %2094 = vmatprep.subr.mxu0 0.0
      %2095 = vmatpush1.msra.mxu0 %v2069
      %2096 = vmatprep.subr.mxu0 0.0
      %2097 = vmatpush1.msra.mxu0 %v2068
      %2098 = vmatprep.subr.mxu0 0.0
      %2099 = vmatpush1.msra.mxu0 %v2067
      %2100 = vmatprep.subr.mxu0 0.0
      %2101 = vmatpush1.msra.mxu0 %v2066
      %2102 = vmatprep.subr.mxu0 0.0
      %2103 = vmatpush1.msra.mxu0 %v2065
      %2104 = vmatprep.subr.mxu0 0.0
      %2105 = vmatpush1.msra.mxu0 %v2064
      %2106 = vmatprep.subr.mxu0 0.0
      %2107 = vmatpush1.msra.mxu0 %v2063
      %2108 = vmatprep.subr.mxu0 0.0
      %2109 = vmatpush1.msra.mxu0 %v2062
      %2110 = vmatprep.subr.mxu0 0.0
      %2111 = vmatpush2.msra.mxu0 0.0
      %2112 = vmatprep.subr.mxu0 0.0
      %2113 = vmatpush2.msra.mxu0 0.0
      %2114 = vmatprep.subr.mxu0 0.0
      %2115 = vmatpush2.msra.mxu0 0.0
      %2116 = vmatprep.subr.mxu0 0.0
      %2117 = vmatpush2.msra.mxu0 0.0
      %2118 = vmatprep.subr.mxu0 0.0
      %2119 = vmatpush2.msra.mxu0 0.0
      %2120 = vmatprep.subr.mxu0 0.0
      %2121 = vmatpush2.msra.mxu0 0.0
      %2122 = vmatprep.subr.mxu0 0.0
      %2123 = vmatpush2.msra.mxu0 0.0
      %2124 = vmatprep.subr.mxu0 0.0
      %2125 = vmatpush2.msra.mxu0 0.0
      %2126 = vmatprep.subr.mxu0 0.0
      %2127 = vmatpush2.msra.mxu0 0.0
      %2128 = vmatprep.subr.mxu0 0.0
      %2129 = vmatpush2.msra.mxu0 0.0
      %2130 = vmatprep.subr.mxu0 0.0
      %2131 = vmatpush2.msra.mxu0 0.0
      %2132 = vmatprep.subr.mxu0 0.0
      %2133 = vmatpush2.msra.mxu0 0.0
      %2134 = vmatprep.subr.mxu0 0.0
      %2135 = vmatpush2.msra.mxu0 0.0
      %2136 = vmatprep.subr.mxu0 0.0
      %2137 = vmatpush2.msra.mxu0 0.0
      %2138 = vmatprep.subr.mxu0 0.0
      %2139 = vmatpush2.msra.mxu0 0.0
      %2140 = vmatprep.subr.mxu0 0.0
      %2141 = vmatpush2.msra.mxu0 0.0
      %2142 = vmatprep.mubr.f32.mxu0 0.0
      %2143 = vmatmul.mubr.f32.gmra.mxu0 %v2055
      %v2144 = vpop.f32.mrf.mxu0
      %v2145 = vadd.f32 0.0, %v2144
      %v2146 = vpop.f32.mrf.mxu0
      %2147 = vmatprep.mubr.f32.mxu0 0.0
      %2148 = vmatmul.mubr.f32.gmra.mxu0 %v2056
      %v2149 = vpop.f32.mrf.mxu0
      %v2150 = vadd.f32 0.0, %v2149
      %v2151 = vpop.f32.mrf.mxu0
      %2152 = vmatprep.mubr.f32.mxu0 0.0
      %2153 = vmatmul.mubr.f32.gmra.mxu0 %v2057
      %v2154 = vpop.f32.mrf.mxu0
      %v2155 = vadd.f32 0.0, %v2154
      %v2156 = vpop.f32.mrf.mxu0
      %2157 = vmatprep.mubr.f32.mxu0 0.0
      %2158 = vmatmul.mubr.f32.gmra.mxu0 %v2058
      %v2159 = vpop.f32.mrf.mxu0
      %v2160 = vadd.f32 0.0, %v2159
      %v2161 = vpop.f32.mrf.mxu0
      %2162 = vmatprep.mubr.f32.mxu0 0.0
      %2163 = vmatmul.mubr.f32.gmra.mxu0 %v2059
      %v2164 = vpop.f32.mrf.mxu0
      %v2165 = vadd.f32 0.0, %v2164
      %v2166 = vpop.f32.mrf.mxu0
      %2167 = vmatprep.mubr.f32.mxu0 0.0
      %2168 = vmatmul.mubr.f32.gmra.mxu0 %v2060
      %v2169 = vpop.f32.mrf.mxu0
      %v2170 = vadd.f32 0.0, %v2169
      %v2171 = vpop.f32.mrf.mxu0
      %2172 = vdwg.mxu0
      %v2173 = vadd.f32 %v2027, %v2145
      %v2174 = vadd.f32 %v2032, %v2150
      %v2175 = vadd.f32 %v2037, %v2155
      %v2176 = vadd.f32 %v2042, %v2160
      %v2177 = vadd.f32 %v2047, %v2165
      %v2178 = vadd.f32 %v2052, %v2170
      %v2179 = vld [vmem:[%s1699 + $0x8] sm:$0xff]
      %v2180 = vld [vmem:[%s1699 + $0x10] sm:$0xff]
      %v2181 = vld [vmem:[%s1699 + $0x18] sm:$0xff]
      %v2182 = vld [vmem:[%s1699 + $0x20] sm:$0xff]
      %v2183 = vld [vmem:[%s1699 + $0x28] sm:$0xff]
      %v2184 = vld [vmem:[%s1699 + $0x30] sm:$0xff]
      %s2185 = scalar_lea.vmem %s2, 384
      %v2186 = vld [vmem:[%s2185] sm:$0xff]
      %v2187 = vld [vmem:[%s2185 + $0x8] sm:$0xff]
      %v2188 = vld [vmem:[%s2185 + $0x10] sm:$0xff]
      %v2189 = vld [vmem:[%s2185 + $0x18] sm:$0xff]
      %v2190 = vld [vmem:[%s2185 + $0x20] sm:$0xff]
      %v2191 = vld [vmem:[%s2185 + $0x28] sm:$0xff]
      %v2192 = vld [vmem:[%s2185 + $0x30] sm:$0xff]
      %v2193 = vld [vmem:[%s2185 + $0x38] sm:$0xff]
      %v2194 = vld [vmem:[%s2185 + $0x40] sm:$0xff]
      %v2195 = vld [vmem:[%s2185 + $0x48] sm:$0xff]
      %v2196 = vld [vmem:[%s2185 + $0x50] sm:$0xff]
      %v2197 = vld [vmem:[%s2185 + $0x58] sm:$0xff]
      %v2198 = vld [vmem:[%s2185 + $0x60] sm:$0xff]
      %v2199 = vld [vmem:[%s2185 + $0x68] sm:$0xff]
      %v2200 = vld [vmem:[%s2185 + $0x70] sm:$0xff]
      %v2201 = vld [vmem:[%s2185 + $0x78] sm:$0xff]
      %2202 = vmatprep.subr.mxu0 0.0
      %2203 = vmatpush1.msra.mxu0 %v2201
      %2204 = vmatprep.subr.mxu0 0.0
      %2205 = vmatpush1.msra.mxu0 %v2200
      %2206 = vmatprep.subr.mxu0 0.0
      %2207 = vmatpush1.msra.mxu0 %v2199
      %2208 = vmatprep.subr.mxu0 0.0
      %2209 = vmatpush1.msra.mxu0 %v2198
      %2210 = vmatprep.subr.mxu0 0.0
      %2211 = vmatpush1.msra.mxu0 %v2197
      %2212 = vmatprep.subr.mxu0 0.0
      %2213 = vmatpush1.msra.mxu0 %v2196
      %2214 = vmatprep.subr.mxu0 0.0
      %2215 = vmatpush1.msra.mxu0 %v2195
      %2216 = vmatprep.subr.mxu0 0.0
      %2217 = vmatpush1.msra.mxu0 %v2194
      %2218 = vmatprep.subr.mxu0 0.0
      %2219 = vmatpush1.msra.mxu0 %v2193
      %2220 = vmatprep.subr.mxu0 0.0
      %2221 = vmatpush1.msra.mxu0 %v2192
      %2222 = vmatprep.subr.mxu0 0.0
      %2223 = vmatpush1.msra.mxu0 %v2191
      %2224 = vmatprep.subr.mxu0 0.0
      %2225 = vmatpush1.msra.mxu0 %v2190
      %2226 = vmatprep.subr.mxu0 0.0
      %2227 = vmatpush1.msra.mxu0 %v2189
      %2228 = vmatprep.subr.mxu0 0.0
      %2229 = vmatpush1.msra.mxu0 %v2188
      %2230 = vmatprep.subr.mxu0 0.0
      %2231 = vmatpush1.msra.mxu0 %v2187
      %2232 = vmatprep.subr.mxu0 0.0
      %2233 = vmatpush1.msra.mxu0 %v2186
      %2234 = vmatprep.subr.mxu0 0.0
      %2235 = vmatpush2.msra.mxu0 0.0
      %2236 = vmatprep.subr.mxu0 0.0
      %2237 = vmatpush2.msra.mxu0 0.0
      %2238 = vmatprep.subr.mxu0 0.0
      %2239 = vmatpush2.msra.mxu0 0.0
      %2240 = vmatprep.subr.mxu0 0.0
      %2241 = vmatpush2.msra.mxu0 0.0
      %2242 = vmatprep.subr.mxu0 0.0
      %2243 = vmatpush2.msra.mxu0 0.0
      %2244 = vmatprep.subr.mxu0 0.0
      %2245 = vmatpush2.msra.mxu0 0.0
      %2246 = vmatprep.subr.mxu0 0.0
      %2247 = vmatpush2.msra.mxu0 0.0
      %2248 = vmatprep.subr.mxu0 0.0
      %2249 = vmatpush2.msra.mxu0 0.0
      %2250 = vmatprep.subr.mxu0 0.0
      %2251 = vmatpush2.msra.mxu0 0.0
      %2252 = vmatprep.subr.mxu0 0.0
      %2253 = vmatpush2.msra.mxu0 0.0
      %2254 = vmatprep.subr.mxu0 0.0
      %2255 = vmatpush2.msra.mxu0 0.0
      %2256 = vmatprep.subr.mxu0 0.0
      %2257 = vmatpush2.msra.mxu0 0.0
      %2258 = vmatprep.subr.mxu0 0.0
      %2259 = vmatpush2.msra.mxu0 0.0
      %2260 = vmatprep.subr.mxu0 0.0
      %2261 = vmatpush2.msra.mxu0 0.0
      %2262 = vmatprep.subr.mxu0 0.0
      %2263 = vmatpush2.msra.mxu0 0.0
      %2264 = vmatprep.subr.mxu0 0.0
      %2265 = vmatpush2.msra.mxu0 0.0
      %2266 = vmatprep.mubr.f32.mxu0 0.0
      %2267 = vmatmul.mubr.f32.gmra.mxu0 %v2179
      %v2268 = vpop.f32.mrf.mxu0
      %v2269 = vadd.f32 0.0, %v2268
      %v2270 = vpop.f32.mrf.mxu0
      %2271 = vmatprep.mubr.f32.mxu0 0.0
      %2272 = vmatmul.mubr.f32.gmra.mxu0 %v2180
      %v2273 = vpop.f32.mrf.mxu0
      %v2274 = vadd.f32 0.0, %v2273
      %v2275 = vpop.f32.mrf.mxu0
      %2276 = vmatprep.mubr.f32.mxu0 0.0
      %2277 = vmatmul.mubr.f32.gmra.mxu0 %v2181
      %v2278 = vpop.f32.mrf.mxu0
      %v2279 = vadd.f32 0.0, %v2278
      %v2280 = vpop.f32.mrf.mxu0
      %2281 = vmatprep.mubr.f32.mxu0 0.0
      %2282 = vmatmul.mubr.f32.gmra.mxu0 %v2182
      %v2283 = vpop.f32.mrf.mxu0
      %v2284 = vadd.f32 0.0, %v2283
      %v2285 = vpop.f32.mrf.mxu0
      %2286 = vmatprep.mubr.f32.mxu0 0.0
      %2287 = vmatmul.mubr.f32.gmra.mxu0 %v2183
      %v2288 = vpop.f32.mrf.mxu0
      %v2289 = vadd.f32 0.0, %v2288
      %v2290 = vpop.f32.mrf.mxu0
      %2291 = vmatprep.mubr.f32.mxu0 0.0
      %2292 = vmatmul.mubr.f32.gmra.mxu0 %v2184
      %v2293 = vpop.f32.mrf.mxu0
      %v2294 = vadd.f32 0.0, %v2293
      %v2295 = vpop.f32.mrf.mxu0
      %2296 = vdwg.mxu0
      %v2297 = vadd.f32 %v2173, %v2269
      %v2298 = vadd.f32 %v2174, %v2274
      %v2299 = vadd.f32 %v2175, %v2279
      %v2300 = vadd.f32 %v2176, %v2284
      %v2301 = vadd.f32 %v2177, %v2289
      %v2302 = vadd.f32 %v2178, %v2294
      %v2304 = vlaneseq
      %v2305 = vshrl.u32 %v2304, 7
      %v2306 = vsub.s32 0, %v2305
      %v2307 = vrot.slane %v280, %v2306
      %v2309 = vadd.f32 %v2297, %v2307
      %v2310 = vadd.f32 %v2298, %v2307
      %v2311 = vadd.f32 %v2299, %v2307
      %v2312 = vadd.f32 %v2300, %v2307
      %v2313 = vadd.f32 %v2301, %v2307
      %v2314 = vadd.f32 %v2302, %v2307
      %v2315 = vmax.f32 %v2309, 0.0
      %v2316 = vmax.f32 %v2310, 0.0
      %v2317 = vmax.f32 %v2311, 0.0
      %v2318 = vmax.f32 %v2312, 0.0
      %v2319 = vmax.f32 %v2313, 0.0
      %v2320 = vmax.f32 %v2314, 0.0
      %vm2321 = vcmask 523264
      %2322 = vst.msk [vmem:[#allocation3] sm:$0xff] %vm2321, %v2315
      %2323 = vst.msk [vmem:[#allocation3 + $0x10] sm:$0xff] %vm2321, %v2316
      %2324 = vst.msk [vmem:[#allocation3 + $0x20] sm:$0xff] %vm2321, %v2317
      %2325 = vst.msk [vmem:[#allocation3 + $0x30] sm:$0xff] %vm2321, %v2318
      %2326 = vst.msk [vmem:[#allocation3 + $0x40] sm:$0xff] %vm2321, %v2319
      %2327 = vst.msk [vmem:[#allocation3 + $0x50] sm:$0xff] %vm2321, %v2320
      %v2334 = vrot.slane %v2315, 1
      %v2335 = vrot.slane %v2316, 1
      %v2336 = vsel %vm660, %v2334, %v2335
      %v2337 = vrot.slane %v2317, 1
      %v2338 = vsel %vm660, %v2335, %v2337
      %v2339 = vrot.slane %v2318, 1
      %v2340 = vsel %vm660, %v2337, %v2339
      %v2341 = vrot.slane %v2319, 1
      %v2342 = vsel %vm660, %v2339, %v2341
      %v2343 = vrot.slane %v2320, 1
      %v2344 = vsel %vm660, %v2341, %v2343
      %2345 = vrot.lane.b32.xlu0 %v2336, 64
      %v2346 = vpop.permute.xlu0 %2345
      %2347 = vrot.lane.b32.xlu0 %v2338, 64
      %v2348 = vpop.permute.xlu0 %2347
      %2349 = vrot.lane.b32.xlu0 %v2340, 64
      %v2350 = vpop.permute.xlu0 %2349
      %2351 = vrot.lane.b32.xlu0 %v2342, 64
      %v2352 = vpop.permute.xlu0 %2351
      %2353 = vrot.lane.b32.xlu0 %v2344, 64
      %v2354 = vpop.permute.xlu0 %2353
      %2355 = vrot.lane.b32.xlu0 %v2343, 64
      %v2356 = vpop.permute.xlu0 %2355
      %vm2363 = vcmask 1048064
      %2364 = vst.msk [vmem:[#allocation3] sm:$0xff] %vm2363, %v2346
      %2365 = vst.msk [vmem:[#allocation3 + $0x10] sm:$0xff] %vm2363, %v2348
      %2366 = vst.msk [vmem:[#allocation3 + $0x20] sm:$0xff] %vm2363, %v2350
      %2367 = vst.msk [vmem:[#allocation3 + $0x30] sm:$0xff] %vm2363, %v2352
      %2368 = vst.msk [vmem:[#allocation3 + $0x40] sm:$0xff] %vm2363, %v2354
      %vm2369 = vcmask 1047040
      %2370 = vst.msk [vmem:[#allocation3 + $0x50] sm:$0x7f] %vm2369, %v2356
      %vm2371 = vcmask 1045504
      %v2372 = vrot.slane %v2315, 2
      %v2373 = vrot.slane %v2316, 2
      %v2374 = vsel %vm2371, %v2372, %v2373
      %v2375 = vrot.slane %v2317, 2
      %v2376 = vsel %vm2371, %v2373, %v2375
      %v2377 = vrot.slane %v2318, 2
      %v2378 = vsel %vm2371, %v2375, %v2377
      %v2379 = vrot.slane %v2319, 2
      %v2380 = vsel %vm2371, %v2377, %v2379
      %v2381 = vrot.slane %v2320, 2
      %v2382 = vsel %vm2371, %v2379, %v2381
      %2389 = vst.msk [vmem:[#allocation3 + $0x8] sm:$0xff] %vm2321, %v2374
      %2390 = vst.msk [vmem:[#allocation3 + $0x18] sm:$0xff] %vm2321, %v2376
      %2391 = vst.msk [vmem:[#allocation3 + $0x28] sm:$0xff] %vm2321, %v2378
      %2392 = vst.msk [vmem:[#allocation3 + $0x38] sm:$0xff] %vm2321, %v2380
      %2393 = vst.msk [vmem:[#allocation3 + $0x48] sm:$0xff] %vm2321, %v2382
      %vm2394 = vcmask 521216
      %2395 = vst.msk [vmem:[#allocation3 + $0x58] sm:$0x3f] %vm2394, %v2381
      %v2396 = vld [vmem:[#allocation3] sm:$0xff]
      %v2397 = vld [vmem:[#allocation3 + $0x8] sm:$0xff]
      %v2398 = vld [vmem:[#allocation3 + $0x10] sm:$0xff]
      %v2399 = vld [vmem:[#allocation3 + $0x18] sm:$0xff]
      %v2400 = vld [vmem:[#allocation3 + $0x20] sm:$0xff]
      %v2401 = vld [vmem:[#allocation3 + $0x28] sm:$0xff]
      %v2402 = vld [vmem:[#allocation3 + $0x30] sm:$0xff]
      %v2403 = vld [vmem:[#allocation3 + $0x38] sm:$0xff]
      %v2404 = vld [vmem:[%s3] sm:$0xff]
      %v2405 = vld [vmem:[%s3 + $0x8] sm:$0xff]
      %v2406 = vld [vmem:[%s3 + $0x10] sm:$0xff]
      %v2407 = vld [vmem:[%s3 + $0x18] sm:$0xff]
      %v2408 = vld [vmem:[%s3 + $0x20] sm:$0xff]
      %v2409 = vld [vmem:[%s3 + $0x28] sm:$0xff]
      %v2410 = vld [vmem:[%s3 + $0x30] sm:$0xff]
      %v2411 = vld [vmem:[%s3 + $0x38] sm:$0xff]
      %v2412 = vld [vmem:[%s3 + $0x40] sm:$0xff]
      %v2413 = vld [vmem:[%s3 + $0x48] sm:$0xff]
      %v2414 = vld [vmem:[%s3 + $0x50] sm:$0xff]
      %v2415 = vld [vmem:[%s3 + $0x58] sm:$0xff]
      %v2416 = vld [vmem:[%s3 + $0x60] sm:$0xff]
      %v2417 = vld [vmem:[%s3 + $0x68] sm:$0xff]
      %v2418 = vld [vmem:[%s3 + $0x70] sm:$0xff]
      %v2419 = vld [vmem:[%s3 + $0x78] sm:$0xff]
      %v2420 = vld [vmem:[%s3 + $0x80] sm:$0xff]
      %v2421 = vld [vmem:[%s3 + $0x88] sm:$0xff]
      %v2422 = vld [vmem:[%s3 + $0x90] sm:$0xff]
      %v2423 = vld [vmem:[%s3 + $0x98] sm:$0xff]
      %v2424 = vld [vmem:[%s3 + $0xa0] sm:$0xff]
      %v2425 = vld [vmem:[%s3 + $0xa8] sm:$0xff]
      %v2426 = vld [vmem:[%s3 + $0xb0] sm:$0xff]
      %v2427 = vld [vmem:[%s3 + $0xb8] sm:$0xff]
      %v2428 = vld [vmem:[%s3 + $0xc0] sm:$0xff]
      %v2429 = vld [vmem:[%s3 + $0xc8] sm:$0xff]
      %v2430 = vld [vmem:[%s3 + $0xd0] sm:$0xff]
      %v2431 = vld [vmem:[%s3 + $0xd8] sm:$0xff]
      %v2432 = vld [vmem:[%s3 + $0xe0] sm:$0xff]
      %v2433 = vld [vmem:[%s3 + $0xe8] sm:$0xff]
      %v2434 = vld [vmem:[%s3 + $0xf0] sm:$0xff]
      %v2435 = vld [vmem:[%s3 + $0xf8] sm:$0xff]
      %v2436 = vld [vmem:[#allocation3 + $0x40] sm:$0xff]
      %v2437 = vld [vmem:[#allocation3 + $0x48] sm:$0xff]
      %s2438 = scalar_lea.vmem %s3, 256
      %v2439 = vld [vmem:[%s2438] sm:$0xff]
      %v2440 = vld [vmem:[%s2438 + $0x8] sm:$0xff]
      %v2441 = vld [vmem:[%s2438 + $0x10] sm:$0xff]
      %v2442 = vld [vmem:[%s2438 + $0x18] sm:$0xff]
      %v2443 = vld [vmem:[%s2438 + $0x20] sm:$0xff]
      %v2444 = vld [vmem:[%s2438 + $0x28] sm:$0xff]
      %v2445 = vld [vmem:[%s2438 + $0x30] sm:$0xff]
      %v2446 = vld [vmem:[%s2438 + $0x38] sm:$0xff]
      %v2447 = vld [vmem:[%s2438 + $0x40] sm:$0xff]
      %v2448 = vld [vmem:[%s2438 + $0x48] sm:$0xff]
      %v2449 = vld [vmem:[%s2438 + $0x50] sm:$0xff]
      %v2450 = vld [vmem:[%s2438 + $0x58] sm:$0xff]
      %v2451 = vld [vmem:[%s2438 + $0x60] sm:$0xff]
      %v2452 = vld [vmem:[%s2438 + $0x68] sm:$0xff]
      %v2453 = vld [vmem:[%s2438 + $0x70] sm:$0xff]
      %v2454 = vld [vmem:[%s2438 + $0x78] sm:$0xff]
      %v2455 = vld [vmem:[%s2438 + $0x80] sm:$0xff]
      %v2456 = vld [vmem:[%s2438 + $0x88] sm:$0xff]
      %v2457 = vld [vmem:[%s2438 + $0x90] sm:$0xff]
      %v2458 = vld [vmem:[%s2438 + $0x98] sm:$0xff]
      %v2459 = vld [vmem:[%s2438 + $0xa0] sm:$0xff]
      %v2460 = vld [vmem:[%s2438 + $0xa8] sm:$0xff]
      %v2461 = vld [vmem:[%s2438 + $0xb0] sm:$0xff]
      %v2462 = vld [vmem:[%s2438 + $0xb8] sm:$0xff]
      %v2463 = vld [vmem:[%s2438 + $0xc0] sm:$0xff]
      %v2464 = vld [vmem:[%s2438 + $0xc8] sm:$0xff]
      %v2465 = vld [vmem:[%s2438 + $0xd0] sm:$0xff]
      %v2466 = vld [vmem:[%s2438 + $0xd8] sm:$0xff]
      %v2467 = vld [vmem:[%s2438 + $0xe0] sm:$0xff]
      %v2468 = vld [vmem:[%s2438 + $0xe8] sm:$0xff]
      %v2469 = vld [vmem:[%s2438 + $0xf0] sm:$0xff]
      %v2470 = vld [vmem:[%s2438 + $0xf8] sm:$0xff]
      %2471 = vmatprep.subr.mxu0 0.0
      %2472 = vmatpush1.msra.mxu0 %v2454
      %2473 = vmatprep.subr.mxu0 0.0
      %2474 = vmatpush1.msra.mxu0 %v2453
      %2475 = vmatprep.subr.mxu0 0.0
      %2476 = vmatpush1.msra.mxu0 %v2452
      %2477 = vmatprep.subr.mxu0 0.0
      %2478 = vmatpush1.msra.mxu0 %v2451
      %2479 = vmatprep.subr.mxu0 0.0
      %2480 = vmatpush1.msra.mxu0 %v2450
      %2481 = vmatprep.subr.mxu0 0.0
      %2482 = vmatpush1.msra.mxu0 %v2449
      %2483 = vmatprep.subr.mxu0 0.0
      %2484 = vmatpush1.msra.mxu0 %v2448
      %2485 = vmatprep.subr.mxu0 0.0
      %2486 = vmatpush1.msra.mxu0 %v2447
      %2487 = vmatprep.subr.mxu0 0.0
      %2488 = vmatpush1.msra.mxu0 %v2446
      %2489 = vmatprep.subr.mxu0 0.0
      %2490 = vmatpush1.msra.mxu0 %v2445
      %2491 = vmatprep.subr.mxu0 0.0
      %2492 = vmatpush1.msra.mxu0 %v2444
      %2493 = vmatprep.subr.mxu0 0.0
      %2494 = vmatpush1.msra.mxu0 %v2443
      %2495 = vmatprep.subr.mxu0 0.0
      %2496 = vmatpush1.msra.mxu0 %v2442
      %2497 = vmatprep.subr.mxu0 0.0
      %2498 = vmatpush1.msra.mxu0 %v2441
      %2499 = vmatprep.subr.mxu0 0.0
      %2500 = vmatpush1.msra.mxu0 %v2440
      %2501 = vmatprep.subr.mxu0 0.0
      %2502 = vmatpush1.msra.mxu0 %v2439
      %2503 = vmatprep.subr.mxu0 0.0
      %2504 = vmatpush2.msra.mxu0 %v2470
      %2505 = vmatprep.subr.mxu0 0.0
      %2506 = vmatpush2.msra.mxu0 %v2469
      %2507 = vmatprep.subr.mxu0 0.0
      %2508 = vmatpush2.msra.mxu0 %v2468
      %2509 = vmatprep.subr.mxu0 0.0
      %2510 = vmatpush2.msra.mxu0 %v2467
      %2511 = vmatprep.subr.mxu0 0.0
      %2512 = vmatpush2.msra.mxu0 %v2466
      %2513 = vmatprep.subr.mxu0 0.0
      %2514 = vmatpush2.msra.mxu0 %v2465
      %2515 = vmatprep.subr.mxu0 0.0
      %2516 = vmatpush2.msra.mxu0 %v2464
      %2517 = vmatprep.subr.mxu0 0.0
      %2518 = vmatpush2.msra.mxu0 %v2463
      %2519 = vmatprep.subr.mxu0 0.0
      %2520 = vmatpush2.msra.mxu0 %v2462
      %2521 = vmatprep.subr.mxu0 0.0
      %2522 = vmatpush2.msra.mxu0 %v2461
      %2523 = vmatprep.subr.mxu0 0.0
      %2524 = vmatpush2.msra.mxu0 %v2460
      %2525 = vmatprep.subr.mxu0 0.0
      %2526 = vmatpush2.msra.mxu0 %v2459
      %2527 = vmatprep.subr.mxu0 0.0
      %2528 = vmatpush2.msra.mxu0 %v2458
      %2529 = vmatprep.subr.mxu0 0.0
      %2530 = vmatpush2.msra.mxu0 %v2457
      %2531 = vmatprep.subr.mxu0 0.0
      %2532 = vmatpush2.msra.mxu0 %v2456
      %2533 = vmatprep.subr.mxu0 0.0
      %2534 = vmatpush2.msra.mxu0 %v2455
      %2535 = vmatprep.mubr.f32.mxu0 %v2399
      %2536 = vmatmul.mubr.f32.gmra.mxu0 %v2398
      %v2537 = vpop.f32.mrf.mxu0
      %v2538 = vadd.f32 0.0, %v2537
      %v2539 = vpop.f32.mrf.mxu0
      %2540 = vmatprep.mubr.f32.mxu0 %v2401
      %2541 = vmatmul.mubr.f32.gmra.mxu0 %v2400
      %v2542 = vpop.f32.mrf.mxu0
      %v2543 = vadd.f32 0.0, %v2542
      %v2544 = vpop.f32.mrf.mxu0
      %2545 = vmatprep.mubr.f32.mxu0 %v2403
      %2546 = vmatmul.mubr.f32.gmra.mxu0 %v2402
      %v2547 = vpop.f32.mrf.mxu0
      %v2548 = vadd.f32 0.0, %v2547
      %v2549 = vpop.f32.mrf.mxu0
      %2550 = vmatprep.mubr.f32.mxu0 %v2437
      %2551 = vmatmul.mubr.f32.gmra.mxu0 %v2436
      %v2552 = vpop.f32.mrf.mxu0
      %v2553 = vadd.f32 0.0, %v2552
      %v2554 = vpop.f32.mrf.mxu0
      %2555 = vdwg.mxu0
      %2556 = vmatprep.subr.mxu0 0.0
      %2557 = vmatpush1.msra.mxu0 %v2419
      %2558 = vmatprep.subr.mxu0 0.0
      %2559 = vmatpush1.msra.mxu0 %v2418
      %2560 = vmatprep.subr.mxu0 0.0
      %2561 = vmatpush1.msra.mxu0 %v2417
      %2562 = vmatprep.subr.mxu0 0.0
      %2563 = vmatpush1.msra.mxu0 %v2416
      %2564 = vmatprep.subr.mxu0 0.0
      %2565 = vmatpush1.msra.mxu0 %v2415
      %2566 = vmatprep.subr.mxu0 0.0
      %2567 = vmatpush1.msra.mxu0 %v2414
      %2568 = vmatprep.subr.mxu0 0.0
      %2569 = vmatpush1.msra.mxu0 %v2413
      %2570 = vmatprep.subr.mxu0 0.0
      %2571 = vmatpush1.msra.mxu0 %v2412
      %2572 = vmatprep.subr.mxu0 0.0
      %2573 = vmatpush1.msra.mxu0 %v2411
      %2574 = vmatprep.subr.mxu0 0.0
      %2575 = vmatpush1.msra.mxu0 %v2410
      %2576 = vmatprep.subr.mxu0 0.0
      %2577 = vmatpush1.msra.mxu0 %v2409
      %2578 = vmatprep.subr.mxu0 0.0
      %2579 = vmatpush1.msra.mxu0 %v2408
      %2580 = vmatprep.subr.mxu0 0.0
      %2581 = vmatpush1.msra.mxu0 %v2407
      %2582 = vmatprep.subr.mxu0 0.0
      %2583 = vmatpush1.msra.mxu0 %v2406
      %2584 = vmatprep.subr.mxu0 0.0
      %2585 = vmatpush1.msra.mxu0 %v2405
      %2586 = vmatprep.subr.mxu0 0.0
      %2587 = vmatpush1.msra.mxu0 %v2404
      %2588 = vmatprep.subr.mxu0 0.0
      %2589 = vmatpush2.msra.mxu0 %v2435
      %2590 = vmatprep.subr.mxu0 0.0
      %2591 = vmatpush2.msra.mxu0 %v2434
      %2592 = vmatprep.subr.mxu0 0.0
      %2593 = vmatpush2.msra.mxu0 %v2433
      %2594 = vmatprep.subr.mxu0 0.0
      %2595 = vmatpush2.msra.mxu0 %v2432
      %2596 = vmatprep.subr.mxu0 0.0
      %2597 = vmatpush2.msra.mxu0 %v2431
      %2598 = vmatprep.subr.mxu0 0.0
      %2599 = vmatpush2.msra.mxu0 %v2430
      %2600 = vmatprep.subr.mxu0 0.0
      %2601 = vmatpush2.msra.mxu0 %v2429
      %2602 = vmatprep.subr.mxu0 0.0
      %2603 = vmatpush2.msra.mxu0 %v2428
      %2604 = vmatprep.subr.mxu0 0.0
      %2605 = vmatpush2.msra.mxu0 %v2427
      %2606 = vmatprep.subr.mxu0 0.0
      %2607 = vmatpush2.msra.mxu0 %v2426
      %2608 = vmatprep.subr.mxu0 0.0
      %2609 = vmatpush2.msra.mxu0 %v2425
      %2610 = vmatprep.subr.mxu0 0.0
      %2611 = vmatpush2.msra.mxu0 %v2424
      %2612 = vmatprep.subr.mxu0 0.0
      %2613 = vmatpush2.msra.mxu0 %v2423
      %2614 = vmatprep.subr.mxu0 0.0
      %2615 = vmatpush2.msra.mxu0 %v2422
      %2616 = vmatprep.subr.mxu0 0.0
      %2617 = vmatpush2.msra.mxu0 %v2421
      %2618 = vmatprep.subr.mxu0 0.0
      %2619 = vmatpush2.msra.mxu0 %v2420
      %2620 = vmatprep.mubr.f32.mxu0 %v2397
      %2621 = vmatmul.mubr.f32.gmra.mxu0 %v2396
      %v2622 = vpop.f32.mrf.mxu0
      %v2623 = vadd.f32 %v2538, %v2622
      %v2624 = vpop.f32.mrf.mxu0
      %2625 = vmatprep.mubr.f32.mxu0 %v2399
      %2626 = vmatmul.mubr.f32.gmra.mxu0 %v2398
      %v2627 = vpop.f32.mrf.mxu0
      %v2628 = vadd.f32 %v2543, %v2627
      %v2629 = vpop.f32.mrf.mxu0
      %2630 = vmatprep.mubr.f32.mxu0 %v2401
      %2631 = vmatmul.mubr.f32.gmra.mxu0 %v2400
      %v2632 = vpop.f32.mrf.mxu0
      %v2633 = vadd.f32 %v2548, %v2632
      %v2634 = vpop.f32.mrf.mxu0
      %2635 = vmatprep.mubr.f32.mxu0 %v2403
      %2636 = vmatmul.mubr.f32.gmra.mxu0 %v2402
      %v2637 = vpop.f32.mrf.mxu0
      %v2638 = vadd.f32 %v2553, %v2637
      %v2639 = vpop.f32.mrf.mxu0
      %2640 = vdwg.mxu0
      %v2641 = vld [vmem:[#allocation3 + $0x20] sm:$0xff]
      %v2642 = vld [vmem:[#allocation3 + $0x28] sm:$0xff]
      %v2643 = vld [vmem:[#allocation3 + $0x30] sm:$0xff]
      %v2644 = vld [vmem:[#allocation3 + $0x38] sm:$0xff]
      %v2645 = vld [vmem:[#allocation3 + $0x40] sm:$0xff]
      %v2646 = vld [vmem:[#allocation3 + $0x48] sm:$0xff]
      %v2647 = vld [vmem:[#allocation3 + $0x50] sm:$0xff]
      %v2648 = vld [vmem:[#allocation3 + $0x58] sm:$0xff]
      %s2649 = scalar_lea.vmem %s3, 512
      %v2650 = vld [vmem:[%s2649] sm:$0xff]
      %v2651 = vld [vmem:[%s2649 + $0x8] sm:$0xff]
      %v2652 = vld [vmem:[%s2649 + $0x10] sm:$0xff]
      %v2653 = vld [vmem:[%s2649 + $0x18] sm:$0xff]
      %v2654 = vld [vmem:[%s2649 + $0x20] sm:$0xff]
      %v2655 = vld [vmem:[%s2649 + $0x28] sm:$0xff]
      %v2656 = vld [vmem:[%s2649 + $0x30] sm:$0xff]
      %v2657 = vld [vmem:[%s2649 + $0x38] sm:$0xff]
      %v2658 = vld [vmem:[%s2649 + $0x40] sm:$0xff]
      %v2659 = vld [vmem:[%s2649 + $0x48] sm:$0xff]
      %v2660 = vld [vmem:[%s2649 + $0x50] sm:$0xff]
      %v2661 = vld [vmem:[%s2649 + $0x58] sm:$0xff]
      %v2662 = vld [vmem:[%s2649 + $0x60] sm:$0xff]
      %v2663 = vld [vmem:[%s2649 + $0x68] sm:$0xff]
      %v2664 = vld [vmem:[%s2649 + $0x70] sm:$0xff]
      %v2665 = vld [vmem:[%s2649 + $0x78] sm:$0xff]
      %v2666 = vld [vmem:[%s2649 + $0x80] sm:$0xff]
      %v2667 = vld [vmem:[%s2649 + $0x88] sm:$0xff]
      %v2668 = vld [vmem:[%s2649 + $0x90] sm:$0xff]
      %v2669 = vld [vmem:[%s2649 + $0x98] sm:$0xff]
      %v2670 = vld [vmem:[%s2649 + $0xa0] sm:$0xff]
      %v2671 = vld [vmem:[%s2649 + $0xa8] sm:$0xff]
      %v2672 = vld [vmem:[%s2649 + $0xb0] sm:$0xff]
      %v2673 = vld [vmem:[%s2649 + $0xb8] sm:$0xff]
      %v2674 = vld [vmem:[%s2649 + $0xc0] sm:$0xff]
      %v2675 = vld [vmem:[%s2649 + $0xc8] sm:$0xff]
      %v2676 = vld [vmem:[%s2649 + $0xd0] sm:$0xff]
      %v2677 = vld [vmem:[%s2649 + $0xd8] sm:$0xff]
      %v2678 = vld [vmem:[%s2649 + $0xe0] sm:$0xff]
      %v2679 = vld [vmem:[%s2649 + $0xe8] sm:$0xff]
      %v2680 = vld [vmem:[%s2649 + $0xf0] sm:$0xff]
      %v2681 = vld [vmem:[%s2649 + $0xf8] sm:$0xff]
      %2682 = vmatprep.subr.mxu0 0.0
      %2683 = vmatpush1.msra.mxu0 %v2665
      %2684 = vmatprep.subr.mxu0 0.0
      %2685 = vmatpush1.msra.mxu0 %v2664
      %2686 = vmatprep.subr.mxu0 0.0
      %2687 = vmatpush1.msra.mxu0 %v2663
      %2688 = vmatprep.subr.mxu0 0.0
      %2689 = vmatpush1.msra.mxu0 %v2662
      %2690 = vmatprep.subr.mxu0 0.0
      %2691 = vmatpush1.msra.mxu0 %v2661
      %2692 = vmatprep.subr.mxu0 0.0
      %2693 = vmatpush1.msra.mxu0 %v2660
      %2694 = vmatprep.subr.mxu0 0.0
      %2695 = vmatpush1.msra.mxu0 %v2659
      %2696 = vmatprep.subr.mxu0 0.0
      %2697 = vmatpush1.msra.mxu0 %v2658
      %2698 = vmatprep.subr.mxu0 0.0
      %2699 = vmatpush1.msra.mxu0 %v2657
      %2700 = vmatprep.subr.mxu0 0.0
      %2701 = vmatpush1.msra.mxu0 %v2656
      %2702 = vmatprep.subr.mxu0 0.0
      %2703 = vmatpush1.msra.mxu0 %v2655
      %2704 = vmatprep.subr.mxu0 0.0
      %2705 = vmatpush1.msra.mxu0 %v2654
      %2706 = vmatprep.subr.mxu0 0.0
      %2707 = vmatpush1.msra.mxu0 %v2653
      %2708 = vmatprep.subr.mxu0 0.0
      %2709 = vmatpush1.msra.mxu0 %v2652
      %2710 = vmatprep.subr.mxu0 0.0
      %2711 = vmatpush1.msra.mxu0 %v2651
      %2712 = vmatprep.subr.mxu0 0.0
      %2713 = vmatpush1.msra.mxu0 %v2650
      %2714 = vmatprep.subr.mxu0 0.0
      %2715 = vmatpush2.msra.mxu0 %v2681
      %2716 = vmatprep.subr.mxu0 0.0
      %2717 = vmatpush2.msra.mxu0 %v2680
      %2718 = vmatprep.subr.mxu0 0.0
      %2719 = vmatpush2.msra.mxu0 %v2679
      %2720 = vmatprep.subr.mxu0 0.0
      %2721 = vmatpush2.msra.mxu0 %v2678
      %2722 = vmatprep.subr.mxu0 0.0
      %2723 = vmatpush2.msra.mxu0 %v2677
      %2724 = vmatprep.subr.mxu0 0.0
      %2725 = vmatpush2.msra.mxu0 %v2676
      %2726 = vmatprep.subr.mxu0 0.0
      %2727 = vmatpush2.msra.mxu0 %v2675
      %2728 = vmatprep.subr.mxu0 0.0
      %2729 = vmatpush2.msra.mxu0 %v2674
      %2730 = vmatprep.subr.mxu0 0.0
      %2731 = vmatpush2.msra.mxu0 %v2673
      %2732 = vmatprep.subr.mxu0 0.0
      %2733 = vmatpush2.msra.mxu0 %v2672
      %2734 = vmatprep.subr.mxu0 0.0
      %2735 = vmatpush2.msra.mxu0 %v2671
      %2736 = vmatprep.subr.mxu0 0.0
      %2737 = vmatpush2.msra.mxu0 %v2670
      %2738 = vmatprep.subr.mxu0 0.0
      %2739 = vmatpush2.msra.mxu0 %v2669
      %2740 = vmatprep.subr.mxu0 0.0
      %2741 = vmatpush2.msra.mxu0 %v2668
      %2742 = vmatprep.subr.mxu0 0.0
      %2743 = vmatpush2.msra.mxu0 %v2667
      %2744 = vmatprep.subr.mxu0 0.0
      %2745 = vmatpush2.msra.mxu0 %v2666
      %2746 = vmatprep.mubr.f32.mxu0 %v2642
      %2747 = vmatmul.mubr.f32.gmra.mxu0 %v2641
      %v2748 = vpop.f32.mrf.mxu0
      %v2749 = vadd.f32 0.0, %v2748
      %v2750 = vpop.f32.mrf.mxu0
      %2751 = vmatprep.mubr.f32.mxu0 %v2644
      %2752 = vmatmul.mubr.f32.gmra.mxu0 %v2643
      %v2753 = vpop.f32.mrf.mxu0
      %v2754 = vadd.f32 0.0, %v2753
      %v2755 = vpop.f32.mrf.mxu0
      %2756 = vmatprep.mubr.f32.mxu0 %v2646
      %2757 = vmatmul.mubr.f32.gmra.mxu0 %v2645
      %v2758 = vpop.f32.mrf.mxu0
      %v2759 = vadd.f32 0.0, %v2758
      %v2760 = vpop.f32.mrf.mxu0
      %2761 = vmatprep.mubr.f32.mxu0 %v2648
      %2762 = vmatmul.mubr.f32.gmra.mxu0 %v2647
      %v2763 = vpop.f32.mrf.mxu0
      %v2764 = vadd.f32 0.0, %v2763
      %v2765 = vpop.f32.mrf.mxu0
      %2766 = vdwg.mxu0
      %v2767 = vadd.f32 %v2623, %v2749
      %v2768 = vadd.f32 %v2628, %v2754
      %v2769 = vadd.f32 %v2633, %v2759
      %v2770 = vadd.f32 %v2638, %v2764
      %v2772 = vlaneseq
      %v2773 = vshrl.u32 %v2772, 7
      %v2774 = vsub.s32 0, %v2773
      %v2775 = vrot.slane %v281, %v2774
      %v2777 = vadd.f32 %v2767, %v2775
      %v2778 = vadd.f32 %v2768, %v2775
      %v2779 = vadd.f32 %v2769, %v2775
      %v2780 = vadd.f32 %v2770, %v2775
      %v2781 = vmax.f32 %v2777, 0.0
      %v2782 = vmax.f32 %v2778, 0.0
      %v2783 = vmax.f32 %v2779, 0.0
      %v2784 = vmax.f32 %v2780, 0.0
      %2785 = vst.msk [vmem:[%s278] sm:$0xff] %vm2321, %v2781
      %2786 = vst.msk [vmem:[%s278 + $0x8] sm:$0xff] %vm2321, %v2782
      %2787 = vst.msk [vmem:[%s278 + $0x10] sm:$0xff] %vm2321, %v2783
      %2788 = vst.msk [vmem:[%s278 + $0x18] sm:$0xff] %vm2321, %v2784
      %p2789 = scmp.lt.s32.totalorder %s18, 1
      %s2790 = scalar_select %p2789, %s18, 1
      %s2791 = smul.addr %s2790, 4
      %s2792 = smul.addr %s2791, 8
      %s2793 = scalar_lea.vmem %s7, %s2792
      // Predicated region
      $region49: #{atari_encoder.1} parent=47 // pred_check
        %p2794 = pneg %p188
      $region50: #{atari_encoder.1} parent=47 // pred_check_branch
        %2796 = sbr.rel (%p2794) target = $region52
      $region51: #{atari_encoder.1} parent=47 // pred_region
        _
      $region52: #{atari_encoder.1} parent=47 // pred_fallthru
        _
    $region48: #{atari_encoder.1} parent=5 // pred_fallthru
      _
    %p2797 = scmp.le.s32.totalorder 2, %s13
    // Predicated region
    $region53: #{atari_encoder.1} parent=5 // pred_check
      %p2798 = pneg %p2797
    $region54: #{atari_encoder.1} parent=5 // pred_check_branch
      %2800 = sbr.rel (%p2798) target = $region56
    $region55: #{atari_encoder.1} parent=5 // pred_region
      %s2801 = ssub.s32 %s13, 2
      // Predicated region
      $region57: #{atari_encoder.1} parent=55 // pred_check
        %p2802 = pneg %p194
      $region58: #{atari_encoder.1} parent=55 // pred_check_branch
        %2804 = sbr.rel (%p2802) target = $region60
      $region59: #{atari_encoder.1} parent=55 // pred_region
        %p2805 = scmp.lt.s32.totalorder %s19, 1
        %s2806 = scalar_select %p2805, %s19, 1
        %s2807 = smul.addr %s2806, 4
        %s2808 = smul.addr %s2807, 8
        %s2809 = scalar_lea.vmem %s7, %s2808
      $region60: #{atari_encoder.1} parent=55 // pred_fallthru
        _
    $region56: #{atari_encoder.1} parent=5 // pred_fallthru
      _
  $region6: #{atari_encoder.1} parent=0 // loop_footer
    %s17 = sadd.s32 1, %s13
  $region7: #{atari_encoder.1} parent=0 // loop_footer_branch
    %12 = sbr.rel target = $region3
  $region8: #{atari_encoder.1} parent=0 // loop_exit
    _

</llo_original>
